<compile_context>
chip_gen: v6e
topology: v6e:2x2x1
jax: 0.10.0
libtpu: 0.0.40
codegen_flags: <defaults>
</compile_context>

<pallas_src>
import functools

import jax
import jax.numpy as jnp
from jax.experimental import pallas as pl
from jax.experimental.pallas import tpu as pltpu

_POSE_SCALE = 0.01
_LANES = 128


def _ceil_to(x, m):
    return ((x + m - 1) // m) * m


# ----------------------------------------------------------------------------
# Wrapper-side layout plumbing (pure XLA, outside the kernels)
# ----------------------------------------------------------------------------
def _planes(x_nchw, Lp):
    """(N, C, H, W) -> (C, N*Lp): zero-padded images, spatially flattened and
    lane-padded to Lp, stacked per-image along the lane axis."""
    N, C, H, W = x_nchw.shape
    Hp, Wp = H + 2, W + 2
    xp = jnp.pad(x_nchw, ((0, 0), (0, 0), (1, 1), (1, 1))).reshape(N, C, Hp * Wp)
    xp = jnp.pad(xp, ((0, 0), (0, 0), (0, Lp - Hp * Wp)))
    return jnp.transpose(xp, (1, 0, 2)).reshape(C, N * Lp)


def _valid_mask(H, W, Lp):
    """(Lp,) 1.0 at flat positions m = i*Wp + j with i<H, j<W, else 0."""
    Hp, Wp = H + 2, W + 2
    m = jnp.zeros((Hp, Wp), jnp.float32).at[:H, :W].set(1.0).reshape(-1)
    return jnp.pad(m, (0, Lp - Hp * Wp))


def _pack_conv_w(w_hwio):
    """(3,3,Cin,Cout) -> (9, Cout, Cin): per-tap, sublane-aligned weight blocks."""
    kh, kw, cin, cout = w_hwio.shape
    return jnp.transpose(w_hwio, (0, 1, 3, 2)).reshape(kh * kw, cout, cin)


# ----------------------------------------------------------------------------
# Fused depth-net kernel
#   conv1 output at pixel (i,j) lives at flat lane m = i*Wp + j of its image's
#   Lp-wide block; tap (ky,kx) of conv1 reads the input plane at m + ky*Wp+kx,
#   which for valid pixels stays inside the same block (max read = last padded
#   pixel).  After ReLU, multiplying by the valid-pixel mask zeroes every lane
#   that is not a valid conv1 output; those zero lanes are exactly the zero
#   padding conv2 needs, because conv2's tap (ky,kx) reads h at
#   m + (ky-1)*Wp + (kx-1) and every out-of-image access lands either on a
#   masked lane of this block, on the masked tail of the previous block, or
#   wraps (pltpu.roll) onto the masked tail of the last block.
# ----------------------------------------------------------------------------
def _depth_kernel(x_ref, mask_ref, w1_ref, b1_ref, w2_ref, b2_ref, o_ref,
                  *, Wp, n, c1):
    x = x_ref[...]                                           # (cin, n) lane-dense
    # conv1: 9 taps = static lane-roll (XLU) + accumulating MXU matmul.
    acc = jnp.zeros((c1, n), jnp.float32)
    for ky in range(3):
        for kx in range(3):
            t = ky * 3 + kx
            s = ky * Wp + kx                                 # static flat offset
            xt = x if s == 0 else pltpu.roll(x, shift=(-s) % n, axis=1)
            acc = acc + jnp.dot(w1_ref[t], xt,
                                preferred_element_type=jnp.float32)
    h = jnp.maximum(acc + b1_ref[...], 0.0) * mask_ref[...]  # mask == conv2 pad
    # conv2 + sigmoid (weights pre-padded to 8 output rows; row 0 is real).
    acc2 = jnp.zeros((8, n), jnp.float32)
    for ky in range(3):
        for kx in range(3):
            t = ky * 3 + kx
            s = (ky - 1) * Wp + (kx - 1)
            ht = h if s == 0 else pltpu.roll(h, shift=(-s) % n, axis=1)
            acc2 = acc2 + jnp.dot(w2_ref[t], ht,
                                  preferred_element_type=jnp.float32)
    o_ref[...] = jax.nn.sigmoid(acc2 + b2_ref[...])          # row 0 = inv depth


def depth_net_forward(rgb_nchw, params):
    B, cin, H, W = rgb_nchw.shape
    c1 = params["d_conv1_w"].shape[-1]
    Hp, Wp = H + 2, W + 2
    Lp = _ceil_to(Hp * Wp, _LANES)
    n = B * Lp

    xf = _planes(rgb_nchw, Lp)                               # (cin, B*Lp)
    mask = jnp.tile(_valid_mask(H, W, Lp), B)[None, :]       # (1, B*Lp)

    w1 = _pack_conv_w(params["d_conv1_w"])                   # (9, c1, cin)
    b1 = params["d_conv1_b"].reshape(c1, 1)
    w2_real = _pack_conv_w(params["d_conv2_w"])              # (9, 1, c1)
    w2 = jnp.zeros((9, 8, c1), jnp.float32).at[:, 0:1, :].set(w2_real)
    b2 = jnp.zeros((8, 1), jnp.float32).at[0, 0].set(params["d_conv2_b"][0])

    kernel = functools.partial(_depth_kernel, Wp=Wp, n=n, c1=c1)
    out = pl.pallas_call(
        kernel,
        out_shape=jax.ShapeDtypeStruct((8, n), jnp.float32),
        grid=(1,),
        in_specs=[
            pl.BlockSpec((cin, n), lambda i: (0, 0)),
            pl.BlockSpec((1, n), lambda i: (0, 0)),
            pl.BlockSpec((9, c1, cin), lambda i: (0, 0, 0)),
            pl.BlockSpec((c1, 1), lambda i: (0, 0)),
            pl.BlockSpec((9, 8, c1), lambda i: (0, 0, 0)),
            pl.BlockSpec((8, 1), lambda i: (0, 0)),
        ],
        out_specs=pl.BlockSpec((8, n), lambda i: (0, 0)),
        compiler_params=pltpu.CompilerParams(
            dimension_semantics=("arbitrary",)),
    )(xf, mask, w1, b1, w2, b2)

    # Un-flatten the lane-dense slab: row 0, block b, lane i*Wp+j -> pixel (i,j).
    inv = out[0].reshape(B, Lp)[:, :Hp * Wp].reshape(B, Hp, Wp)[:, :H, :W]
    return inv                                               # (B, H, W)


# ----------------------------------------------------------------------------
# Fused pose-net kernel: conv3x3(2*cin->c1)+ReLU -> masked mean pool (matmul)
# -> FC(c1->6) (matmul).  All (context, batch) pairs processed in one step,
# stacked along the lane axis.
# ----------------------------------------------------------------------------
def _pose_kernel(x_ref, w_ref, b_ref, pool_ref, fcw_ref, fcb_ref, o_ref,
                 *, Wp, n, c1):
    x = x_ref[...]                                           # (2*cin, n)
    acc = jnp.zeros((c1, n), jnp.float32)
    for ky in range(3):
        for kx in range(3):
            t = ky * 3 + kx
            s = ky * Wp + kx
            xt = x if s == 0 else pltpu.roll(x, shift=(-s) % n, axis=1)
            acc = acc + jnp.dot(w_ref[t], xt,
                                preferred_element_type=jnp.float32)
    f = jnp.maximum(acc + b_ref[...], 0.0)                   # (c1, n)
    # Mask, 1/(H*W) and per-pair segment-sum folded into one MXU matmul.
    pooled = jnp.dot(f, pool_ref[...],
                     preferred_element_type=jnp.float32)     # (c1, 128)
    vec = jnp.dot(fcw_ref[...], pooled,
                  preferred_element_type=jnp.float32)        # (8, 128)
    o_ref[...] = _POSE_SCALE * (vec + fcb_ref[...])          # rows 0..5 valid


def pose_net_forward(rgb_nchw, ctx_list, params):
    B, cin, H, W = rgb_nchw.shape
    n_ctx = len(ctx_list)
    N = n_ctx * B                                            # pair p = (p//B, p%B)
    c1 = params["p_conv_w"].shape[-1]
    Hp, Wp = H + 2, W + 2
    Lp = _ceil_to(Hp * Wp, _LANES)
    n = N * Lp

    # Context-major pair stacking (same ordering as before); target is tiled by
    # the wrapper so the kernel needs a single lane-stacked input plane.
    ctx_all = jnp.concatenate(ctx_list, axis=0)              # (N, cin, H, W)
    tgt_all = jnp.tile(rgb_nchw, (n_ctx, 1, 1, 1))           # (N, cin, H, W)
    x = jnp.concatenate([_planes(tgt_all, Lp), _planes(ctx_all, Lp)], axis=0)

    maskflat = _valid_mask(H, W, Lp)                         # (Lp,)
    eye = jnp.eye(N, _LANES, dtype=jnp.float32)              # (N, 128)
    pool = (maskflat[None, :, None] * eye[:, None, :]).reshape(N * Lp, _LANES)
    pool = pool / float(H * W)

    w = _pack_conv_w(params["p_conv_w"])                     # (9, c1, 2*cin)
    b = params["p_conv_b"].reshape(c1, 1)
    fcw = jnp.zeros((8, c1), jnp.float32).at[:6, :].set(params["p_fc_w"].T)
    fcb = jnp.zeros((8, 1), jnp.float32).at[:6, 0].set(params["p_fc_b"][0])

    kernel = functools.partial(_pose_kernel, Wp=Wp, n=n, c1=c1)
    out = pl.pallas_call(
        kernel,
        out_shape=jax.ShapeDtypeStruct((8, _LANES), jnp.float32),
        grid=(1,),
        in_specs=[
            pl.BlockSpec((2 * cin, n), lambda i: (0, 0)),
            pl.BlockSpec((9, c1, 2 * cin), lambda i: (0, 0, 0)),
            pl.BlockSpec((c1, 1), lambda i: (0, 0)),
            pl.BlockSpec((N * Lp, _LANES), lambda i: (0, 0)),
            pl.BlockSpec((8, c1), lambda i: (0, 0)),
            pl.BlockSpec((8, 1), lambda i: (0, 0)),
        ],
        out_specs=pl.BlockSpec((8, _LANES), lambda i: (0, 0)),
        compiler_params=pltpu.CompilerParams(
            dimension_semantics=("arbitrary",)),
    )(x, w, b, pool, fcw, fcb)

    return out[:6, :N].T                                     # (N, 6)


# ----------------------------------------------------------------------------
# Pose utilities (Pose.from_vec, rotation_mode='euler') -- plain JAX glue.
# ----------------------------------------------------------------------------
def euler2mat(angle):
    x, y, z = angle[:, 0], angle[:, 1], angle[:, 2]
    zeros = jnp.zeros_like(z)
    ones = jnp.ones_like(z)

    cosz, sinz = jnp.cos(z), jnp.sin(z)
    zmat = jnp.stack([cosz, -sinz, zeros,
                      sinz, cosz, zeros,
                      zeros, zeros, ones], axis=1).reshape(-1, 3, 3)

    cosy, siny = jnp.cos(y), jnp.sin(y)
    ymat = jnp.stack([cosy, zeros, siny,
                      zeros, ones, zeros,
                      -siny, zeros, cosy], axis=1).reshape(-1, 3, 3)

    cosx, sinx = jnp.cos(x), jnp.sin(x)
    xmat = jnp.stack([ones, zeros, zeros,
                      zeros, cosx, -sinx,
                      zeros, sinx, cosx], axis=1).reshape(-1, 3, 3)

    return xmat @ ymat @ zmat


def pose_from_vec(vec):
    """vec: (N, 6) -> homogeneous transform (N, 4, 4)."""
    N = vec.shape[0]
    t = vec[:, :3, None]
    R = euler2mat(vec[:, 3:])
    Rt = jnp.concatenate([R, t], axis=2)
    bottom = jnp.tile(jnp.array([[[0.0, 0.0, 0.0, 1.0]]], jnp.float32),
                      (N, 1, 1))
    return jnp.concatenate([Rt, bottom], axis=1)


# ----------------------------------------------------------------------------
# Parameters (deterministic synthetic init, identical to previous version)
# ----------------------------------------------------------------------------
def init_params(key):
    ks = jax.random.split(key, 4)
    return {
        "d_conv1_w": 0.1 * jax.random.normal(ks[0], (3, 3, 3, 8), jnp.float32),
        "d_conv1_b": jnp.zeros((8,), jnp.float32),
        "d_conv2_w": 0.1 * jax.random.normal(ks[1], (3, 3, 8, 1), jnp.float32),
        "d_conv2_b": jnp.zeros((1,), jnp.float32),
        "p_conv_w": 0.1 * jax.random.normal(ks[2], (3, 3, 6, 8), jnp.float32),
        "p_conv_b": jnp.zeros((8,), jnp.float32),
        "p_fc_w": 0.1 * jax.random.normal(ks[3], (8, 6), jnp.float32),
        "p_fc_b": jnp.zeros((1, 6), jnp.float32),
    }


# ----------------------------------------------------------------------------
# SfmModel.forward
# ----------------------------------------------------------------------------
def sfm_forward(batch, params):
    # flip_lr_prob=0.0, upsample_depth_maps=False, learn_intrinsics=False,
    # no 'mask' in batch -> masks are None, no flipping, intrinsics passthrough.
    rgb = batch["rgb"]                                       # NCHW
    B = rgb.shape[0]

    # ---- compute_inv_depths (fused depth_net kernel) ----
    inv = depth_net_forward(rgb, params)                     # (B, H, W)
    inv_depths = [inv[:, None, :, :]]                        # make_list -> NCHW

    # ---- compute_poses (fused pose_net kernel, all contexts in one call) ----
    poses = None
    if "rgb_context" in batch:
        n_ctx = len(batch["rgb_context"])
        vec = pose_net_forward(rgb, batch["rgb_context"], params)  # (n_ctx*B, 6)
        mats = pose_from_vec(vec).reshape(n_ctx, B, 4, 4)
        poses = [mats[i] for i in range(n_ctx)]              # Pose.from_vec list

    return {"inv_depths": inv_depths, "poses": poses,
            "intrinsics": batch["intrinsics"]}


# ----------------------------------------------------------------------------
# main
# ----------------------------------------------------------------------------
if __name__ == "__main__":
    B, C, H, W = 2, 3, 16, 16
    key = jax.random.PRNGKey(0)
    k_rgb, k_c0, k_c1, k_params = jax.random.split(key, 4)

    rgb = jax.random.normal(k_rgb, (B, C, H, W), jnp.float32)
    rgb_context = [
        jax.random.normal(k_c0, (B, C, H, W), jnp.float32),
        jax.random.normal(k_c1, (B, C, H, W), jnp.float32),
    ]
    intrinsics = jnp.tile(
        jnp.array([[100.0, 0.0, 8.0],
                   [0.0, 100.0, 8.0],
                   [0.0, 0.0, 1.0]], jnp.float32)[None], (B, 1, 1))

    batch = {"rgb": rgb, "rgb_context": rgb_context, "intrinsics": intrinsics}
    params = init_params(k_params)

    out = sfm_forward(batch, params)
    jax.block_until_ready(out["inv_depths"][0])
    jax.block_until_ready(out["poses"][0])
    jax.block_until_ready(out["intrinsics"])

    assert out["inv_depths"][0].shape == (B, 1, H, W)
    assert len(out["poses"]) == len(rgb_context)
    assert out["poses"][0].shape == (B, 4, 4)
    assert out["intrinsics"].shape == (B, 3, 3)
    print("KERNEL_OK")
</pallas_src>

<mosaic_0001>
module attributes {stable_mosaic.version = 11 : i64} {
  func.func @_depth_kernel(%arg0: i32, %arg1: memref<3x768xf32, #tpu.memory_space<vmem>>, %arg2: memref<1x768xf32, #tpu.memory_space<vmem>>, %arg3: memref<9x8x3xf32, #tpu.memory_space<vmem>>, %arg4: memref<8x1xf32, #tpu.memory_space<vmem>>, %arg5: memref<9x8x8xf32, #tpu.memory_space<vmem>>, %arg6: memref<8x1xf32, #tpu.memory_space<vmem>>, %arg7: memref<8x768xf32, #tpu.memory_space<vmem>>) attributes {dimension_semantics = [#tpu.dimension_semantics<arbitrary>], iteration_bounds = array<i64: 1>, scalar_prefetch = 0 : i64, scratch_operands = 0 : i64, tpu.core_type = #tpu.core_type<tc>, window_params = [{pipeline_mode = #tpu.pipeline_mode<synchronous>, transform_indices = @transform_0, window_bounds = array<i64: 3, 768>}, {pipeline_mode = #tpu.pipeline_mode<synchronous>, transform_indices = @transform_1, window_bounds = array<i64: 1, 768>}, {pipeline_mode = #tpu.pipeline_mode<synchronous>, transform_indices = @transform_2, window_bounds = array<i64: 9, 8, 3>}, {pipeline_mode = #tpu.pipeline_mode<synchronous>, transform_indices = @transform_3, window_bounds = array<i64: 8, 1>}, {pipeline_mode = #tpu.pipeline_mode<synchronous>, transform_indices = @transform_4, window_bounds = array<i64: 9, 8, 8>}, {pipeline_mode = #tpu.pipeline_mode<synchronous>, transform_indices = @transform_5, window_bounds = array<i64: 8, 1>}, {pipeline_mode = #tpu.pipeline_mode<synchronous>, transform_indices = @transform_6, window_bounds = array<i64: 8, 768>}]} {
    %c0 = arith.constant 0 : index
    %c0_0 = arith.constant 0 : index
    %0 = vector.load %arg1[%c0, %c0_0] : memref<3x768xf32, #tpu.memory_space<vmem>>, vector<3x768xf32>
    %cst = arith.constant 0.000000e+00 : f32
    %1 = vector.broadcast %cst : f32 to vector<8x768xf32>
    %c0_1 = arith.constant 0 : index
    %c0_2 = arith.constant 0 : index
    %c0_3 = arith.constant 0 : index
    %2 = vector.load %arg3[%c0_1, %c0_2, %c0_3] : memref<9x8x3xf32, #tpu.memory_space<vmem>>, vector<1x8x3xf32>
    %3 = vector.shape_cast %2 : vector<1x8x3xf32> to vector<8x3xf32>
    %cst_4 = arith.constant dense<0.000000e+00> : vector<8x768xf32>
    %4 = tpu.matmul %3, %0, %cst_4 {dimension_numbers = #tpu.dot_dimension_numbers<[1], [0], [0], [1], [0, 0, 1, 1], [], []>} : vector<8x3xf32>, vector<3x768xf32>, vector<8x768xf32> -> vector<8x768xf32>
    %5 = arith.addf %1, %4 : vector<8x768xf32>
    %c767_i32 = arith.constant 767 : i32
    %6 = tpu.dynamic_rotate %0 by %c767_i32 dim 1 : vector<3x768xf32>, i32 -> vector<3x768xf32>
    %c1 = arith.constant 1 : index
    %c0_5 = arith.constant 0 : index
    %c0_6 = arith.constant 0 : index
    %7 = vector.load %arg3[%c1, %c0_5, %c0_6] : memref<9x8x3xf32, #tpu.memory_space<vmem>>, vector<1x8x3xf32>
    %8 = vector.shape_cast %7 : vector<1x8x3xf32> to vector<8x3xf32>
    %cst_7 = arith.constant dense<0.000000e+00> : vector<8x768xf32>
    %9 = tpu.matmul %8, %6, %cst_7 {dimension_numbers = #tpu.dot_dimension_numbers<[1], [0], [0], [1], [0, 0, 1, 1], [], []>} : vector<8x3xf32>, vector<3x768xf32>, vector<8x768xf32> -> vector<8x768xf32>
    %10 = arith.addf %5, %9 : vector<8x768xf32>
    %c766_i32 = arith.constant 766 : i32
    %11 = tpu.dynamic_rotate %0 by %c766_i32 dim 1 : vector<3x768xf32>, i32 -> vector<3x768xf32>
    %c2 = arith.constant 2 : index
    %c0_8 = arith.constant 0 : index
    %c0_9 = arith.constant 0 : index
    %12 = vector.load %arg3[%c2, %c0_8, %c0_9] : memref<9x8x3xf32, #tpu.memory_space<vmem>>, vector<1x8x3xf32>
    %13 = vector.shape_cast %12 : vector<1x8x3xf32> to vector<8x3xf32>
    %cst_10 = arith.constant dense<0.000000e+00> : vector<8x768xf32>
    %14 = tpu.matmul %13, %11, %cst_10 {dimension_numbers = #tpu.dot_dimension_numbers<[1], [0], [0], [1], [0, 0, 1, 1], [], []>} : vector<8x3xf32>, vector<3x768xf32>, vector<8x768xf32> -> vector<8x768xf32>
    %15 = arith.addf %10, %14 : vector<8x768xf32>
    %c750_i32 = arith.constant 750 : i32
    %16 = tpu.dynamic_rotate %0 by %c750_i32 dim 1 : vector<3x768xf32>, i32 -> vector<3x768xf32>
    %c3 = arith.constant 3 : index
    %c0_11 = arith.constant 0 : index
    %c0_12 = arith.constant 0 : index
    %17 = vector.load %arg3[%c3, %c0_11, %c0_12] : memref<9x8x3xf32, #tpu.memory_space<vmem>>, vector<1x8x3xf32>
    %18 = vector.shape_cast %17 : vector<1x8x3xf32> to vector<8x3xf32>
    %cst_13 = arith.constant dense<0.000000e+00> : vector<8x768xf32>
    %19 = tpu.matmul %18, %16, %cst_13 {dimension_numbers = #tpu.dot_dimension_numbers<[1], [0], [0], [1], [0, 0, 1, 1], [], []>} : vector<8x3xf32>, vector<3x768xf32>, vector<8x768xf32> -> vector<8x768xf32>
    %20 = arith.addf %15, %19 : vector<8x768xf32>
    %c749_i32 = arith.constant 749 : i32
    %21 = tpu.dynamic_rotate %0 by %c749_i32 dim 1 : vector<3x768xf32>, i32 -> vector<3x768xf32>
    %c4 = arith.constant 4 : index
    %c0_14 = arith.constant 0 : index
    %c0_15 = arith.constant 0 : index
    %22 = vector.load %arg3[%c4, %c0_14, %c0_15] : memref<9x8x3xf32, #tpu.memory_space<vmem>>, vector<1x8x3xf32>
    %23 = vector.shape_cast %22 : vector<1x8x3xf32> to vector<8x3xf32>
    %cst_16 = arith.constant dense<0.000000e+00> : vector<8x768xf32>
    %24 = tpu.matmul %23, %21, %cst_16 {dimension_numbers = #tpu.dot_dimension_numbers<[1], [0], [0], [1], [0, 0, 1, 1], [], []>} : vector<8x3xf32>, vector<3x768xf32>, vector<8x768xf32> -> vector<8x768xf32>
    %25 = arith.addf %20, %24 : vector<8x768xf32>
    %c748_i32 = arith.constant 748 : i32
    %26 = tpu.dynamic_rotate %0 by %c748_i32 dim 1 : vector<3x768xf32>, i32 -> vector<3x768xf32>
    %c5 = arith.constant 5 : index
    %c0_17 = arith.constant 0 : index
    %c0_18 = arith.constant 0 : index
    %27 = vector.load %arg3[%c5, %c0_17, %c0_18] : memref<9x8x3xf32, #tpu.memory_space<vmem>>, vector<1x8x3xf32>
    %28 = vector.shape_cast %27 : vector<1x8x3xf32> to vector<8x3xf32>
    %cst_19 = arith.constant dense<0.000000e+00> : vector<8x768xf32>
    %29 = tpu.matmul %28, %26, %cst_19 {dimension_numbers = #tpu.dot_dimension_numbers<[1], [0], [0], [1], [0, 0, 1, 1], [], []>} : vector<8x3xf32>, vector<3x768xf32>, vector<8x768xf32> -> vector<8x768xf32>
    %30 = arith.addf %25, %29 : vector<8x768xf32>
    %c732_i32 = arith.constant 732 : i32
    %31 = tpu.dynamic_rotate %0 by %c732_i32 dim 1 : vector<3x768xf32>, i32 -> vector<3x768xf32>
    %c6 = arith.constant 6 : index
    %c0_20 = arith.constant 0 : index
    %c0_21 = arith.constant 0 : index
    %32 = vector.load %arg3[%c6, %c0_20, %c0_21] : memref<9x8x3xf32, #tpu.memory_space<vmem>>, vector<1x8x3xf32>
    %33 = vector.shape_cast %32 : vector<1x8x3xf32> to vector<8x3xf32>
    %cst_22 = arith.constant dense<0.000000e+00> : vector<8x768xf32>
    %34 = tpu.matmul %33, %31, %cst_22 {dimension_numbers = #tpu.dot_dimension_numbers<[1], [0], [0], [1], [0, 0, 1, 1], [], []>} : vector<8x3xf32>, vector<3x768xf32>, vector<8x768xf32> -> vector<8x768xf32>
    %35 = arith.addf %30, %34 : vector<8x768xf32>
    %c731_i32 = arith.constant 731 : i32
    %36 = tpu.dynamic_rotate %0 by %c731_i32 dim 1 : vector<3x768xf32>, i32 -> vector<3x768xf32>
    %c7 = arith.constant 7 : index
    %c0_23 = arith.constant 0 : index
    %c0_24 = arith.constant 0 : index
    %37 = vector.load %arg3[%c7, %c0_23, %c0_24] : memref<9x8x3xf32, #tpu.memory_space<vmem>>, vector<1x8x3xf32>
    %38 = vector.shape_cast %37 : vector<1x8x3xf32> to vector<8x3xf32>
    %cst_25 = arith.constant dense<0.000000e+00> : vector<8x768xf32>
    %39 = tpu.matmul %38, %36, %cst_25 {dimension_numbers = #tpu.dot_dimension_numbers<[1], [0], [0], [1], [0, 0, 1, 1], [], []>} : vector<8x3xf32>, vector<3x768xf32>, vector<8x768xf32> -> vector<8x768xf32>
    %40 = arith.addf %35, %39 : vector<8x768xf32>
    %c730_i32 = arith.constant 730 : i32
    %41 = tpu.dynamic_rotate %0 by %c730_i32 dim 1 : vector<3x768xf32>, i32 -> vector<3x768xf32>
    %c8 = arith.constant 8 : index
    %c0_26 = arith.constant 0 : index
    %c0_27 = arith.constant 0 : index
    %42 = vector.load %arg3[%c8, %c0_26, %c0_27] : memref<9x8x3xf32, #tpu.memory_space<vmem>>, vector<1x8x3xf32>
    %43 = vector.shape_cast %42 : vector<1x8x3xf32> to vector<8x3xf32>
    %cst_28 = arith.constant dense<0.000000e+00> : vector<8x768xf32>
    %44 = tpu.matmul %43, %41, %cst_28 {dimension_numbers = #tpu.dot_dimension_numbers<[1], [0], [0], [1], [0, 0, 1, 1], [], []>} : vector<8x3xf32>, vector<3x768xf32>, vector<8x768xf32> -> vector<8x768xf32>
    %45 = arith.addf %40, %44 : vector<8x768xf32>
    %c0_29 = arith.constant 0 : index
    %c0_30 = arith.constant 0 : index
    %46 = vector.load %arg4[%c0_29, %c0_30] : memref<8x1xf32, #tpu.memory_space<vmem>>, vector<8x1xf32>
    %47 = vector.broadcast %46 : vector<8x1xf32> to vector<8x768xf32>
    %48 = arith.addf %45, %47 : vector<8x768xf32>
    %cst_31 = arith.constant 0.000000e+00 : f32
    %49 = vector.broadcast %cst_31 : f32 to vector<8x768xf32>
    %50 = arith.maximumf %48, %49 : vector<8x768xf32>
    %c0_32 = arith.constant 0 : index
    %c0_33 = arith.constant 0 : index
    %51 = vector.load %arg2[%c0_32, %c0_33] : memref<1x768xf32, #tpu.memory_space<vmem>>, vector<1x768xf32>
    %52 = vector.broadcast %51 : vector<1x768xf32> to vector<8x768xf32>
    %53 = arith.mulf %50, %52 : vector<8x768xf32>
    %cst_34 = arith.constant 0.000000e+00 : f32
    %54 = vector.broadcast %cst_34 : f32 to vector<8x768xf32>
    %c19_i32 = arith.constant 19 : i32
    %55 = tpu.dynamic_rotate %53 by %c19_i32 dim 1 : vector<8x768xf32>, i32 -> vector<8x768xf32>
    %c0_35 = arith.constant 0 : index
    %c0_36 = arith.constant 0 : index
    %c0_37 = arith.constant 0 : index
    %56 = vector.load %arg5[%c0_35, %c0_36, %c0_37] : memref<9x8x8xf32, #tpu.memory_space<vmem>>, vector<1x8x8xf32>
    %57 = vector.shape_cast %56 : vector<1x8x8xf32> to vector<8x8xf32>
    %cst_38 = arith.constant dense<0.000000e+00> : vector<8x768xf32>
    %58 = tpu.matmul %57, %55, %cst_38 {dimension_numbers = #tpu.dot_dimension_numbers<[1], [0], [0], [1], [0, 0, 1, 1], [], []>} : vector<8x8xf32>, vector<8x768xf32>, vector<8x768xf32> -> vector<8x768xf32>
    %59 = arith.addf %54, %58 : vector<8x768xf32>
    %c18_i32 = arith.constant 18 : i32
    %60 = tpu.dynamic_rotate %53 by %c18_i32 dim 1 : vector<8x768xf32>, i32 -> vector<8x768xf32>
    %c1_39 = arith.constant 1 : index
    %c0_40 = arith.constant 0 : index
    %c0_41 = arith.constant 0 : index
    %61 = vector.load %arg5[%c1_39, %c0_40, %c0_41] : memref<9x8x8xf32, #tpu.memory_space<vmem>>, vector<1x8x8xf32>
    %62 = vector.shape_cast %61 : vector<1x8x8xf32> to vector<8x8xf32>
    %cst_42 = arith.constant dense<0.000000e+00> : vector<8x768xf32>
    %63 = tpu.matmul %62, %60, %cst_42 {dimension_numbers = #tpu.dot_dimension_numbers<[1], [0], [0], [1], [0, 0, 1, 1], [], []>} : vector<8x8xf32>, vector<8x768xf32>, vector<8x768xf32> -> vector<8x768xf32>
    %64 = arith.addf %59, %63 : vector<8x768xf32>
    %c17_i32 = arith.constant 17 : i32
    %65 = tpu.dynamic_rotate %53 by %c17_i32 dim 1 : vector<8x768xf32>, i32 -> vector<8x768xf32>
    %c2_43 = arith.constant 2 : index
    %c0_44 = arith.constant 0 : index
    %c0_45 = arith.constant 0 : index
    %66 = vector.load %arg5[%c2_43, %c0_44, %c0_45] : memref<9x8x8xf32, #tpu.memory_space<vmem>>, vector<1x8x8xf32>
    %67 = vector.shape_cast %66 : vector<1x8x8xf32> to vector<8x8xf32>
    %cst_46 = arith.constant dense<0.000000e+00> : vector<8x768xf32>
    %68 = tpu.matmul %67, %65, %cst_46 {dimension_numbers = #tpu.dot_dimension_numbers<[1], [0], [0], [1], [0, 0, 1, 1], [], []>} : vector<8x8xf32>, vector<8x768xf32>, vector<8x768xf32> -> vector<8x768xf32>
    %69 = arith.addf %64, %68 : vector<8x768xf32>
    %c1_i32 = arith.constant 1 : i32
    %70 = tpu.dynamic_rotate %53 by %c1_i32 dim 1 : vector<8x768xf32>, i32 -> vector<8x768xf32>
    %c3_47 = arith.constant 3 : index
    %c0_48 = arith.constant 0 : index
    %c0_49 = arith.constant 0 : index
    %71 = vector.load %arg5[%c3_47, %c0_48, %c0_49] : memref<9x8x8xf32, #tpu.memory_space<vmem>>, vector<1x8x8xf32>
    %72 = vector.shape_cast %71 : vector<1x8x8xf32> to vector<8x8xf32>
    %cst_50 = arith.constant dense<0.000000e+00> : vector<8x768xf32>
    %73 = tpu.matmul %72, %70, %cst_50 {dimension_numbers = #tpu.dot_dimension_numbers<[1], [0], [0], [1], [0, 0, 1, 1], [], []>} : vector<8x8xf32>, vector<8x768xf32>, vector<8x768xf32> -> vector<8x768xf32>
    %74 = arith.addf %69, %73 : vector<8x768xf32>
    %c4_51 = arith.constant 4 : index
    %c0_52 = arith.constant 0 : index
    %c0_53 = arith.constant 0 : index
    %75 = vector.load %arg5[%c4_51, %c0_52, %c0_53] : memref<9x8x8xf32, #tpu.memory_space<vmem>>, vector<1x8x8xf32>
    %76 = vector.shape_cast %75 : vector<1x8x8xf32> to vector<8x8xf32>
    %cst_54 = arith.constant dense<0.000000e+00> : vector<8x768xf32>
    %77 = tpu.matmul %76, %53, %cst_54 {dimension_numbers = #tpu.dot_dimension_numbers<[1], [0], [0], [1], [0, 0, 1, 1], [], []>} : vector<8x8xf32>, vector<8x768xf32>, vector<8x768xf32> -> vector<8x768xf32>
    %78 = arith.addf %74, %77 : vector<8x768xf32>
    %c767_i32_55 = arith.constant 767 : i32
    %79 = tpu.dynamic_rotate %53 by %c767_i32_55 dim 1 : vector<8x768xf32>, i32 -> vector<8x768xf32>
    %c5_56 = arith.constant 5 : index
    %c0_57 = arith.constant 0 : index
    %c0_58 = arith.constant 0 : index
    %80 = vector.load %arg5[%c5_56, %c0_57, %c0_58] : memref<9x8x8xf32, #tpu.memory_space<vmem>>, vector<1x8x8xf32>
    %81 = vector.shape_cast %80 : vector<1x8x8xf32> to vector<8x8xf32>
    %cst_59 = arith.constant dense<0.000000e+00> : vector<8x768xf32>
    %82 = tpu.matmul %81, %79, %cst_59 {dimension_numbers = #tpu.dot_dimension_numbers<[1], [0], [0], [1], [0, 0, 1, 1], [], []>} : vector<8x8xf32>, vector<8x768xf32>, vector<8x768xf32> -> vector<8x768xf32>
    %83 = arith.addf %78, %82 : vector<8x768xf32>
    %c751_i32 = arith.constant 751 : i32
    %84 = tpu.dynamic_rotate %53 by %c751_i32 dim 1 : vector<8x768xf32>, i32 -> vector<8x768xf32>
    %c6_60 = arith.constant 6 : index
    %c0_61 = arith.constant 0 : index
    %c0_62 = arith.constant 0 : index
    %85 = vector.load %arg5[%c6_60, %c0_61, %c0_62] : memref<9x8x8xf32, #tpu.memory_space<vmem>>, vector<1x8x8xf32>
    %86 = vector.shape_cast %85 : vector<1x8x8xf32> to vector<8x8xf32>
    %cst_63 = arith.constant dense<0.000000e+00> : vector<8x768xf32>
    %87 = tpu.matmul %86, %84, %cst_63 {dimension_numbers = #tpu.dot_dimension_numbers<[1], [0], [0], [1], [0, 0, 1, 1], [], []>} : vector<8x8xf32>, vector<8x768xf32>, vector<8x768xf32> -> vector<8x768xf32>
    %88 = arith.addf %83, %87 : vector<8x768xf32>
    %c750_i32_64 = arith.constant 750 : i32
    %89 = tpu.dynamic_rotate %53 by %c750_i32_64 dim 1 : vector<8x768xf32>, i32 -> vector<8x768xf32>
    %c7_65 = arith.constant 7 : index
    %c0_66 = arith.constant 0 : index
    %c0_67 = arith.constant 0 : index
    %90 = vector.load %arg5[%c7_65, %c0_66, %c0_67] : memref<9x8x8xf32, #tpu.memory_space<vmem>>, vector<1x8x8xf32>
    %91 = vector.shape_cast %90 : vector<1x8x8xf32> to vector<8x8xf32>
    %cst_68 = arith.constant dense<0.000000e+00> : vector<8x768xf32>
    %92 = tpu.matmul %91, %89, %cst_68 {dimension_numbers = #tpu.dot_dimension_numbers<[1], [0], [0], [1], [0, 0, 1, 1], [], []>} : vector<8x8xf32>, vector<8x768xf32>, vector<8x768xf32> -> vector<8x768xf32>
    %93 = arith.addf %88, %92 : vector<8x768xf32>
    %c749_i32_69 = arith.constant 749 : i32
    %94 = tpu.dynamic_rotate %53 by %c749_i32_69 dim 1 : vector<8x768xf32>, i32 -> vector<8x768xf32>
    %c8_70 = arith.constant 8 : index
    %c0_71 = arith.constant 0 : index
    %c0_72 = arith.constant 0 : index
    %95 = vector.load %arg5[%c8_70, %c0_71, %c0_72] : memref<9x8x8xf32, #tpu.memory_space<vmem>>, vector<1x8x8xf32>
    %96 = vector.shape_cast %95 : vector<1x8x8xf32> to vector<8x8xf32>
    %cst_73 = arith.constant dense<0.000000e+00> : vector<8x768xf32>
    %97 = tpu.matmul %96, %94, %cst_73 {dimension_numbers = #tpu.dot_dimension_numbers<[1], [0], [0], [1], [0, 0, 1, 1], [], []>} : vector<8x8xf32>, vector<8x768xf32>, vector<8x768xf32> -> vector<8x768xf32>
    %98 = arith.addf %93, %97 : vector<8x768xf32>
    %c0_74 = arith.constant 0 : index
    %c0_75 = arith.constant 0 : index
    %99 = vector.load %arg6[%c0_74, %c0_75] : memref<8x1xf32, #tpu.memory_space<vmem>>, vector<8x1xf32>
    %100 = vector.broadcast %99 : vector<8x1xf32> to vector<8x768xf32>
    %101 = arith.addf %98, %100 : vector<8x768xf32>
    %102 = arith.negf %101 : vector<8x768xf32>
    %103 = math.exp %102 : vector<8x768xf32>
    %cst_76 = arith.constant 1.000000e+00 : f32
    %104 = vector.broadcast %cst_76 : f32 to vector<8x768xf32>
    %105 = arith.addf %104, %103 : vector<8x768xf32>
    %106 = arith.divf %104, %105 : vector<8x768xf32>
    %c0_77 = arith.constant 0 : index
    %c0_78 = arith.constant 0 : index
    %107 = vector.load %arg7[%c0_77, %c0_78] : memref<8x768xf32, #tpu.memory_space<vmem>>, vector<8x768xf32>
    tpu.vector_store %arg7[%c0_77, %c0_78], %106 {strides = array<i32>} : memref<8x768xf32, #tpu.memory_space<vmem>>, vector<8x768xf32>,
    return
  }
  func.func @transform_0(%arg0: i32) -> (i32, i32) {
    %c0_i32 = arith.constant 0 : i32
    %c0_i32_0 = arith.constant 0 : i32
    %c0_i32_1 = arith.constant 0 : i32
    return %c0_i32, %c0_i32_0 : i32, i32
  }
  func.func @transform_1(%arg0: i32) -> (i32, i32) {
    %c0_i32 = arith.constant 0 : i32
    %c0_i32_0 = arith.constant 0 : i32
    %c0_i32_1 = arith.constant 0 : i32
    return %c0_i32, %c0_i32_0 : i32, i32
  }
  func.func @transform_2(%arg0: i32) -> (i32, i32, i32) {
    %c0_i32 = arith.constant 0 : i32
    %c0_i32_0 = arith.constant 0 : i32
    %c0_i32_1 = arith.constant 0 : i32
    %c0_i32_2 = arith.constant 0 : i32
    return %c0_i32, %c0_i32_0, %c0_i32_1 : i32, i32, i32
  }
  func.func @transform_3(%arg0: i32) -> (i32, i32) {
    %c0_i32 = arith.constant 0 : i32
    %c0_i32_0 = arith.constant 0 : i32
    %c0_i32_1 = arith.constant 0 : i32
    return %c0_i32, %c0_i32_0 : i32, i32
  }
  func.func @transform_4(%arg0: i32) -> (i32, i32, i32) {
    %c0_i32 = arith.constant 0 : i32
    %c0_i32_0 = arith.constant 0 : i32
    %c0_i32_1 = arith.constant 0 : i32
    %c0_i32_2 = arith.constant 0 : i32
    return %c0_i32, %c0_i32_0, %c0_i32_1 : i32, i32, i32
  }
  func.func @transform_5(%arg0: i32) -> (i32, i32) {
    %c0_i32 = arith.constant 0 : i32
    %c0_i32_0 = arith.constant 0 : i32
    %c0_i32_1 = arith.constant 0 : i32
    return %c0_i32, %c0_i32_0 : i32, i32
  }
  func.func @transform_6(%arg0: i32) -> (i32, i32) {
    %c0_i32 = arith.constant 0 : i32
    %c0_i32_0 = arith.constant 0 : i32
    %c0_i32_1 = arith.constant 0 : i32
    return %c0_i32, %c0_i32_0 : i32, i32
  }
}

</mosaic_0001>

<llo_original>
// kernel: tpu_custom_call.1
$region0: #{tpu_custom_call.1}
  #allocation0 [shape = 'u32[]', space=smem, size = 0x4, offset = 0x4, fixed_abs, tag = 'smem constant byte address 0x4 - core index']
  #allocation1 [shape = 'u32[144,128]{1,0:T(1,128)}', space=vmem, size = 0x12000, scoped, tag = 'internal scratch']
  %s0 = inlined_call_operand.vmem [shape: f32[3,768], index: 0, kind: input, shape index: {}]
  %s1 = inlined_call_operand.vmem [shape: f32[1,768], index: 1, kind: input, shape index: {}]
  %s2 = inlined_call_operand.vmem [shape: f32[9,8,3], index: 2, kind: input, shape index: {}]
  %s3 = inlined_call_operand.vmem [shape: f32[8,1], index: 3, kind: input, shape index: {}]
  %s4 = inlined_call_operand.vmem [shape: f32[9,8,8], index: 4, kind: input, shape index: {}]
  %s5 = inlined_call_operand.vmem [shape: f32[8,1], index: 5, kind: input, shape index: {}]
  %s6 = inlined_call_operand.hbm [shape: f32[8,768], index: 6, kind: output, shape index: {}]
  %s7 = sld [smem:[#allocation0]]
  $region34: #{tpu_custom_call.1} parent=0
    _
  %s9 = ssub.s32 1, %s7
  %s10 = scalar_select 0, %s9, %s7
  $region1: #{tpu_custom_call.1} parent=0
    #allocation2 [shape = 'u8[24576]{0}', space=vmem, size = 0x6000, scoped, tag = 'output window, operand 0, single buffered']
    #allocation3 [shape = 's32[1]{0}', space=sflag, size = 0x4, scoped, tag = 'scoped memory for tpu_custom_call.1']
    %11 = vsyncpa [#allocation3], 0
    // Predicated region
    $region2: #{tpu_custom_call.1} parent=1 // pred_check
      _
    $region3: #{tpu_custom_call.1} parent=1 // pred_check_branch
      %13 = sbr.rel (0) target = $region5
    $region4: #{tpu_custom_call.1} parent=1 // pred_region
      _
    $region5: #{tpu_custom_call.1} parent=1 // pred_fallthru
      _
    // Predicated region
    $region6: #{tpu_custom_call.1} parent=1 // pred_check
      _
    $region7: #{tpu_custom_call.1} parent=1 // pred_check_branch
      %15 = sbr.rel (0) target = $region9
    $region8: #{tpu_custom_call.1} parent=1 // pred_region
      _
    $region9: #{tpu_custom_call.1} parent=1 // pred_fallthru
      _
    // Predicated region
    $region10: #{tpu_custom_call.1} parent=1 // pred_check
      _
    $region11: #{tpu_custom_call.1} parent=1 // pred_check_branch
      %17 = sbr.rel (0) target = $region13
    $region12: #{tpu_custom_call.1} parent=1 // pred_region
      _
    $region13: #{tpu_custom_call.1} parent=1 // pred_fallthru
      _
    // Predicated region
    $region14: #{tpu_custom_call.1} parent=1 // pred_check
      _
    $region15: #{tpu_custom_call.1} parent=1 // pred_check_branch
      %19 = sbr.rel (0) target = $region17
    $region16: #{tpu_custom_call.1} parent=1 // pred_region
      _
    $region17: #{tpu_custom_call.1} parent=1 // pred_fallthru
      _
    // Predicated region
    $region18: #{tpu_custom_call.1} parent=1 // pred_check
      _
    $region19: #{tpu_custom_call.1} parent=1 // pred_check_branch
      %21 = sbr.rel (0) target = $region21
    $region20: #{tpu_custom_call.1} parent=1 // pred_region
      _
    $region21: #{tpu_custom_call.1} parent=1 // pred_fallthru
      _
    // Predicated region
    $region22: #{tpu_custom_call.1} parent=1 // pred_check
      _
    $region23: #{tpu_custom_call.1} parent=1 // pred_check_branch
      %23 = sbr.rel (0) target = $region25
    $region24: #{tpu_custom_call.1} parent=1 // pred_region
      _
    $region25: #{tpu_custom_call.1} parent=1 // pred_fallthru
      _
    %v24 = vld [vmem:[%s0] sm:$0x77]
    %v25 = vld [vmem:[%s0 + $0x8] sm:$0x77]
    %v26 = vld [vmem:[%s0 + $0x10] sm:$0x77]
    %v27 = vld [vmem:[%s2] sm:$0xff]
    %v31 = vcombine.high %v24, %v24
    %v32 = vcombine.high %v25, %v25
    %v33 = vcombine.high %v26, %v26
    %37 = vrot.lane.b32.xlu0 %v24, 127
    %v38 = vpop.permute.xlu0 %37
    %39 = vrot.lane.b32.xlu0 %v31, 127
    %v40 = vpop.permute.xlu0 %39
    %41 = vrot.lane.b32.xlu0 %v25, 127
    %v42 = vpop.permute.xlu0 %41
    %43 = vrot.lane.b32.xlu0 %v32, 127
    %v44 = vpop.permute.xlu0 %43
    %45 = vrot.lane.b32.xlu0 %v26, 127
    %v46 = vpop.permute.xlu0 %45
    %47 = vrot.lane.b32.xlu0 %v33, 127
    %v48 = vpop.permute.xlu0 %47
    %v49 = vlaneseq
    %v50 = vand.u32 %v49, 127
    %vm51 = vcmp.lt.s32.totalorder %v50, 127
    %v52 = vsel %vm51, %v46, %v48
    %v53 = vsel %vm51, %v44, %v46
    %v54 = vsel %vm51, %v42, %v44
    %v55 = vsel %vm51, %v40, %v42
    %v56 = vsel %vm51, %v38, %v40
    %v57 = vsel %vm51, %v48, %v38
    %s58 = scalar_lea.vmem %s2, 8
    %v59 = vld [vmem:[%s58] sm:$0xff]
    %vm60 = vcmask 23552
    %v62 = vsel %vm60, %v59, 0
    %vm64 = vcmask 1042432
    %v66 = vsel %vm64, %v56, 0
    %v69 = vsel %vm64, %v55, 0
    %v72 = vsel %vm64, %v54, 0
    %v75 = vsel %vm64, %v53, 0
    %v78 = vsel %vm64, %v52, 0
    %v81 = vsel %vm64, %v57, 0
    %83 = vmatprep.subr.mxu0 0.0
    %84 = vmatpush1.msra.mxu0 0.0
    %85 = vmatprep.subr.mxu0 0.0
    %86 = vmatpush1.msra.mxu0 0.0
    %87 = vmatprep.subr.mxu0 0.0
    %88 = vmatpush1.msra.mxu0 0.0
    %89 = vmatprep.subr.mxu0 0.0
    %90 = vmatpush1.msra.mxu0 0.0
    %91 = vmatprep.subr.mxu0 0.0
    %92 = vmatpush1.msra.mxu0 0.0
    %93 = vmatprep.subr.mxu0 0.0
    %94 = vmatpush1.msra.mxu0 0.0
    %95 = vmatprep.subr.mxu0 0.0
    %96 = vmatpush1.msra.mxu0 0.0
    %97 = vmatprep.subr.mxu0 0.0
    %98 = vmatpush1.msra.mxu0 0.0
    %99 = vmatprep.subr.mxu0 0.0
    %100 = vmatpush1.msra.mxu0 0.0
    %101 = vmatprep.subr.mxu0 0.0
    %102 = vmatpush1.msra.mxu0 0.0
    %103 = vmatprep.subr.mxu0 0.0
    %104 = vmatpush1.msra.mxu0 0.0
    %105 = vmatprep.subr.mxu0 0.0
    %106 = vmatpush1.msra.mxu0 0.0
    %107 = vmatprep.subr.mxu0 0.0
    %108 = vmatpush1.msra.mxu0 0.0
    %109 = vmatprep.subr.mxu0 0.0
    %110 = vmatpush1.msra.mxu0 0.0
    %111 = vmatprep.subr.mxu0 0.0
    %112 = vmatpush1.msra.mxu0 0.0
    %113 = vmatprep.subr.mxu0 %v69
    %114 = vmatpush1.msra.mxu0 %v66
    %115 = vmatprep.subr.mxu0 0.0
    %116 = vmatpush2.msra.mxu0 0.0
    %117 = vmatprep.subr.mxu0 0.0
    %118 = vmatpush2.msra.mxu0 0.0
    %119 = vmatprep.subr.mxu0 0.0
    %120 = vmatpush2.msra.mxu0 0.0
    %121 = vmatprep.subr.mxu0 0.0
    %122 = vmatpush2.msra.mxu0 0.0
    %123 = vmatprep.subr.mxu0 0.0
    %124 = vmatpush2.msra.mxu0 0.0
    %125 = vmatprep.subr.mxu0 0.0
    %126 = vmatpush2.msra.mxu0 0.0
    %127 = vmatprep.subr.mxu0 0.0
    %128 = vmatpush2.msra.mxu0 0.0
    %129 = vmatprep.subr.mxu0 0.0
    %130 = vmatpush2.msra.mxu0 0.0
    %131 = vmatprep.subr.mxu0 0.0
    %132 = vmatpush2.msra.mxu0 0.0
    %133 = vmatprep.subr.mxu0 0.0
    %134 = vmatpush2.msra.mxu0 0.0
    %135 = vmatprep.subr.mxu0 0.0
    %136 = vmatpush2.msra.mxu0 0.0
    %137 = vmatprep.subr.mxu0 0.0
    %138 = vmatpush2.msra.mxu0 0.0
    %139 = vmatprep.subr.mxu0 0.0
    %140 = vmatpush2.msra.mxu0 0.0
    %141 = vmatprep.subr.mxu0 0.0
    %142 = vmatpush2.msra.mxu0 0.0
    %143 = vmatprep.subr.mxu0 0.0
    %144 = vmatpush2.msra.mxu0 0.0
    %145 = vmatprep.subr.mxu0 0.0
    %146 = vmatpush2.msra.mxu0 0.0
    %147 = vmatprep.mubr.f32.mxu0 0.0
    %148 = vmatmul.mubr.f32.gmra.mxu0 %v62
    %v149 = vpop.f32.mrf.mxu0
    %v150 = vadd.f32 0.0, %v149
    %v151 = vpop.f32.mrf.mxu0
    %v152 = vadd.f32 0.0, %v151
    %153 = vdwg.mxu0
    %154 = vmatprep.subr.mxu0 0.0
    %155 = vmatpush1.msra.mxu0 0.0
    %156 = vmatprep.subr.mxu0 0.0
    %157 = vmatpush1.msra.mxu0 0.0
    %158 = vmatprep.subr.mxu0 0.0
    %159 = vmatpush1.msra.mxu0 0.0
    %160 = vmatprep.subr.mxu0 0.0
    %161 = vmatpush1.msra.mxu0 0.0
    %162 = vmatprep.subr.mxu0 0.0
    %163 = vmatpush1.msra.mxu0 0.0
    %164 = vmatprep.subr.mxu0 0.0
    %165 = vmatpush1.msra.mxu0 0.0
    %166 = vmatprep.subr.mxu0 0.0
    %167 = vmatpush1.msra.mxu0 0.0
    %168 = vmatprep.subr.mxu0 0.0
    %169 = vmatpush1.msra.mxu0 0.0
    %170 = vmatprep.subr.mxu0 0.0
    %171 = vmatpush1.msra.mxu0 0.0
    %172 = vmatprep.subr.mxu0 0.0
    %173 = vmatpush1.msra.mxu0 0.0
    %174 = vmatprep.subr.mxu0 0.0
    %175 = vmatpush1.msra.mxu0 0.0
    %176 = vmatprep.subr.mxu0 0.0
    %177 = vmatpush1.msra.mxu0 0.0
    %178 = vmatprep.subr.mxu0 0.0
    %179 = vmatpush1.msra.mxu0 0.0
    %180 = vmatprep.subr.mxu0 0.0
    %181 = vmatpush1.msra.mxu0 0.0
    %182 = vmatprep.subr.mxu0 0.0
    %183 = vmatpush1.msra.mxu0 0.0
    %184 = vmatprep.subr.mxu0 %v75
    %185 = vmatpush1.msra.mxu0 %v72
    %186 = vmatprep.subr.mxu0 0.0
    %187 = vmatpush2.msra.mxu0 0.0
    %188 = vmatprep.subr.mxu0 0.0
    %189 = vmatpush2.msra.mxu0 0.0
    %190 = vmatprep.subr.mxu0 0.0
    %191 = vmatpush2.msra.mxu0 0.0
    %192 = vmatprep.subr.mxu0 0.0
    %193 = vmatpush2.msra.mxu0 0.0
    %194 = vmatprep.subr.mxu0 0.0
    %195 = vmatpush2.msra.mxu0 0.0
    %196 = vmatprep.subr.mxu0 0.0
    %197 = vmatpush2.msra.mxu0 0.0
    %198 = vmatprep.subr.mxu0 0.0
    %199 = vmatpush2.msra.mxu0 0.0
    %200 = vmatprep.subr.mxu0 0.0
    %201 = vmatpush2.msra.mxu0 0.0
    %202 = vmatprep.subr.mxu0 0.0
    %203 = vmatpush2.msra.mxu0 0.0
    %204 = vmatprep.subr.mxu0 0.0
    %205 = vmatpush2.msra.mxu0 0.0
    %206 = vmatprep.subr.mxu0 0.0
    %207 = vmatpush2.msra.mxu0 0.0
    %208 = vmatprep.subr.mxu0 0.0
    %209 = vmatpush2.msra.mxu0 0.0
    %210 = vmatprep.subr.mxu0 0.0
    %211 = vmatpush2.msra.mxu0 0.0
    %212 = vmatprep.subr.mxu0 0.0
    %213 = vmatpush2.msra.mxu0 0.0
    %214 = vmatprep.subr.mxu0 0.0
    %215 = vmatpush2.msra.mxu0 0.0
    %216 = vmatprep.subr.mxu0 0.0
    %217 = vmatpush2.msra.mxu0 0.0
    %218 = vmatprep.mubr.f32.mxu0 0.0
    %219 = vmatmul.mubr.f32.gmra.mxu0 %v62
    %v220 = vpop.f32.mrf.mxu0
    %v221 = vadd.f32 0.0, %v220
    %v222 = vpop.f32.mrf.mxu0
    %v223 = vadd.f32 0.0, %v222
    %224 = vdwg.mxu0
    %225 = vmatprep.subr.mxu0 0.0
    %226 = vmatpush1.msra.mxu0 0.0
    %227 = vmatprep.subr.mxu0 0.0
    %228 = vmatpush1.msra.mxu0 0.0
    %229 = vmatprep.subr.mxu0 0.0
    %230 = vmatpush1.msra.mxu0 0.0
    %231 = vmatprep.subr.mxu0 0.0
    %232 = vmatpush1.msra.mxu0 0.0
    %233 = vmatprep.subr.mxu0 0.0
    %234 = vmatpush1.msra.mxu0 0.0
    %235 = vmatprep.subr.mxu0 0.0
    %236 = vmatpush1.msra.mxu0 0.0
    %237 = vmatprep.subr.mxu0 0.0
    %238 = vmatpush1.msra.mxu0 0.0
    %239 = vmatprep.subr.mxu0 0.0
    %240 = vmatpush1.msra.mxu0 0.0
    %241 = vmatprep.subr.mxu0 0.0
    %242 = vmatpush1.msra.mxu0 0.0
    %243 = vmatprep.subr.mxu0 0.0
    %244 = vmatpush1.msra.mxu0 0.0
    %245 = vmatprep.subr.mxu0 0.0
    %246 = vmatpush1.msra.mxu0 0.0
    %247 = vmatprep.subr.mxu0 0.0
    %248 = vmatpush1.msra.mxu0 0.0
    %249 = vmatprep.subr.mxu0 0.0
    %250 = vmatpush1.msra.mxu0 0.0
    %251 = vmatprep.subr.mxu0 0.0
    %252 = vmatpush1.msra.mxu0 0.0
    %253 = vmatprep.subr.mxu0 0.0
    %254 = vmatpush1.msra.mxu0 0.0
    %255 = vmatprep.subr.mxu0 %v81
    %256 = vmatpush1.msra.mxu0 %v78
    %257 = vmatprep.subr.mxu0 0.0
    %258 = vmatpush2.msra.mxu0 0.0
    %259 = vmatprep.subr.mxu0 0.0
    %260 = vmatpush2.msra.mxu0 0.0
    %261 = vmatprep.subr.mxu0 0.0
    %262 = vmatpush2.msra.mxu0 0.0
    %263 = vmatprep.subr.mxu0 0.0
    %264 = vmatpush2.msra.mxu0 0.0
    %265 = vmatprep.subr.mxu0 0.0
    %266 = vmatpush2.msra.mxu0 0.0
    %267 = vmatprep.subr.mxu0 0.0
    %268 = vmatpush2.msra.mxu0 0.0
    %269 = vmatprep.subr.mxu0 0.0
    %270 = vmatpush2.msra.mxu0 0.0
    %271 = vmatprep.subr.mxu0 0.0
    %272 = vmatpush2.msra.mxu0 0.0
    %273 = vmatprep.subr.mxu0 0.0
    %274 = vmatpush2.msra.mxu0 0.0
    %275 = vmatprep.subr.mxu0 0.0
    %276 = vmatpush2.msra.mxu0 0.0
    %277 = vmatprep.subr.mxu0 0.0
    %278 = vmatpush2.msra.mxu0 0.0
    %279 = vmatprep.subr.mxu0 0.0
    %280 = vmatpush2.msra.mxu0 0.0
    %281 = vmatprep.subr.mxu0 0.0
    %282 = vmatpush2.msra.mxu0 0.0
    %283 = vmatprep.subr.mxu0 0.0
    %284 = vmatpush2.msra.mxu0 0.0
    %285 = vmatprep.subr.mxu0 0.0
    %286 = vmatpush2.msra.mxu0 0.0
    %287 = vmatprep.subr.mxu0 0.0
    %288 = vmatpush2.msra.mxu0 0.0
    %289 = vmatprep.mubr.f32.mxu0 0.0
    %290 = vmatmul.mubr.f32.gmra.mxu0 %v62
    %v291 = vpop.f32.mrf.mxu0
    %v292 = vadd.f32 0.0, %v291
    %v293 = vpop.f32.mrf.mxu0
    %v294 = vadd.f32 0.0, %v293
    %295 = vdwg.mxu0
    %v297 = vsel %vm60, %v27, 0
    %v299 = vsel %vm64, %v24, 0
    %v301 = vsel %vm64, %v31, 0
    %v303 = vsel %vm64, %v25, 0
    %v305 = vsel %vm64, %v32, 0
    %v307 = vsel %vm64, %v26, 0
    %v309 = vsel %vm64, %v33, 0
    %311 = vmatprep.subr.mxu0 0.0
    %312 = vmatpush1.msra.mxu0 0.0
    %313 = vmatprep.subr.mxu0 0.0
    %314 = vmatpush1.msra.mxu0 0.0
    %315 = vmatprep.subr.mxu0 0.0
    %316 = vmatpush1.msra.mxu0 0.0
    %317 = vmatprep.subr.mxu0 0.0
    %318 = vmatpush1.msra.mxu0 0.0
    %319 = vmatprep.subr.mxu0 0.0
    %320 = vmatpush1.msra.mxu0 0.0
    %321 = vmatprep.subr.mxu0 0.0
    %322 = vmatpush1.msra.mxu0 0.0
    %323 = vmatprep.subr.mxu0 0.0
    %324 = vmatpush1.msra.mxu0 0.0
    %325 = vmatprep.subr.mxu0 0.0
    %326 = vmatpush1.msra.mxu0 0.0
    %327 = vmatprep.subr.mxu0 0.0
    %328 = vmatpush1.msra.mxu0 0.0
    %329 = vmatprep.subr.mxu0 0.0
    %330 = vmatpush1.msra.mxu0 0.0
    %331 = vmatprep.subr.mxu0 0.0
    %332 = vmatpush1.msra.mxu0 0.0
    %333 = vmatprep.subr.mxu0 0.0
    %334 = vmatpush1.msra.mxu0 0.0
    %335 = vmatprep.subr.mxu0 0.0
    %336 = vmatpush1.msra.mxu0 0.0
    %337 = vmatprep.subr.mxu0 0.0
    %338 = vmatpush1.msra.mxu0 0.0
    %339 = vmatprep.subr.mxu0 0.0
    %340 = vmatpush1.msra.mxu0 0.0
    %341 = vmatprep.subr.mxu0 %v301
    %342 = vmatpush1.msra.mxu0 %v299
    %343 = vmatprep.subr.mxu0 0.0
    %344 = vmatpush2.msra.mxu0 0.0
    %345 = vmatprep.subr.mxu0 0.0
    %346 = vmatpush2.msra.mxu0 0.0
    %347 = vmatprep.subr.mxu0 0.0
    %348 = vmatpush2.msra.mxu0 0.0
    %349 = vmatprep.subr.mxu0 0.0
    %350 = vmatpush2.msra.mxu0 0.0
    %351 = vmatprep.subr.mxu0 0.0
    %352 = vmatpush2.msra.mxu0 0.0
    %353 = vmatprep.subr.mxu0 0.0
    %354 = vmatpush2.msra.mxu0 0.0
    %355 = vmatprep.subr.mxu0 0.0
    %356 = vmatpush2.msra.mxu0 0.0
    %357 = vmatprep.subr.mxu0 0.0
    %358 = vmatpush2.msra.mxu0 0.0
    %359 = vmatprep.subr.mxu0 0.0
    %360 = vmatpush2.msra.mxu0 0.0
    %361 = vmatprep.subr.mxu0 0.0
    %362 = vmatpush2.msra.mxu0 0.0
    %363 = vmatprep.subr.mxu0 0.0
    %364 = vmatpush2.msra.mxu0 0.0
    %365 = vmatprep.subr.mxu0 0.0
    %366 = vmatpush2.msra.mxu0 0.0
    %367 = vmatprep.subr.mxu0 0.0
    %368 = vmatpush2.msra.mxu0 0.0
    %369 = vmatprep.subr.mxu0 0.0
    %370 = vmatpush2.msra.mxu0 0.0
    %371 = vmatprep.subr.mxu0 0.0
    %372 = vmatpush2.msra.mxu0 0.0
    %373 = vmatprep.subr.mxu0 0.0
    %374 = vmatpush2.msra.mxu0 0.0
    %375 = vmatprep.mubr.f32.mxu0 0.0
    %376 = vmatmul.mubr.f32.gmra.mxu0 %v297
    %v377 = vpop.f32.mrf.mxu0
    %v378 = vadd.f32 %v150, %v377
    %v379 = vpop.f32.mrf.mxu0
    %v380 = vadd.f32 %v152, %v379
    %381 = vdwg.mxu0
    %382 = vmatprep.subr.mxu0 0.0
    %383 = vmatpush1.msra.mxu0 0.0
    %384 = vmatprep.subr.mxu0 0.0
    %385 = vmatpush1.msra.mxu0 0.0
    %386 = vmatprep.subr.mxu0 0.0
    %387 = vmatpush1.msra.mxu0 0.0
    %388 = vmatprep.subr.mxu0 0.0
    %389 = vmatpush1.msra.mxu0 0.0
    %390 = vmatprep.subr.mxu0 0.0
    %391 = vmatpush1.msra.mxu0 0.0
    %392 = vmatprep.subr.mxu0 0.0
    %393 = vmatpush1.msra.mxu0 0.0
    %394 = vmatprep.subr.mxu0 0.0
    %395 = vmatpush1.msra.mxu0 0.0
    %396 = vmatprep.subr.mxu0 0.0
    %397 = vmatpush1.msra.mxu0 0.0
    %398 = vmatprep.subr.mxu0 0.0
    %399 = vmatpush1.msra.mxu0 0.0
    %400 = vmatprep.subr.mxu0 0.0
    %401 = vmatpush1.msra.mxu0 0.0
    %402 = vmatprep.subr.mxu0 0.0
    %403 = vmatpush1.msra.mxu0 0.0
    %404 = vmatprep.subr.mxu0 0.0
    %405 = vmatpush1.msra.mxu0 0.0
    %406 = vmatprep.subr.mxu0 0.0
    %407 = vmatpush1.msra.mxu0 0.0
    %408 = vmatprep.subr.mxu0 0.0
    %409 = vmatpush1.msra.mxu0 0.0
    %410 = vmatprep.subr.mxu0 0.0
    %411 = vmatpush1.msra.mxu0 0.0
    %412 = vmatprep.subr.mxu0 %v305
    %413 = vmatpush1.msra.mxu0 %v303
    %414 = vmatprep.subr.mxu0 0.0
    %415 = vmatpush2.msra.mxu0 0.0
    %416 = vmatprep.subr.mxu0 0.0
    %417 = vmatpush2.msra.mxu0 0.0
    %418 = vmatprep.subr.mxu0 0.0
    %419 = vmatpush2.msra.mxu0 0.0
    %420 = vmatprep.subr.mxu0 0.0
    %421 = vmatpush2.msra.mxu0 0.0
    %422 = vmatprep.subr.mxu0 0.0
    %423 = vmatpush2.msra.mxu0 0.0
    %424 = vmatprep.subr.mxu0 0.0
    %425 = vmatpush2.msra.mxu0 0.0
    %426 = vmatprep.subr.mxu0 0.0
    %427 = vmatpush2.msra.mxu0 0.0
    %428 = vmatprep.subr.mxu0 0.0
    %429 = vmatpush2.msra.mxu0 0.0
    %430 = vmatprep.subr.mxu0 0.0
    %431 = vmatpush2.msra.mxu0 0.0
    %432 = vmatprep.subr.mxu0 0.0
    %433 = vmatpush2.msra.mxu0 0.0
    %434 = vmatprep.subr.mxu0 0.0
    %435 = vmatpush2.msra.mxu0 0.0
    %436 = vmatprep.subr.mxu0 0.0
    %437 = vmatpush2.msra.mxu0 0.0
    %438 = vmatprep.subr.mxu0 0.0
    %439 = vmatpush2.msra.mxu0 0.0
    %440 = vmatprep.subr.mxu0 0.0
    %441 = vmatpush2.msra.mxu0 0.0
    %442 = vmatprep.subr.mxu0 0.0
    %443 = vmatpush2.msra.mxu0 0.0
    %444 = vmatprep.subr.mxu0 0.0
    %445 = vmatpush2.msra.mxu0 0.0
    %446 = vmatprep.mubr.f32.mxu0 0.0
    %447 = vmatmul.mubr.f32.gmra.mxu0 %v297
    %v448 = vpop.f32.mrf.mxu0
    %v449 = vadd.f32 %v221, %v448
    %v450 = vpop.f32.mrf.mxu0
    %v451 = vadd.f32 %v223, %v450
    %452 = vdwg.mxu0
    %453 = vmatprep.subr.mxu0 0.0
    %454 = vmatpush1.msra.mxu0 0.0
    %455 = vmatprep.subr.mxu0 0.0
    %456 = vmatpush1.msra.mxu0 0.0
    %457 = vmatprep.subr.mxu0 0.0
    %458 = vmatpush1.msra.mxu0 0.0
    %459 = vmatprep.subr.mxu0 0.0
    %460 = vmatpush1.msra.mxu0 0.0
    %461 = vmatprep.subr.mxu0 0.0
    %462 = vmatpush1.msra.mxu0 0.0
    %463 = vmatprep.subr.mxu0 0.0
    %464 = vmatpush1.msra.mxu0 0.0
    %465 = vmatprep.subr.mxu0 0.0
    %466 = vmatpush1.msra.mxu0 0.0
    %467 = vmatprep.subr.mxu0 0.0
    %468 = vmatpush1.msra.mxu0 0.0
    %469 = vmatprep.subr.mxu0 0.0
    %470 = vmatpush1.msra.mxu0 0.0
    %471 = vmatprep.subr.mxu0 0.0
    %472 = vmatpush1.msra.mxu0 0.0
    %473 = vmatprep.subr.mxu0 0.0
    %474 = vmatpush1.msra.mxu0 0.0
    %475 = vmatprep.subr.mxu0 0.0
    %476 = vmatpush1.msra.mxu0 0.0
    %477 = vmatprep.subr.mxu0 0.0
    %478 = vmatpush1.msra.mxu0 0.0
    %479 = vmatprep.subr.mxu0 0.0
    %480 = vmatpush1.msra.mxu0 0.0
    %481 = vmatprep.subr.mxu0 0.0
    %482 = vmatpush1.msra.mxu0 0.0
    %483 = vmatprep.subr.mxu0 %v309
    %484 = vmatpush1.msra.mxu0 %v307
    %485 = vmatprep.subr.mxu0 0.0
    %486 = vmatpush2.msra.mxu0 0.0
    %487 = vmatprep.subr.mxu0 0.0
    %488 = vmatpush2.msra.mxu0 0.0
    %489 = vmatprep.subr.mxu0 0.0
    %490 = vmatpush2.msra.mxu0 0.0
    %491 = vmatprep.subr.mxu0 0.0
    %492 = vmatpush2.msra.mxu0 0.0
    %493 = vmatprep.subr.mxu0 0.0
    %494 = vmatpush2.msra.mxu0 0.0
    %495 = vmatprep.subr.mxu0 0.0
    %496 = vmatpush2.msra.mxu0 0.0
    %497 = vmatprep.subr.mxu0 0.0
    %498 = vmatpush2.msra.mxu0 0.0
    %499 = vmatprep.subr.mxu0 0.0
    %500 = vmatpush2.msra.mxu0 0.0
    %501 = vmatprep.subr.mxu0 0.0
    %502 = vmatpush2.msra.mxu0 0.0
    %503 = vmatprep.subr.mxu0 0.0
    %504 = vmatpush2.msra.mxu0 0.0
    %505 = vmatprep.subr.mxu0 0.0
    %506 = vmatpush2.msra.mxu0 0.0
    %507 = vmatprep.subr.mxu0 0.0
    %508 = vmatpush2.msra.mxu0 0.0
    %509 = vmatprep.subr.mxu0 0.0
    %510 = vmatpush2.msra.mxu0 0.0
    %511 = vmatprep.subr.mxu0 0.0
    %512 = vmatpush2.msra.mxu0 0.0
    %513 = vmatprep.subr.mxu0 0.0
    %514 = vmatpush2.msra.mxu0 0.0
    %515 = vmatprep.subr.mxu0 0.0
    %516 = vmatpush2.msra.mxu0 0.0
    %517 = vmatprep.mubr.f32.mxu0 0.0
    %518 = vmatmul.mubr.f32.gmra.mxu0 %v297
    %v519 = vpop.f32.mrf.mxu0
    %v520 = vadd.f32 %v292, %v519
    %v521 = vpop.f32.mrf.mxu0
    %v522 = vadd.f32 %v294, %v521
    %523 = vdwg.mxu0
    %524 = vrot.lane.b32.xlu0 %v24, 126
    %v525 = vpop.permute.xlu0 %524
    %526 = vrot.lane.b32.xlu0 %v31, 126
    %v527 = vpop.permute.xlu0 %526
    %528 = vrot.lane.b32.xlu0 %v25, 126
    %v529 = vpop.permute.xlu0 %528
    %530 = vrot.lane.b32.xlu0 %v32, 126
    %v531 = vpop.permute.xlu0 %530
    %532 = vrot.lane.b32.xlu0 %v26, 126
    %v533 = vpop.permute.xlu0 %532
    %534 = vrot.lane.b32.xlu0 %v33, 126
    %v535 = vpop.permute.xlu0 %534
    %vm536 = vcmp.lt.s32.totalorder %v50, 126
    %v537 = vsel %vm536, %v533, %v535
    %v538 = vsel %vm536, %v531, %v533
    %v539 = vsel %vm536, %v529, %v531
    %v540 = vsel %vm536, %v527, %v529
    %v541 = vsel %vm536, %v525, %v527
    %v542 = vsel %vm536, %v535, %v525
    %s543 = scalar_lea.vmem %s2, 16
    %v544 = vld [vmem:[%s543] sm:$0xff]
    %v546 = vsel %vm60, %v544, 0
    %v549 = vsel %vm64, %v541, 0
    %v552 = vsel %vm64, %v540, 0
    %v555 = vsel %vm64, %v539, 0
    %v558 = vsel %vm64, %v538, 0
    %v561 = vsel %vm64, %v537, 0
    %v564 = vsel %vm64, %v542, 0
    %566 = vmatprep.subr.mxu0 0.0
    %567 = vmatpush1.msra.mxu0 0.0
    %568 = vmatprep.subr.mxu0 0.0
    %569 = vmatpush1.msra.mxu0 0.0
    %570 = vmatprep.subr.mxu0 0.0
    %571 = vmatpush1.msra.mxu0 0.0
    %572 = vmatprep.subr.mxu0 0.0
    %573 = vmatpush1.msra.mxu0 0.0
    %574 = vmatprep.subr.mxu0 0.0
    %575 = vmatpush1.msra.mxu0 0.0
    %576 = vmatprep.subr.mxu0 0.0
    %577 = vmatpush1.msra.mxu0 0.0
    %578 = vmatprep.subr.mxu0 0.0
    %579 = vmatpush1.msra.mxu0 0.0
    %580 = vmatprep.subr.mxu0 0.0
    %581 = vmatpush1.msra.mxu0 0.0
    %582 = vmatprep.subr.mxu0 0.0
    %583 = vmatpush1.msra.mxu0 0.0
    %584 = vmatprep.subr.mxu0 0.0
    %585 = vmatpush1.msra.mxu0 0.0
    %586 = vmatprep.subr.mxu0 0.0
    %587 = vmatpush1.msra.mxu0 0.0
    %588 = vmatprep.subr.mxu0 0.0
    %589 = vmatpush1.msra.mxu0 0.0
    %590 = vmatprep.subr.mxu0 0.0
    %591 = vmatpush1.msra.mxu0 0.0
    %592 = vmatprep.subr.mxu0 0.0
    %593 = vmatpush1.msra.mxu0 0.0
    %594 = vmatprep.subr.mxu0 0.0
    %595 = vmatpush1.msra.mxu0 0.0
    %596 = vmatprep.subr.mxu0 %v552
    %597 = vmatpush1.msra.mxu0 %v549
    %598 = vmatprep.subr.mxu0 0.0
    %599 = vmatpush2.msra.mxu0 0.0
    %600 = vmatprep.subr.mxu0 0.0
    %601 = vmatpush2.msra.mxu0 0.0
    %602 = vmatprep.subr.mxu0 0.0
    %603 = vmatpush2.msra.mxu0 0.0
    %604 = vmatprep.subr.mxu0 0.0
    %605 = vmatpush2.msra.mxu0 0.0
    %606 = vmatprep.subr.mxu0 0.0
    %607 = vmatpush2.msra.mxu0 0.0
    %608 = vmatprep.subr.mxu0 0.0
    %609 = vmatpush2.msra.mxu0 0.0
    %610 = vmatprep.subr.mxu0 0.0
    %611 = vmatpush2.msra.mxu0 0.0
    %612 = vmatprep.subr.mxu0 0.0
    %613 = vmatpush2.msra.mxu0 0.0
    %614 = vmatprep.subr.mxu0 0.0
    %615 = vmatpush2.msra.mxu0 0.0
    %616 = vmatprep.subr.mxu0 0.0
    %617 = vmatpush2.msra.mxu0 0.0
    %618 = vmatprep.subr.mxu0 0.0
    %619 = vmatpush2.msra.mxu0 0.0
    %620 = vmatprep.subr.mxu0 0.0
    %621 = vmatpush2.msra.mxu0 0.0
    %622 = vmatprep.subr.mxu0 0.0
    %623 = vmatpush2.msra.mxu0 0.0
    %624 = vmatprep.subr.mxu0 0.0
    %625 = vmatpush2.msra.mxu0 0.0
    %626 = vmatprep.subr.mxu0 0.0
    %627 = vmatpush2.msra.mxu0 0.0
    %628 = vmatprep.subr.mxu0 0.0
    %629 = vmatpush2.msra.mxu0 0.0
    %630 = vmatprep.mubr.f32.mxu0 0.0
    %631 = vmatmul.mubr.f32.gmra.mxu0 %v546
    %v632 = vpop.f32.mrf.mxu0
    %v633 = vadd.f32 0.0, %v632
    %v634 = vpop.f32.mrf.mxu0
    %v635 = vadd.f32 0.0, %v634
    %636 = vdwg.mxu0
    %637 = vmatprep.subr.mxu0 0.0
    %638 = vmatpush1.msra.mxu0 0.0
    %639 = vmatprep.subr.mxu0 0.0
    %640 = vmatpush1.msra.mxu0 0.0
    %641 = vmatprep.subr.mxu0 0.0
    %642 = vmatpush1.msra.mxu0 0.0
    %643 = vmatprep.subr.mxu0 0.0
    %644 = vmatpush1.msra.mxu0 0.0
    %645 = vmatprep.subr.mxu0 0.0
    %646 = vmatpush1.msra.mxu0 0.0
    %647 = vmatprep.subr.mxu0 0.0
    %648 = vmatpush1.msra.mxu0 0.0
    %649 = vmatprep.subr.mxu0 0.0
    %650 = vmatpush1.msra.mxu0 0.0
    %651 = vmatprep.subr.mxu0 0.0
    %652 = vmatpush1.msra.mxu0 0.0
    %653 = vmatprep.subr.mxu0 0.0
    %654 = vmatpush1.msra.mxu0 0.0
    %655 = vmatprep.subr.mxu0 0.0
    %656 = vmatpush1.msra.mxu0 0.0
    %657 = vmatprep.subr.mxu0 0.0
    %658 = vmatpush1.msra.mxu0 0.0
    %659 = vmatprep.subr.mxu0 0.0
    %660 = vmatpush1.msra.mxu0 0.0
    %661 = vmatprep.subr.mxu0 0.0
    %662 = vmatpush1.msra.mxu0 0.0
    %663 = vmatprep.subr.mxu0 0.0
    %664 = vmatpush1.msra.mxu0 0.0
    %665 = vmatprep.subr.mxu0 0.0
    %666 = vmatpush1.msra.mxu0 0.0
    %667 = vmatprep.subr.mxu0 %v558
    %668 = vmatpush1.msra.mxu0 %v555
    %669 = vmatprep.subr.mxu0 0.0
    %670 = vmatpush2.msra.mxu0 0.0
    %671 = vmatprep.subr.mxu0 0.0
    %672 = vmatpush2.msra.mxu0 0.0
    %673 = vmatprep.subr.mxu0 0.0
    %674 = vmatpush2.msra.mxu0 0.0
    %675 = vmatprep.subr.mxu0 0.0
    %676 = vmatpush2.msra.mxu0 0.0
    %677 = vmatprep.subr.mxu0 0.0
    %678 = vmatpush2.msra.mxu0 0.0
    %679 = vmatprep.subr.mxu0 0.0
    %680 = vmatpush2.msra.mxu0 0.0
    %681 = vmatprep.subr.mxu0 0.0
    %682 = vmatpush2.msra.mxu0 0.0
    %683 = vmatprep.subr.mxu0 0.0
    %684 = vmatpush2.msra.mxu0 0.0
    %685 = vmatprep.subr.mxu0 0.0
    %686 = vmatpush2.msra.mxu0 0.0
    %687 = vmatprep.subr.mxu0 0.0
    %688 = vmatpush2.msra.mxu0 0.0
    %689 = vmatprep.subr.mxu0 0.0
    %690 = vmatpush2.msra.mxu0 0.0
    %691 = vmatprep.subr.mxu0 0.0
    %692 = vmatpush2.msra.mxu0 0.0
    %693 = vmatprep.subr.mxu0 0.0
    %694 = vmatpush2.msra.mxu0 0.0
    %695 = vmatprep.subr.mxu0 0.0
    %696 = vmatpush2.msra.mxu0 0.0
    %697 = vmatprep.subr.mxu0 0.0
    %698 = vmatpush2.msra.mxu0 0.0
    %699 = vmatprep.subr.mxu0 0.0
    %700 = vmatpush2.msra.mxu0 0.0
    %701 = vmatprep.mubr.f32.mxu0 0.0
    %702 = vmatmul.mubr.f32.gmra.mxu0 %v546
    %v703 = vpop.f32.mrf.mxu0
    %v704 = vadd.f32 0.0, %v703
    %v705 = vpop.f32.mrf.mxu0
    %v706 = vadd.f32 0.0, %v705
    %707 = vdwg.mxu0
    %708 = vmatprep.subr.mxu0 0.0
    %709 = vmatpush1.msra.mxu0 0.0
    %710 = vmatprep.subr.mxu0 0.0
    %711 = vmatpush1.msra.mxu0 0.0
    %712 = vmatprep.subr.mxu0 0.0
    %713 = vmatpush1.msra.mxu0 0.0
    %714 = vmatprep.subr.mxu0 0.0
    %715 = vmatpush1.msra.mxu0 0.0
    %716 = vmatprep.subr.mxu0 0.0
    %717 = vmatpush1.msra.mxu0 0.0
    %718 = vmatprep.subr.mxu0 0.0
    %719 = vmatpush1.msra.mxu0 0.0
    %720 = vmatprep.subr.mxu0 0.0
    %721 = vmatpush1.msra.mxu0 0.0
    %722 = vmatprep.subr.mxu0 0.0
    %723 = vmatpush1.msra.mxu0 0.0
    %724 = vmatprep.subr.mxu0 0.0
    %725 = vmatpush1.msra.mxu0 0.0
    %726 = vmatprep.subr.mxu0 0.0
    %727 = vmatpush1.msra.mxu0 0.0
    %728 = vmatprep.subr.mxu0 0.0
    %729 = vmatpush1.msra.mxu0 0.0
    %730 = vmatprep.subr.mxu0 0.0
    %731 = vmatpush1.msra.mxu0 0.0
    %732 = vmatprep.subr.mxu0 0.0
    %733 = vmatpush1.msra.mxu0 0.0
    %734 = vmatprep.subr.mxu0 0.0
    %735 = vmatpush1.msra.mxu0 0.0
    %736 = vmatprep.subr.mxu0 0.0
    %737 = vmatpush1.msra.mxu0 0.0
    %738 = vmatprep.subr.mxu0 %v564
    %739 = vmatpush1.msra.mxu0 %v561
    %740 = vmatprep.subr.mxu0 0.0
    %741 = vmatpush2.msra.mxu0 0.0
    %742 = vmatprep.subr.mxu0 0.0
    %743 = vmatpush2.msra.mxu0 0.0
    %744 = vmatprep.subr.mxu0 0.0
    %745 = vmatpush2.msra.mxu0 0.0
    %746 = vmatprep.subr.mxu0 0.0
    %747 = vmatpush2.msra.mxu0 0.0
    %748 = vmatprep.subr.mxu0 0.0
    %749 = vmatpush2.msra.mxu0 0.0
    %750 = vmatprep.subr.mxu0 0.0
    %751 = vmatpush2.msra.mxu0 0.0
    %752 = vmatprep.subr.mxu0 0.0
    %753 = vmatpush2.msra.mxu0 0.0
    %754 = vmatprep.subr.mxu0 0.0
    %755 = vmatpush2.msra.mxu0 0.0
    %756 = vmatprep.subr.mxu0 0.0
    %757 = vmatpush2.msra.mxu0 0.0
    %758 = vmatprep.subr.mxu0 0.0
    %759 = vmatpush2.msra.mxu0 0.0
    %760 = vmatprep.subr.mxu0 0.0
    %761 = vmatpush2.msra.mxu0 0.0
    %762 = vmatprep.subr.mxu0 0.0
    %763 = vmatpush2.msra.mxu0 0.0
    %764 = vmatprep.subr.mxu0 0.0
    %765 = vmatpush2.msra.mxu0 0.0
    %766 = vmatprep.subr.mxu0 0.0
    %767 = vmatpush2.msra.mxu0 0.0
    %768 = vmatprep.subr.mxu0 0.0
    %769 = vmatpush2.msra.mxu0 0.0
    %770 = vmatprep.subr.mxu0 0.0
    %771 = vmatpush2.msra.mxu0 0.0
    %772 = vmatprep.mubr.f32.mxu0 0.0
    %773 = vmatmul.mubr.f32.gmra.mxu0 %v546
    %v774 = vpop.f32.mrf.mxu0
    %v775 = vadd.f32 0.0, %v774
    %v776 = vpop.f32.mrf.mxu0
    %v777 = vadd.f32 0.0, %v776
    %778 = vdwg.mxu0
    %v779 = vadd.f32 %v378, %v633
    %v780 = vadd.f32 %v380, %v635
    %v781 = vadd.f32 %v449, %v704
    %v782 = vadd.f32 %v451, %v706
    %v783 = vadd.f32 %v520, %v775
    %v784 = vadd.f32 %v522, %v777
    %785 = vrot.lane.b32.xlu0 %v24, 110
    %v786 = vpop.permute.xlu0 %785
    %787 = vrot.lane.b32.xlu0 %v31, 110
    %v788 = vpop.permute.xlu0 %787
    %789 = vrot.lane.b32.xlu0 %v25, 110
    %v790 = vpop.permute.xlu0 %789
    %791 = vrot.lane.b32.xlu0 %v32, 110
    %v792 = vpop.permute.xlu0 %791
    %793 = vrot.lane.b32.xlu0 %v26, 110
    %v794 = vpop.permute.xlu0 %793
    %795 = vrot.lane.b32.xlu0 %v33, 110
    %v796 = vpop.permute.xlu0 %795
    %vm797 = vcmp.lt.s32.totalorder %v50, 110
    %v798 = vsel %vm797, %v794, %v796
    %v799 = vsel %vm797, %v792, %v794
    %v800 = vsel %vm797, %v790, %v792
    %v801 = vsel %vm797, %v788, %v790
    %v802 = vsel %vm797, %v786, %v788
    %v803 = vsel %vm797, %v796, %v786
    %s804 = scalar_lea.vmem %s2, 24
    %v805 = vld [vmem:[%s804] sm:$0xff]
    %v807 = vsel %vm60, %v805, 0
    %v810 = vsel %vm64, %v802, 0
    %v813 = vsel %vm64, %v801, 0
    %v816 = vsel %vm64, %v800, 0
    %v819 = vsel %vm64, %v799, 0
    %v822 = vsel %vm64, %v798, 0
    %v825 = vsel %vm64, %v803, 0
    %827 = vmatprep.subr.mxu0 0.0
    %828 = vmatpush1.msra.mxu0 0.0
    %829 = vmatprep.subr.mxu0 0.0
    %830 = vmatpush1.msra.mxu0 0.0
    %831 = vmatprep.subr.mxu0 0.0
    %832 = vmatpush1.msra.mxu0 0.0
    %833 = vmatprep.subr.mxu0 0.0
    %834 = vmatpush1.msra.mxu0 0.0
    %835 = vmatprep.subr.mxu0 0.0
    %836 = vmatpush1.msra.mxu0 0.0
    %837 = vmatprep.subr.mxu0 0.0
    %838 = vmatpush1.msra.mxu0 0.0
    %839 = vmatprep.subr.mxu0 0.0
    %840 = vmatpush1.msra.mxu0 0.0
    %841 = vmatprep.subr.mxu0 0.0
    %842 = vmatpush1.msra.mxu0 0.0
    %843 = vmatprep.subr.mxu0 0.0
    %844 = vmatpush1.msra.mxu0 0.0
    %845 = vmatprep.subr.mxu0 0.0
    %846 = vmatpush1.msra.mxu0 0.0
    %847 = vmatprep.subr.mxu0 0.0
    %848 = vmatpush1.msra.mxu0 0.0
    %849 = vmatprep.subr.mxu0 0.0
    %850 = vmatpush1.msra.mxu0 0.0
    %851 = vmatprep.subr.mxu0 0.0
    %852 = vmatpush1.msra.mxu0 0.0
    %853 = vmatprep.subr.mxu0 0.0
    %854 = vmatpush1.msra.mxu0 0.0
    %855 = vmatprep.subr.mxu0 0.0
    %856 = vmatpush1.msra.mxu0 0.0
    %857 = vmatprep.subr.mxu0 %v813
    %858 = vmatpush1.msra.mxu0 %v810
    %859 = vmatprep.subr.mxu0 0.0
    %860 = vmatpush2.msra.mxu0 0.0
    %861 = vmatprep.subr.mxu0 0.0
    %862 = vmatpush2.msra.mxu0 0.0
    %863 = vmatprep.subr.mxu0 0.0
    %864 = vmatpush2.msra.mxu0 0.0
    %865 = vmatprep.subr.mxu0 0.0
    %866 = vmatpush2.msra.mxu0 0.0
    %867 = vmatprep.subr.mxu0 0.0
    %868 = vmatpush2.msra.mxu0 0.0
    %869 = vmatprep.subr.mxu0 0.0
    %870 = vmatpush2.msra.mxu0 0.0
    %871 = vmatprep.subr.mxu0 0.0
    %872 = vmatpush2.msra.mxu0 0.0
    %873 = vmatprep.subr.mxu0 0.0
    %874 = vmatpush2.msra.mxu0 0.0
    %875 = vmatprep.subr.mxu0 0.0
    %876 = vmatpush2.msra.mxu0 0.0
    %877 = vmatprep.subr.mxu0 0.0
    %878 = vmatpush2.msra.mxu0 0.0
    %879 = vmatprep.subr.mxu0 0.0
    %880 = vmatpush2.msra.mxu0 0.0
    %881 = vmatprep.subr.mxu0 0.0
    %882 = vmatpush2.msra.mxu0 0.0
    %883 = vmatprep.subr.mxu0 0.0
    %884 = vmatpush2.msra.mxu0 0.0
    %885 = vmatprep.subr.mxu0 0.0
    %886 = vmatpush2.msra.mxu0 0.0
    %887 = vmatprep.subr.mxu0 0.0
    %888 = vmatpush2.msra.mxu0 0.0
    %889 = vmatprep.subr.mxu0 0.0
    %890 = vmatpush2.msra.mxu0 0.0
    %891 = vmatprep.mubr.f32.mxu0 0.0
    %892 = vmatmul.mubr.f32.gmra.mxu0 %v807
    %v893 = vpop.f32.mrf.mxu0
    %v894 = vadd.f32 0.0, %v893
    %v895 = vpop.f32.mrf.mxu0
    %v896 = vadd.f32 0.0, %v895
    %897 = vdwg.mxu0
    %898 = vmatprep.subr.mxu0 0.0
    %899 = vmatpush1.msra.mxu0 0.0
    %900 = vmatprep.subr.mxu0 0.0
    %901 = vmatpush1.msra.mxu0 0.0
    %902 = vmatprep.subr.mxu0 0.0
    %903 = vmatpush1.msra.mxu0 0.0
    %904 = vmatprep.subr.mxu0 0.0
    %905 = vmatpush1.msra.mxu0 0.0
    %906 = vmatprep.subr.mxu0 0.0
    %907 = vmatpush1.msra.mxu0 0.0
    %908 = vmatprep.subr.mxu0 0.0
    %909 = vmatpush1.msra.mxu0 0.0
    %910 = vmatprep.subr.mxu0 0.0
    %911 = vmatpush1.msra.mxu0 0.0
    %912 = vmatprep.subr.mxu0 0.0
    %913 = vmatpush1.msra.mxu0 0.0
    %914 = vmatprep.subr.mxu0 0.0
    %915 = vmatpush1.msra.mxu0 0.0
    %916 = vmatprep.subr.mxu0 0.0
    %917 = vmatpush1.msra.mxu0 0.0
    %918 = vmatprep.subr.mxu0 0.0
    %919 = vmatpush1.msra.mxu0 0.0
    %920 = vmatprep.subr.mxu0 0.0
    %921 = vmatpush1.msra.mxu0 0.0
    %922 = vmatprep.subr.mxu0 0.0
    %923 = vmatpush1.msra.mxu0 0.0
    %924 = vmatprep.subr.mxu0 0.0
    %925 = vmatpush1.msra.mxu0 0.0
    %926 = vmatprep.subr.mxu0 0.0
    %927 = vmatpush1.msra.mxu0 0.0
    %928 = vmatprep.subr.mxu0 %v819
    %929 = vmatpush1.msra.mxu0 %v816
    %930 = vmatprep.subr.mxu0 0.0
    %931 = vmatpush2.msra.mxu0 0.0
    %932 = vmatprep.subr.mxu0 0.0
    %933 = vmatpush2.msra.mxu0 0.0
    %934 = vmatprep.subr.mxu0 0.0
    %935 = vmatpush2.msra.mxu0 0.0
    %936 = vmatprep.subr.mxu0 0.0
    %937 = vmatpush2.msra.mxu0 0.0
    %938 = vmatprep.subr.mxu0 0.0
    %939 = vmatpush2.msra.mxu0 0.0
    %940 = vmatprep.subr.mxu0 0.0
    %941 = vmatpush2.msra.mxu0 0.0
    %942 = vmatprep.subr.mxu0 0.0
    %943 = vmatpush2.msra.mxu0 0.0
    %944 = vmatprep.subr.mxu0 0.0
    %945 = vmatpush2.msra.mxu0 0.0
    %946 = vmatprep.subr.mxu0 0.0
    %947 = vmatpush2.msra.mxu0 0.0
    %948 = vmatprep.subr.mxu0 0.0
    %949 = vmatpush2.msra.mxu0 0.0
    %950 = vmatprep.subr.mxu0 0.0
    %951 = vmatpush2.msra.mxu0 0.0
    %952 = vmatprep.subr.mxu0 0.0
    %953 = vmatpush2.msra.mxu0 0.0
    %954 = vmatprep.subr.mxu0 0.0
    %955 = vmatpush2.msra.mxu0 0.0
    %956 = vmatprep.subr.mxu0 0.0
    %957 = vmatpush2.msra.mxu0 0.0
    %958 = vmatprep.subr.mxu0 0.0
    %959 = vmatpush2.msra.mxu0 0.0
    %960 = vmatprep.subr.mxu0 0.0
    %961 = vmatpush2.msra.mxu0 0.0
    %962 = vmatprep.mubr.f32.mxu0 0.0
    %963 = vmatmul.mubr.f32.gmra.mxu0 %v807
    %v964 = vpop.f32.mrf.mxu0
    %v965 = vadd.f32 0.0, %v964
    %v966 = vpop.f32.mrf.mxu0
    %v967 = vadd.f32 0.0, %v966
    %968 = vdwg.mxu0
    %969 = vmatprep.subr.mxu0 0.0
    %970 = vmatpush1.msra.mxu0 0.0
    %971 = vmatprep.subr.mxu0 0.0
    %972 = vmatpush1.msra.mxu0 0.0
    %973 = vmatprep.subr.mxu0 0.0
    %974 = vmatpush1.msra.mxu0 0.0
    %975 = vmatprep.subr.mxu0 0.0
    %976 = vmatpush1.msra.mxu0 0.0
    %977 = vmatprep.subr.mxu0 0.0
    %978 = vmatpush1.msra.mxu0 0.0
    %979 = vmatprep.subr.mxu0 0.0
    %980 = vmatpush1.msra.mxu0 0.0
    %981 = vmatprep.subr.mxu0 0.0
    %982 = vmatpush1.msra.mxu0 0.0
    %983 = vmatprep.subr.mxu0 0.0
    %984 = vmatpush1.msra.mxu0 0.0
    %985 = vmatprep.subr.mxu0 0.0
    %986 = vmatpush1.msra.mxu0 0.0
    %987 = vmatprep.subr.mxu0 0.0
    %988 = vmatpush1.msra.mxu0 0.0
    %989 = vmatprep.subr.mxu0 0.0
    %990 = vmatpush1.msra.mxu0 0.0
    %991 = vmatprep.subr.mxu0 0.0
    %992 = vmatpush1.msra.mxu0 0.0
    %993 = vmatprep.subr.mxu0 0.0
    %994 = vmatpush1.msra.mxu0 0.0
    %995 = vmatprep.subr.mxu0 0.0
    %996 = vmatpush1.msra.mxu0 0.0
    %997 = vmatprep.subr.mxu0 0.0
    %998 = vmatpush1.msra.mxu0 0.0
    %999 = vmatprep.subr.mxu0 %v825
    %1000 = vmatpush1.msra.mxu0 %v822
    %1001 = vmatprep.subr.mxu0 0.0
    %1002 = vmatpush2.msra.mxu0 0.0
    %1003 = vmatprep.subr.mxu0 0.0
    %1004 = vmatpush2.msra.mxu0 0.0
    %1005 = vmatprep.subr.mxu0 0.0
    %1006 = vmatpush2.msra.mxu0 0.0
    %1007 = vmatprep.subr.mxu0 0.0
    %1008 = vmatpush2.msra.mxu0 0.0
    %1009 = vmatprep.subr.mxu0 0.0
    %1010 = vmatpush2.msra.mxu0 0.0
    %1011 = vmatprep.subr.mxu0 0.0
    %1012 = vmatpush2.msra.mxu0 0.0
    %1013 = vmatprep.subr.mxu0 0.0
    %1014 = vmatpush2.msra.mxu0 0.0
    %1015 = vmatprep.subr.mxu0 0.0
    %1016 = vmatpush2.msra.mxu0 0.0
    %1017 = vmatprep.subr.mxu0 0.0
    %1018 = vmatpush2.msra.mxu0 0.0
    %1019 = vmatprep.subr.mxu0 0.0
    %1020 = vmatpush2.msra.mxu0 0.0
    %1021 = vmatprep.subr.mxu0 0.0
    %1022 = vmatpush2.msra.mxu0 0.0
    %1023 = vmatprep.subr.mxu0 0.0
    %1024 = vmatpush2.msra.mxu0 0.0
    %1025 = vmatprep.subr.mxu0 0.0
    %1026 = vmatpush2.msra.mxu0 0.0
    %1027 = vmatprep.subr.mxu0 0.0
    %1028 = vmatpush2.msra.mxu0 0.0
    %1029 = vmatprep.subr.mxu0 0.0
    %1030 = vmatpush2.msra.mxu0 0.0
    %1031 = vmatprep.subr.mxu0 0.0
    %1032 = vmatpush2.msra.mxu0 0.0
    %1033 = vmatprep.mubr.f32.mxu0 0.0
    %1034 = vmatmul.mubr.f32.gmra.mxu0 %v807
    %v1035 = vpop.f32.mrf.mxu0
    %v1036 = vadd.f32 0.0, %v1035
    %v1037 = vpop.f32.mrf.mxu0
    %v1038 = vadd.f32 0.0, %v1037
    %1039 = vdwg.mxu0
    %v1040 = vadd.f32 %v779, %v894
    %v1041 = vadd.f32 %v780, %v896
    %v1042 = vadd.f32 %v781, %v965
    %v1043 = vadd.f32 %v782, %v967
    %v1044 = vadd.f32 %v783, %v1036
    %v1045 = vadd.f32 %v784, %v1038
    %1046 = vrot.lane.b32.xlu0 %v24, 109
    %v1047 = vpop.permute.xlu0 %1046
    %1048 = vrot.lane.b32.xlu0 %v31, 109
    %v1049 = vpop.permute.xlu0 %1048
    %1050 = vrot.lane.b32.xlu0 %v25, 109
    %v1051 = vpop.permute.xlu0 %1050
    %1052 = vrot.lane.b32.xlu0 %v32, 109
    %v1053 = vpop.permute.xlu0 %1052
    %1054 = vrot.lane.b32.xlu0 %v26, 109
    %v1055 = vpop.permute.xlu0 %1054
    %1056 = vrot.lane.b32.xlu0 %v33, 109
    %v1057 = vpop.permute.xlu0 %1056
    %vm1058 = vcmp.lt.s32.totalorder %v50, 109
    %v1059 = vsel %vm1058, %v1055, %v1057
    %v1060 = vsel %vm1058, %v1053, %v1055
    %v1061 = vsel %vm1058, %v1051, %v1053
    %v1062 = vsel %vm1058, %v1049, %v1051
    %v1063 = vsel %vm1058, %v1047, %v1049
    %v1064 = vsel %vm1058, %v1057, %v1047
    %s1065 = scalar_lea.vmem %s2, 32
    %v1066 = vld [vmem:[%s1065] sm:$0xff]
    %v1068 = vsel %vm60, %v1066, 0
    %v1071 = vsel %vm64, %v1063, 0
    %v1074 = vsel %vm64, %v1062, 0
    %v1077 = vsel %vm64, %v1061, 0
    %v1080 = vsel %vm64, %v1060, 0
    %v1083 = vsel %vm64, %v1059, 0
    %v1086 = vsel %vm64, %v1064, 0
    %1088 = vmatprep.subr.mxu0 0.0
    %1089 = vmatpush1.msra.mxu0 0.0
    %1090 = vmatprep.subr.mxu0 0.0
    %1091 = vmatpush1.msra.mxu0 0.0
    %1092 = vmatprep.subr.mxu0 0.0
    %1093 = vmatpush1.msra.mxu0 0.0
    %1094 = vmatprep.subr.mxu0 0.0
    %1095 = vmatpush1.msra.mxu0 0.0
    %1096 = vmatprep.subr.mxu0 0.0
    %1097 = vmatpush1.msra.mxu0 0.0
    %1098 = vmatprep.subr.mxu0 0.0
    %1099 = vmatpush1.msra.mxu0 0.0
    %1100 = vmatprep.subr.mxu0 0.0
    %1101 = vmatpush1.msra.mxu0 0.0
    %1102 = vmatprep.subr.mxu0 0.0
    %1103 = vmatpush1.msra.mxu0 0.0
    %1104 = vmatprep.subr.mxu0 0.0
    %1105 = vmatpush1.msra.mxu0 0.0
    %1106 = vmatprep.subr.mxu0 0.0
    %1107 = vmatpush1.msra.mxu0 0.0
    %1108 = vmatprep.subr.mxu0 0.0
    %1109 = vmatpush1.msra.mxu0 0.0
    %1110 = vmatprep.subr.mxu0 0.0
    %1111 = vmatpush1.msra.mxu0 0.0
    %1112 = vmatprep.subr.mxu0 0.0
    %1113 = vmatpush1.msra.mxu0 0.0
    %1114 = vmatprep.subr.mxu0 0.0
    %1115 = vmatpush1.msra.mxu0 0.0
    %1116 = vmatprep.subr.mxu0 0.0
    %1117 = vmatpush1.msra.mxu0 0.0
    %1118 = vmatprep.subr.mxu0 %v1074
    %1119 = vmatpush1.msra.mxu0 %v1071
    %1120 = vmatprep.subr.mxu0 0.0
    %1121 = vmatpush2.msra.mxu0 0.0
    %1122 = vmatprep.subr.mxu0 0.0
    %1123 = vmatpush2.msra.mxu0 0.0
    %1124 = vmatprep.subr.mxu0 0.0
    %1125 = vmatpush2.msra.mxu0 0.0
    %1126 = vmatprep.subr.mxu0 0.0
    %1127 = vmatpush2.msra.mxu0 0.0
    %1128 = vmatprep.subr.mxu0 0.0
    %1129 = vmatpush2.msra.mxu0 0.0
    %1130 = vmatprep.subr.mxu0 0.0
    %1131 = vmatpush2.msra.mxu0 0.0
    %1132 = vmatprep.subr.mxu0 0.0
    %1133 = vmatpush2.msra.mxu0 0.0
    %1134 = vmatprep.subr.mxu0 0.0
    %1135 = vmatpush2.msra.mxu0 0.0
    %1136 = vmatprep.subr.mxu0 0.0
    %1137 = vmatpush2.msra.mxu0 0.0
    %1138 = vmatprep.subr.mxu0 0.0
    %1139 = vmatpush2.msra.mxu0 0.0
    %1140 = vmatprep.subr.mxu0 0.0
    %1141 = vmatpush2.msra.mxu0 0.0
    %1142 = vmatprep.subr.mxu0 0.0
    %1143 = vmatpush2.msra.mxu0 0.0
    %1144 = vmatprep.subr.mxu0 0.0
    %1145 = vmatpush2.msra.mxu0 0.0
    %1146 = vmatprep.subr.mxu0 0.0
    %1147 = vmatpush2.msra.mxu0 0.0
    %1148 = vmatprep.subr.mxu0 0.0
    %1149 = vmatpush2.msra.mxu0 0.0
    %1150 = vmatprep.subr.mxu0 0.0
    %1151 = vmatpush2.msra.mxu0 0.0
    %1152 = vmatprep.mubr.f32.mxu0 0.0
    %1153 = vmatmul.mubr.f32.gmra.mxu0 %v1068
    %v1154 = vpop.f32.mrf.mxu0
    %v1155 = vadd.f32 0.0, %v1154
    %v1156 = vpop.f32.mrf.mxu0
    %v1157 = vadd.f32 0.0, %v1156
    %1158 = vdwg.mxu0
    %1159 = vmatprep.subr.mxu0 0.0
    %1160 = vmatpush1.msra.mxu0 0.0
    %1161 = vmatprep.subr.mxu0 0.0
    %1162 = vmatpush1.msra.mxu0 0.0
    %1163 = vmatprep.subr.mxu0 0.0
    %1164 = vmatpush1.msra.mxu0 0.0
    %1165 = vmatprep.subr.mxu0 0.0
    %1166 = vmatpush1.msra.mxu0 0.0
    %1167 = vmatprep.subr.mxu0 0.0
    %1168 = vmatpush1.msra.mxu0 0.0
    %1169 = vmatprep.subr.mxu0 0.0
    %1170 = vmatpush1.msra.mxu0 0.0
    %1171 = vmatprep.subr.mxu0 0.0
    %1172 = vmatpush1.msra.mxu0 0.0
    %1173 = vmatprep.subr.mxu0 0.0
    %1174 = vmatpush1.msra.mxu0 0.0
    %1175 = vmatprep.subr.mxu0 0.0
    %1176 = vmatpush1.msra.mxu0 0.0
    %1177 = vmatprep.subr.mxu0 0.0
    %1178 = vmatpush1.msra.mxu0 0.0
    %1179 = vmatprep.subr.mxu0 0.0
    %1180 = vmatpush1.msra.mxu0 0.0
    %1181 = vmatprep.subr.mxu0 0.0
    %1182 = vmatpush1.msra.mxu0 0.0
    %1183 = vmatprep.subr.mxu0 0.0
    %1184 = vmatpush1.msra.mxu0 0.0
    %1185 = vmatprep.subr.mxu0 0.0
    %1186 = vmatpush1.msra.mxu0 0.0
    %1187 = vmatprep.subr.mxu0 0.0
    %1188 = vmatpush1.msra.mxu0 0.0
    %1189 = vmatprep.subr.mxu0 %v1080
    %1190 = vmatpush1.msra.mxu0 %v1077
    %1191 = vmatprep.subr.mxu0 0.0
    %1192 = vmatpush2.msra.mxu0 0.0
    %1193 = vmatprep.subr.mxu0 0.0
    %1194 = vmatpush2.msra.mxu0 0.0
    %1195 = vmatprep.subr.mxu0 0.0
    %1196 = vmatpush2.msra.mxu0 0.0
    %1197 = vmatprep.subr.mxu0 0.0
    %1198 = vmatpush2.msra.mxu0 0.0
    %1199 = vmatprep.subr.mxu0 0.0
    %1200 = vmatpush2.msra.mxu0 0.0
    %1201 = vmatprep.subr.mxu0 0.0
    %1202 = vmatpush2.msra.mxu0 0.0
    %1203 = vmatprep.subr.mxu0 0.0
    %1204 = vmatpush2.msra.mxu0 0.0
    %1205 = vmatprep.subr.mxu0 0.0
    %1206 = vmatpush2.msra.mxu0 0.0
    %1207 = vmatprep.subr.mxu0 0.0
    %1208 = vmatpush2.msra.mxu0 0.0
    %1209 = vmatprep.subr.mxu0 0.0
    %1210 = vmatpush2.msra.mxu0 0.0
    %1211 = vmatprep.subr.mxu0 0.0
    %1212 = vmatpush2.msra.mxu0 0.0
    %1213 = vmatprep.subr.mxu0 0.0
    %1214 = vmatpush2.msra.mxu0 0.0
    %1215 = vmatprep.subr.mxu0 0.0
    %1216 = vmatpush2.msra.mxu0 0.0
    %1217 = vmatprep.subr.mxu0 0.0
    %1218 = vmatpush2.msra.mxu0 0.0
    %1219 = vmatprep.subr.mxu0 0.0
    %1220 = vmatpush2.msra.mxu0 0.0
    %1221 = vmatprep.subr.mxu0 0.0
    %1222 = vmatpush2.msra.mxu0 0.0
    %1223 = vmatprep.mubr.f32.mxu0 0.0
    %1224 = vmatmul.mubr.f32.gmra.mxu0 %v1068
    %v1225 = vpop.f32.mrf.mxu0
    %v1226 = vadd.f32 0.0, %v1225
    %v1227 = vpop.f32.mrf.mxu0
    %v1228 = vadd.f32 0.0, %v1227
    %1229 = vdwg.mxu0
    %1230 = vmatprep.subr.mxu0 0.0
    %1231 = vmatpush1.msra.mxu0 0.0
    %1232 = vmatprep.subr.mxu0 0.0
    %1233 = vmatpush1.msra.mxu0 0.0
    %1234 = vmatprep.subr.mxu0 0.0
    %1235 = vmatpush1.msra.mxu0 0.0
    %1236 = vmatprep.subr.mxu0 0.0
    %1237 = vmatpush1.msra.mxu0 0.0
    %1238 = vmatprep.subr.mxu0 0.0
    %1239 = vmatpush1.msra.mxu0 0.0
    %1240 = vmatprep.subr.mxu0 0.0
    %1241 = vmatpush1.msra.mxu0 0.0
    %1242 = vmatprep.subr.mxu0 0.0
    %1243 = vmatpush1.msra.mxu0 0.0
    %1244 = vmatprep.subr.mxu0 0.0
    %1245 = vmatpush1.msra.mxu0 0.0
    %1246 = vmatprep.subr.mxu0 0.0
    %1247 = vmatpush1.msra.mxu0 0.0
    %1248 = vmatprep.subr.mxu0 0.0
    %1249 = vmatpush1.msra.mxu0 0.0
    %1250 = vmatprep.subr.mxu0 0.0
    %1251 = vmatpush1.msra.mxu0 0.0
    %1252 = vmatprep.subr.mxu0 0.0
    %1253 = vmatpush1.msra.mxu0 0.0
    %1254 = vmatprep.subr.mxu0 0.0
    %1255 = vmatpush1.msra.mxu0 0.0
    %1256 = vmatprep.subr.mxu0 0.0
    %1257 = vmatpush1.msra.mxu0 0.0
    %1258 = vmatprep.subr.mxu0 0.0
    %1259 = vmatpush1.msra.mxu0 0.0
    %1260 = vmatprep.subr.mxu0 %v1086
    %1261 = vmatpush1.msra.mxu0 %v1083
    %1262 = vmatprep.subr.mxu0 0.0
    %1263 = vmatpush2.msra.mxu0 0.0
    %1264 = vmatprep.subr.mxu0 0.0
    %1265 = vmatpush2.msra.mxu0 0.0
    %1266 = vmatprep.subr.mxu0 0.0
    %1267 = vmatpush2.msra.mxu0 0.0
    %1268 = vmatprep.subr.mxu0 0.0
    %1269 = vmatpush2.msra.mxu0 0.0
    %1270 = vmatprep.subr.mxu0 0.0
    %1271 = vmatpush2.msra.mxu0 0.0
    %1272 = vmatprep.subr.mxu0 0.0
    %1273 = vmatpush2.msra.mxu0 0.0
    %1274 = vmatprep.subr.mxu0 0.0
    %1275 = vmatpush2.msra.mxu0 0.0
    %1276 = vmatprep.subr.mxu0 0.0
    %1277 = vmatpush2.msra.mxu0 0.0
    %1278 = vmatprep.subr.mxu0 0.0
    %1279 = vmatpush2.msra.mxu0 0.0
    %1280 = vmatprep.subr.mxu0 0.0
    %1281 = vmatpush2.msra.mxu0 0.0
    %1282 = vmatprep.subr.mxu0 0.0
    %1283 = vmatpush2.msra.mxu0 0.0
    %1284 = vmatprep.subr.mxu0 0.0
    %1285 = vmatpush2.msra.mxu0 0.0
    %1286 = vmatprep.subr.mxu0 0.0
    %1287 = vmatpush2.msra.mxu0 0.0
    %1288 = vmatprep.subr.mxu0 0.0
    %1289 = vmatpush2.msra.mxu0 0.0
    %1290 = vmatprep.subr.mxu0 0.0
    %1291 = vmatpush2.msra.mxu0 0.0
    %1292 = vmatprep.subr.mxu0 0.0
    %1293 = vmatpush2.msra.mxu0 0.0
    %1294 = vmatprep.mubr.f32.mxu0 0.0
    %1295 = vmatmul.mubr.f32.gmra.mxu0 %v1068
    %v1296 = vpop.f32.mrf.mxu0
    %v1297 = vadd.f32 0.0, %v1296
    %v1298 = vpop.f32.mrf.mxu0
    %v1299 = vadd.f32 0.0, %v1298
    %1300 = vdwg.mxu0
    %v1301 = vadd.f32 %v1040, %v1155
    %v1302 = vadd.f32 %v1041, %v1157
    %v1303 = vadd.f32 %v1042, %v1226
    %v1304 = vadd.f32 %v1043, %v1228
    %v1305 = vadd.f32 %v1044, %v1297
    %v1306 = vadd.f32 %v1045, %v1299
    %1307 = vrot.lane.b32.xlu0 %v24, 108
    %v1308 = vpop.permute.xlu0 %1307
    %1309 = vrot.lane.b32.xlu0 %v31, 108
    %v1310 = vpop.permute.xlu0 %1309
    %1311 = vrot.lane.b32.xlu0 %v25, 108
    %v1312 = vpop.permute.xlu0 %1311
    %1313 = vrot.lane.b32.xlu0 %v32, 108
    %v1314 = vpop.permute.xlu0 %1313
    %1315 = vrot.lane.b32.xlu0 %v26, 108
    %v1316 = vpop.permute.xlu0 %1315
    %1317 = vrot.lane.b32.xlu0 %v33, 108
    %v1318 = vpop.permute.xlu0 %1317
    %vm1319 = vcmp.lt.s32.totalorder %v50, 108
    %v1320 = vsel %vm1319, %v1316, %v1318
    %v1321 = vsel %vm1319, %v1314, %v1316
    %v1322 = vsel %vm1319, %v1312, %v1314
    %v1323 = vsel %vm1319, %v1310, %v1312
    %v1324 = vsel %vm1319, %v1308, %v1310
    %v1325 = vsel %vm1319, %v1318, %v1308
    %s1326 = scalar_lea.vmem %s2, 40
    %v1327 = vld [vmem:[%s1326] sm:$0xff]
    %v1329 = vsel %vm60, %v1327, 0
    %v1332 = vsel %vm64, %v1324, 0
    %v1335 = vsel %vm64, %v1323, 0
    %v1338 = vsel %vm64, %v1322, 0
    %v1341 = vsel %vm64, %v1321, 0
    %v1344 = vsel %vm64, %v1320, 0
    %v1347 = vsel %vm64, %v1325, 0
    %1349 = vmatprep.subr.mxu0 0.0
    %1350 = vmatpush1.msra.mxu0 0.0
    %1351 = vmatprep.subr.mxu0 0.0
    %1352 = vmatpush1.msra.mxu0 0.0
    %1353 = vmatprep.subr.mxu0 0.0
    %1354 = vmatpush1.msra.mxu0 0.0
    %1355 = vmatprep.subr.mxu0 0.0
    %1356 = vmatpush1.msra.mxu0 0.0
    %1357 = vmatprep.subr.mxu0 0.0
    %1358 = vmatpush1.msra.mxu0 0.0
    %1359 = vmatprep.subr.mxu0 0.0
    %1360 = vmatpush1.msra.mxu0 0.0
    %1361 = vmatprep.subr.mxu0 0.0
    %1362 = vmatpush1.msra.mxu0 0.0
    %1363 = vmatprep.subr.mxu0 0.0
    %1364 = vmatpush1.msra.mxu0 0.0
    %1365 = vmatprep.subr.mxu0 0.0
    %1366 = vmatpush1.msra.mxu0 0.0
    %1367 = vmatprep.subr.mxu0 0.0
    %1368 = vmatpush1.msra.mxu0 0.0
    %1369 = vmatprep.subr.mxu0 0.0
    %1370 = vmatpush1.msra.mxu0 0.0
    %1371 = vmatprep.subr.mxu0 0.0
    %1372 = vmatpush1.msra.mxu0 0.0
    %1373 = vmatprep.subr.mxu0 0.0
    %1374 = vmatpush1.msra.mxu0 0.0
    %1375 = vmatprep.subr.mxu0 0.0
    %1376 = vmatpush1.msra.mxu0 0.0
    %1377 = vmatprep.subr.mxu0 0.0
    %1378 = vmatpush1.msra.mxu0 0.0
    %1379 = vmatprep.subr.mxu0 %v1335
    %1380 = vmatpush1.msra.mxu0 %v1332
    %1381 = vmatprep.subr.mxu0 0.0
    %1382 = vmatpush2.msra.mxu0 0.0
    %1383 = vmatprep.subr.mxu0 0.0
    %1384 = vmatpush2.msra.mxu0 0.0
    %1385 = vmatprep.subr.mxu0 0.0
    %1386 = vmatpush2.msra.mxu0 0.0
    %1387 = vmatprep.subr.mxu0 0.0
    %1388 = vmatpush2.msra.mxu0 0.0
    %1389 = vmatprep.subr.mxu0 0.0
    %1390 = vmatpush2.msra.mxu0 0.0
    %1391 = vmatprep.subr.mxu0 0.0
    %1392 = vmatpush2.msra.mxu0 0.0
    %1393 = vmatprep.subr.mxu0 0.0
    %1394 = vmatpush2.msra.mxu0 0.0
    %1395 = vmatprep.subr.mxu0 0.0
    %1396 = vmatpush2.msra.mxu0 0.0
    %1397 = vmatprep.subr.mxu0 0.0
    %1398 = vmatpush2.msra.mxu0 0.0
    %1399 = vmatprep.subr.mxu0 0.0
    %1400 = vmatpush2.msra.mxu0 0.0
    %1401 = vmatprep.subr.mxu0 0.0
    %1402 = vmatpush2.msra.mxu0 0.0
    %1403 = vmatprep.subr.mxu0 0.0
    %1404 = vmatpush2.msra.mxu0 0.0
    %1405 = vmatprep.subr.mxu0 0.0
    %1406 = vmatpush2.msra.mxu0 0.0
    %1407 = vmatprep.subr.mxu0 0.0
    %1408 = vmatpush2.msra.mxu0 0.0
    %1409 = vmatprep.subr.mxu0 0.0
    %1410 = vmatpush2.msra.mxu0 0.0
    %1411 = vmatprep.subr.mxu0 0.0
    %1412 = vmatpush2.msra.mxu0 0.0
    %1413 = vmatprep.mubr.f32.mxu0 0.0
    %1414 = vmatmul.mubr.f32.gmra.mxu0 %v1329
    %v1415 = vpop.f32.mrf.mxu0
    %v1416 = vadd.f32 0.0, %v1415
    %v1417 = vpop.f32.mrf.mxu0
    %v1418 = vadd.f32 0.0, %v1417
    %1419 = vdwg.mxu0
    %1420 = vmatprep.subr.mxu0 0.0
    %1421 = vmatpush1.msra.mxu0 0.0
    %1422 = vmatprep.subr.mxu0 0.0
    %1423 = vmatpush1.msra.mxu0 0.0
    %1424 = vmatprep.subr.mxu0 0.0
    %1425 = vmatpush1.msra.mxu0 0.0
    %1426 = vmatprep.subr.mxu0 0.0
    %1427 = vmatpush1.msra.mxu0 0.0
    %1428 = vmatprep.subr.mxu0 0.0
    %1429 = vmatpush1.msra.mxu0 0.0
    %1430 = vmatprep.subr.mxu0 0.0
    %1431 = vmatpush1.msra.mxu0 0.0
    %1432 = vmatprep.subr.mxu0 0.0
    %1433 = vmatpush1.msra.mxu0 0.0
    %1434 = vmatprep.subr.mxu0 0.0
    %1435 = vmatpush1.msra.mxu0 0.0
    %1436 = vmatprep.subr.mxu0 0.0
    %1437 = vmatpush1.msra.mxu0 0.0
    %1438 = vmatprep.subr.mxu0 0.0
    %1439 = vmatpush1.msra.mxu0 0.0
    %1440 = vmatprep.subr.mxu0 0.0
    %1441 = vmatpush1.msra.mxu0 0.0
    %1442 = vmatprep.subr.mxu0 0.0
    %1443 = vmatpush1.msra.mxu0 0.0
    %1444 = vmatprep.subr.mxu0 0.0
    %1445 = vmatpush1.msra.mxu0 0.0
    %1446 = vmatprep.subr.mxu0 0.0
    %1447 = vmatpush1.msra.mxu0 0.0
    %1448 = vmatprep.subr.mxu0 0.0
    %1449 = vmatpush1.msra.mxu0 0.0
    %1450 = vmatprep.subr.mxu0 %v1341
    %1451 = vmatpush1.msra.mxu0 %v1338
    %1452 = vmatprep.subr.mxu0 0.0
    %1453 = vmatpush2.msra.mxu0 0.0
    %1454 = vmatprep.subr.mxu0 0.0
    %1455 = vmatpush2.msra.mxu0 0.0
    %1456 = vmatprep.subr.mxu0 0.0
    %1457 = vmatpush2.msra.mxu0 0.0
    %1458 = vmatprep.subr.mxu0 0.0
    %1459 = vmatpush2.msra.mxu0 0.0
    %1460 = vmatprep.subr.mxu0 0.0
    %1461 = vmatpush2.msra.mxu0 0.0
    %1462 = vmatprep.subr.mxu0 0.0
    %1463 = vmatpush2.msra.mxu0 0.0
    %1464 = vmatprep.subr.mxu0 0.0
    %1465 = vmatpush2.msra.mxu0 0.0
    %1466 = vmatprep.subr.mxu0 0.0
    %1467 = vmatpush2.msra.mxu0 0.0
    %1468 = vmatprep.subr.mxu0 0.0
    %1469 = vmatpush2.msra.mxu0 0.0
    %1470 = vmatprep.subr.mxu0 0.0
    %1471 = vmatpush2.msra.mxu0 0.0
    %1472 = vmatprep.subr.mxu0 0.0
    %1473 = vmatpush2.msra.mxu0 0.0
    %1474 = vmatprep.subr.mxu0 0.0
    %1475 = vmatpush2.msra.mxu0 0.0
    %1476 = vmatprep.subr.mxu0 0.0
    %1477 = vmatpush2.msra.mxu0 0.0
    %1478 = vmatprep.subr.mxu0 0.0
    %1479 = vmatpush2.msra.mxu0 0.0
    %1480 = vmatprep.subr.mxu0 0.0
    %1481 = vmatpush2.msra.mxu0 0.0
    %1482 = vmatprep.subr.mxu0 0.0
    %1483 = vmatpush2.msra.mxu0 0.0
    %1484 = vmatprep.mubr.f32.mxu0 0.0
    %1485 = vmatmul.mubr.f32.gmra.mxu0 %v1329
    %v1486 = vpop.f32.mrf.mxu0
    %v1487 = vadd.f32 0.0, %v1486
    %v1488 = vpop.f32.mrf.mxu0
    %v1489 = vadd.f32 0.0, %v1488
    %1490 = vdwg.mxu0
    %1491 = vmatprep.subr.mxu0 0.0
    %1492 = vmatpush1.msra.mxu0 0.0
    %1493 = vmatprep.subr.mxu0 0.0
    %1494 = vmatpush1.msra.mxu0 0.0
    %1495 = vmatprep.subr.mxu0 0.0
    %1496 = vmatpush1.msra.mxu0 0.0
    %1497 = vmatprep.subr.mxu0 0.0
    %1498 = vmatpush1.msra.mxu0 0.0
    %1499 = vmatprep.subr.mxu0 0.0
    %1500 = vmatpush1.msra.mxu0 0.0
    %1501 = vmatprep.subr.mxu0 0.0
    %1502 = vmatpush1.msra.mxu0 0.0
    %1503 = vmatprep.subr.mxu0 0.0
    %1504 = vmatpush1.msra.mxu0 0.0
    %1505 = vmatprep.subr.mxu0 0.0
    %1506 = vmatpush1.msra.mxu0 0.0
    %1507 = vmatprep.subr.mxu0 0.0
    %1508 = vmatpush1.msra.mxu0 0.0
    %1509 = vmatprep.subr.mxu0 0.0
    %1510 = vmatpush1.msra.mxu0 0.0
    %1511 = vmatprep.subr.mxu0 0.0
    %1512 = vmatpush1.msra.mxu0 0.0
    %1513 = vmatprep.subr.mxu0 0.0
    %1514 = vmatpush1.msra.mxu0 0.0
    %1515 = vmatprep.subr.mxu0 0.0
    %1516 = vmatpush1.msra.mxu0 0.0
    %1517 = vmatprep.subr.mxu0 0.0
    %1518 = vmatpush1.msra.mxu0 0.0
    %1519 = vmatprep.subr.mxu0 0.0
    %1520 = vmatpush1.msra.mxu0 0.0
    %1521 = vmatprep.subr.mxu0 %v1347
    %1522 = vmatpush1.msra.mxu0 %v1344
    %1523 = vmatprep.subr.mxu0 0.0
    %1524 = vmatpush2.msra.mxu0 0.0
    %1525 = vmatprep.subr.mxu0 0.0
    %1526 = vmatpush2.msra.mxu0 0.0
    %1527 = vmatprep.subr.mxu0 0.0
    %1528 = vmatpush2.msra.mxu0 0.0
    %1529 = vmatprep.subr.mxu0 0.0
    %1530 = vmatpush2.msra.mxu0 0.0
    %1531 = vmatprep.subr.mxu0 0.0
    %1532 = vmatpush2.msra.mxu0 0.0
    %1533 = vmatprep.subr.mxu0 0.0
    %1534 = vmatpush2.msra.mxu0 0.0
    %1535 = vmatprep.subr.mxu0 0.0
    %1536 = vmatpush2.msra.mxu0 0.0
    %1537 = vmatprep.subr.mxu0 0.0
    %1538 = vmatpush2.msra.mxu0 0.0
    %1539 = vmatprep.subr.mxu0 0.0
    %1540 = vmatpush2.msra.mxu0 0.0
    %1541 = vmatprep.subr.mxu0 0.0
    %1542 = vmatpush2.msra.mxu0 0.0
    %1543 = vmatprep.subr.mxu0 0.0
    %1544 = vmatpush2.msra.mxu0 0.0
    %1545 = vmatprep.subr.mxu0 0.0
    %1546 = vmatpush2.msra.mxu0 0.0
    %1547 = vmatprep.subr.mxu0 0.0
    %1548 = vmatpush2.msra.mxu0 0.0
    %1549 = vmatprep.subr.mxu0 0.0
    %1550 = vmatpush2.msra.mxu0 0.0
    %1551 = vmatprep.subr.mxu0 0.0
    %1552 = vmatpush2.msra.mxu0 0.0
    %1553 = vmatprep.subr.mxu0 0.0
    %1554 = vmatpush2.msra.mxu0 0.0
    %1555 = vmatprep.mubr.f32.mxu0 0.0
    %1556 = vmatmul.mubr.f32.gmra.mxu0 %v1329
    %v1557 = vpop.f32.mrf.mxu0
    %v1558 = vadd.f32 0.0, %v1557
    %v1559 = vpop.f32.mrf.mxu0
    %v1560 = vadd.f32 0.0, %v1559
    %1561 = vdwg.mxu0
    %v1562 = vadd.f32 %v1301, %v1416
    %v1563 = vadd.f32 %v1302, %v1418
    %v1564 = vadd.f32 %v1303, %v1487
    %v1565 = vadd.f32 %v1304, %v1489
    %v1566 = vadd.f32 %v1305, %v1558
    %v1567 = vadd.f32 %v1306, %v1560
    %1568 = vrot.lane.b32.xlu0 %v24, 92
    %v1569 = vpop.permute.xlu0 %1568
    %1570 = vrot.lane.b32.xlu0 %v31, 92
    %v1571 = vpop.permute.xlu0 %1570
    %1572 = vrot.lane.b32.xlu0 %v25, 92
    %v1573 = vpop.permute.xlu0 %1572
    %1574 = vrot.lane.b32.xlu0 %v32, 92
    %v1575 = vpop.permute.xlu0 %1574
    %1576 = vrot.lane.b32.xlu0 %v26, 92
    %v1577 = vpop.permute.xlu0 %1576
    %1578 = vrot.lane.b32.xlu0 %v33, 92
    %v1579 = vpop.permute.xlu0 %1578
    %vm1580 = vcmp.lt.s32.totalorder %v50, 92
    %v1581 = vsel %vm1580, %v1577, %v1579
    %v1582 = vsel %vm1580, %v1575, %v1577
    %v1583 = vsel %vm1580, %v1573, %v1575
    %v1584 = vsel %vm1580, %v1571, %v1573
    %v1585 = vsel %vm1580, %v1569, %v1571
    %v1586 = vsel %vm1580, %v1579, %v1569
    %s1587 = scalar_lea.vmem %s2, 48
    %v1588 = vld [vmem:[%s1587] sm:$0xff]
    %v1590 = vsel %vm60, %v1588, 0
    %v1593 = vsel %vm64, %v1585, 0
    %v1596 = vsel %vm64, %v1584, 0
    %v1599 = vsel %vm64, %v1583, 0
    %v1602 = vsel %vm64, %v1582, 0
    %v1605 = vsel %vm64, %v1581, 0
    %v1608 = vsel %vm64, %v1586, 0
    %1610 = vmatprep.subr.mxu0 0.0
    %1611 = vmatpush1.msra.mxu0 0.0
    %1612 = vmatprep.subr.mxu0 0.0
    %1613 = vmatpush1.msra.mxu0 0.0
    %1614 = vmatprep.subr.mxu0 0.0
    %1615 = vmatpush1.msra.mxu0 0.0
    %1616 = vmatprep.subr.mxu0 0.0
    %1617 = vmatpush1.msra.mxu0 0.0
    %1618 = vmatprep.subr.mxu0 0.0
    %1619 = vmatpush1.msra.mxu0 0.0
    %1620 = vmatprep.subr.mxu0 0.0
    %1621 = vmatpush1.msra.mxu0 0.0
    %1622 = vmatprep.subr.mxu0 0.0
    %1623 = vmatpush1.msra.mxu0 0.0
    %1624 = vmatprep.subr.mxu0 0.0
    %1625 = vmatpush1.msra.mxu0 0.0
    %1626 = vmatprep.subr.mxu0 0.0
    %1627 = vmatpush1.msra.mxu0 0.0
    %1628 = vmatprep.subr.mxu0 0.0
    %1629 = vmatpush1.msra.mxu0 0.0
    %1630 = vmatprep.subr.mxu0 0.0
    %1631 = vmatpush1.msra.mxu0 0.0
    %1632 = vmatprep.subr.mxu0 0.0
    %1633 = vmatpush1.msra.mxu0 0.0
    %1634 = vmatprep.subr.mxu0 0.0
    %1635 = vmatpush1.msra.mxu0 0.0
    %1636 = vmatprep.subr.mxu0 0.0
    %1637 = vmatpush1.msra.mxu0 0.0
    %1638 = vmatprep.subr.mxu0 0.0
    %1639 = vmatpush1.msra.mxu0 0.0
    %1640 = vmatprep.subr.mxu0 %v1596
    %1641 = vmatpush1.msra.mxu0 %v1593
    %1642 = vmatprep.subr.mxu0 0.0
    %1643 = vmatpush2.msra.mxu0 0.0
    %1644 = vmatprep.subr.mxu0 0.0
    %1645 = vmatpush2.msra.mxu0 0.0
    %1646 = vmatprep.subr.mxu0 0.0
    %1647 = vmatpush2.msra.mxu0 0.0
    %1648 = vmatprep.subr.mxu0 0.0
    %1649 = vmatpush2.msra.mxu0 0.0
    %1650 = vmatprep.subr.mxu0 0.0
    %1651 = vmatpush2.msra.mxu0 0.0
    %1652 = vmatprep.subr.mxu0 0.0
    %1653 = vmatpush2.msra.mxu0 0.0
    %1654 = vmatprep.subr.mxu0 0.0
    %1655 = vmatpush2.msra.mxu0 0.0
    %1656 = vmatprep.subr.mxu0 0.0
    %1657 = vmatpush2.msra.mxu0 0.0
    %1658 = vmatprep.subr.mxu0 0.0
    %1659 = vmatpush2.msra.mxu0 0.0
    %1660 = vmatprep.subr.mxu0 0.0
    %1661 = vmatpush2.msra.mxu0 0.0
    %1662 = vmatprep.subr.mxu0 0.0
    %1663 = vmatpush2.msra.mxu0 0.0
    %1664 = vmatprep.subr.mxu0 0.0
    %1665 = vmatpush2.msra.mxu0 0.0
    %1666 = vmatprep.subr.mxu0 0.0
    %1667 = vmatpush2.msra.mxu0 0.0
    %1668 = vmatprep.subr.mxu0 0.0
    %1669 = vmatpush2.msra.mxu0 0.0
    %1670 = vmatprep.subr.mxu0 0.0
    %1671 = vmatpush2.msra.mxu0 0.0
    %1672 = vmatprep.subr.mxu0 0.0
    %1673 = vmatpush2.msra.mxu0 0.0
    %1674 = vmatprep.mubr.f32.mxu0 0.0
    %1675 = vmatmul.mubr.f32.gmra.mxu0 %v1590
    %v1676 = vpop.f32.mrf.mxu0
    %v1677 = vadd.f32 0.0, %v1676
    %v1678 = vpop.f32.mrf.mxu0
    %v1679 = vadd.f32 0.0, %v1678
    %1680 = vdwg.mxu0
    %1681 = vmatprep.subr.mxu0 0.0
    %1682 = vmatpush1.msra.mxu0 0.0
    %1683 = vmatprep.subr.mxu0 0.0
    %1684 = vmatpush1.msra.mxu0 0.0
    %1685 = vmatprep.subr.mxu0 0.0
    %1686 = vmatpush1.msra.mxu0 0.0
    %1687 = vmatprep.subr.mxu0 0.0
    %1688 = vmatpush1.msra.mxu0 0.0
    %1689 = vmatprep.subr.mxu0 0.0
    %1690 = vmatpush1.msra.mxu0 0.0
    %1691 = vmatprep.subr.mxu0 0.0
    %1692 = vmatpush1.msra.mxu0 0.0
    %1693 = vmatprep.subr.mxu0 0.0
    %1694 = vmatpush1.msra.mxu0 0.0
    %1695 = vmatprep.subr.mxu0 0.0
    %1696 = vmatpush1.msra.mxu0 0.0
    %1697 = vmatprep.subr.mxu0 0.0
    %1698 = vmatpush1.msra.mxu0 0.0
    %1699 = vmatprep.subr.mxu0 0.0
    %1700 = vmatpush1.msra.mxu0 0.0
    %1701 = vmatprep.subr.mxu0 0.0
    %1702 = vmatpush1.msra.mxu0 0.0
    %1703 = vmatprep.subr.mxu0 0.0
    %1704 = vmatpush1.msra.mxu0 0.0
    %1705 = vmatprep.subr.mxu0 0.0
    %1706 = vmatpush1.msra.mxu0 0.0
    %1707 = vmatprep.subr.mxu0 0.0
    %1708 = vmatpush1.msra.mxu0 0.0
    %1709 = vmatprep.subr.mxu0 0.0
    %1710 = vmatpush1.msra.mxu0 0.0
    %1711 = vmatprep.subr.mxu0 %v1602
    %1712 = vmatpush1.msra.mxu0 %v1599
    %1713 = vmatprep.subr.mxu0 0.0
    %1714 = vmatpush2.msra.mxu0 0.0
    %1715 = vmatprep.subr.mxu0 0.0
    %1716 = vmatpush2.msra.mxu0 0.0
    %1717 = vmatprep.subr.mxu0 0.0
    %1718 = vmatpush2.msra.mxu0 0.0
    %1719 = vmatprep.subr.mxu0 0.0
    %1720 = vmatpush2.msra.mxu0 0.0
    %1721 = vmatprep.subr.mxu0 0.0
    %1722 = vmatpush2.msra.mxu0 0.0
    %1723 = vmatprep.subr.mxu0 0.0
    %1724 = vmatpush2.msra.mxu0 0.0
    %1725 = vmatprep.subr.mxu0 0.0
    %1726 = vmatpush2.msra.mxu0 0.0
    %1727 = vmatprep.subr.mxu0 0.0
    %1728 = vmatpush2.msra.mxu0 0.0
    %1729 = vmatprep.subr.mxu0 0.0
    %1730 = vmatpush2.msra.mxu0 0.0
    %1731 = vmatprep.subr.mxu0 0.0
    %1732 = vmatpush2.msra.mxu0 0.0
    %1733 = vmatprep.subr.mxu0 0.0
    %1734 = vmatpush2.msra.mxu0 0.0
    %1735 = vmatprep.subr.mxu0 0.0
    %1736 = vmatpush2.msra.mxu0 0.0
    %1737 = vmatprep.subr.mxu0 0.0
    %1738 = vmatpush2.msra.mxu0 0.0
    %1739 = vmatprep.subr.mxu0 0.0
    %1740 = vmatpush2.msra.mxu0 0.0
    %1741 = vmatprep.subr.mxu0 0.0
    %1742 = vmatpush2.msra.mxu0 0.0
    %1743 = vmatprep.subr.mxu0 0.0
    %1744 = vmatpush2.msra.mxu0 0.0
    %1745 = vmatprep.mubr.f32.mxu0 0.0
    %1746 = vmatmul.mubr.f32.gmra.mxu0 %v1590
    %v1747 = vpop.f32.mrf.mxu0
    %v1748 = vadd.f32 0.0, %v1747
    %v1749 = vpop.f32.mrf.mxu0
    %v1750 = vadd.f32 0.0, %v1749
    %1751 = vdwg.mxu0
    %1752 = vmatprep.subr.mxu0 0.0
    %1753 = vmatpush1.msra.mxu0 0.0
    %1754 = vmatprep.subr.mxu0 0.0
    %1755 = vmatpush1.msra.mxu0 0.0
    %1756 = vmatprep.subr.mxu0 0.0
    %1757 = vmatpush1.msra.mxu0 0.0
    %1758 = vmatprep.subr.mxu0 0.0
    %1759 = vmatpush1.msra.mxu0 0.0
    %1760 = vmatprep.subr.mxu0 0.0
    %1761 = vmatpush1.msra.mxu0 0.0
    %1762 = vmatprep.subr.mxu0 0.0
    %1763 = vmatpush1.msra.mxu0 0.0
    %1764 = vmatprep.subr.mxu0 0.0
    %1765 = vmatpush1.msra.mxu0 0.0
    %1766 = vmatprep.subr.mxu0 0.0
    %1767 = vmatpush1.msra.mxu0 0.0
    %1768 = vmatprep.subr.mxu0 0.0
    %1769 = vmatpush1.msra.mxu0 0.0
    %1770 = vmatprep.subr.mxu0 0.0
    %1771 = vmatpush1.msra.mxu0 0.0
    %1772 = vmatprep.subr.mxu0 0.0
    %1773 = vmatpush1.msra.mxu0 0.0
    %1774 = vmatprep.subr.mxu0 0.0
    %1775 = vmatpush1.msra.mxu0 0.0
    %1776 = vmatprep.subr.mxu0 0.0
    %1777 = vmatpush1.msra.mxu0 0.0
    %1778 = vmatprep.subr.mxu0 0.0
    %1779 = vmatpush1.msra.mxu0 0.0
    %1780 = vmatprep.subr.mxu0 0.0
    %1781 = vmatpush1.msra.mxu0 0.0
    %1782 = vmatprep.subr.mxu0 %v1608
    %1783 = vmatpush1.msra.mxu0 %v1605
    %1784 = vmatprep.subr.mxu0 0.0
    %1785 = vmatpush2.msra.mxu0 0.0
    %1786 = vmatprep.subr.mxu0 0.0
    %1787 = vmatpush2.msra.mxu0 0.0
    %1788 = vmatprep.subr.mxu0 0.0
    %1789 = vmatpush2.msra.mxu0 0.0
    %1790 = vmatprep.subr.mxu0 0.0
    %1791 = vmatpush2.msra.mxu0 0.0
    %1792 = vmatprep.subr.mxu0 0.0
    %1793 = vmatpush2.msra.mxu0 0.0
    %1794 = vmatprep.subr.mxu0 0.0
    %1795 = vmatpush2.msra.mxu0 0.0
    %1796 = vmatprep.subr.mxu0 0.0
    %1797 = vmatpush2.msra.mxu0 0.0
    %1798 = vmatprep.subr.mxu0 0.0
    %1799 = vmatpush2.msra.mxu0 0.0
    %1800 = vmatprep.subr.mxu0 0.0
    %1801 = vmatpush2.msra.mxu0 0.0
    %1802 = vmatprep.subr.mxu0 0.0
    %1803 = vmatpush2.msra.mxu0 0.0
    %1804 = vmatprep.subr.mxu0 0.0
    %1805 = vmatpush2.msra.mxu0 0.0
    %1806 = vmatprep.subr.mxu0 0.0
    %1807 = vmatpush2.msra.mxu0 0.0
    %1808 = vmatprep.subr.mxu0 0.0
    %1809 = vmatpush2.msra.mxu0 0.0
    %1810 = vmatprep.subr.mxu0 0.0
    %1811 = vmatpush2.msra.mxu0 0.0
    %1812 = vmatprep.subr.mxu0 0.0
    %1813 = vmatpush2.msra.mxu0 0.0
    %1814 = vmatprep.subr.mxu0 0.0
    %1815 = vmatpush2.msra.mxu0 0.0
    %1816 = vmatprep.mubr.f32.mxu0 0.0
    %1817 = vmatmul.mubr.f32.gmra.mxu0 %v1590
    %v1818 = vpop.f32.mrf.mxu0
    %v1819 = vadd.f32 0.0, %v1818
    %v1820 = vpop.f32.mrf.mxu0
    %v1821 = vadd.f32 0.0, %v1820
    %1822 = vdwg.mxu0
    %v1823 = vadd.f32 %v1562, %v1677
    %v1824 = vadd.f32 %v1563, %v1679
    %v1825 = vadd.f32 %v1564, %v1748
    %v1826 = vadd.f32 %v1565, %v1750
    %v1827 = vadd.f32 %v1566, %v1819
    %v1828 = vadd.f32 %v1567, %v1821
    %1829 = vrot.lane.b32.xlu0 %v24, 91
    %v1830 = vpop.permute.xlu0 %1829
    %1831 = vrot.lane.b32.xlu0 %v31, 91
    %v1832 = vpop.permute.xlu0 %1831
    %1833 = vrot.lane.b32.xlu0 %v25, 91
    %v1834 = vpop.permute.xlu0 %1833
    %1835 = vrot.lane.b32.xlu0 %v32, 91
    %v1836 = vpop.permute.xlu0 %1835
    %1837 = vrot.lane.b32.xlu0 %v26, 91
    %v1838 = vpop.permute.xlu0 %1837
    %1839 = vrot.lane.b32.xlu0 %v33, 91
    %v1840 = vpop.permute.xlu0 %1839
    %vm1841 = vcmp.lt.s32.totalorder %v50, 91
    %v1842 = vsel %vm1841, %v1838, %v1840
    %v1843 = vsel %vm1841, %v1836, %v1838
    %v1844 = vsel %vm1841, %v1834, %v1836
    %v1845 = vsel %vm1841, %v1832, %v1834
    %v1846 = vsel %vm1841, %v1830, %v1832
    %v1847 = vsel %vm1841, %v1840, %v1830
    %s1848 = scalar_lea.vmem %s2, 56
    %v1849 = vld [vmem:[%s1848] sm:$0xff]
    %v1851 = vsel %vm60, %v1849, 0
    %v1854 = vsel %vm64, %v1846, 0
    %v1857 = vsel %vm64, %v1845, 0
    %v1860 = vsel %vm64, %v1844, 0
    %v1863 = vsel %vm64, %v1843, 0
    %v1866 = vsel %vm64, %v1842, 0
    %v1869 = vsel %vm64, %v1847, 0
    %1871 = vmatprep.subr.mxu0 0.0
    %1872 = vmatpush1.msra.mxu0 0.0
    %1873 = vmatprep.subr.mxu0 0.0
    %1874 = vmatpush1.msra.mxu0 0.0
    %1875 = vmatprep.subr.mxu0 0.0
    %1876 = vmatpush1.msra.mxu0 0.0
    %1877 = vmatprep.subr.mxu0 0.0
    %1878 = vmatpush1.msra.mxu0 0.0
    %1879 = vmatprep.subr.mxu0 0.0
    %1880 = vmatpush1.msra.mxu0 0.0
    %1881 = vmatprep.subr.mxu0 0.0
    %1882 = vmatpush1.msra.mxu0 0.0
    %1883 = vmatprep.subr.mxu0 0.0
    %1884 = vmatpush1.msra.mxu0 0.0
    %1885 = vmatprep.subr.mxu0 0.0
    %1886 = vmatpush1.msra.mxu0 0.0
    %1887 = vmatprep.subr.mxu0 0.0
    %1888 = vmatpush1.msra.mxu0 0.0
    %1889 = vmatprep.subr.mxu0 0.0
    %1890 = vmatpush1.msra.mxu0 0.0
    %1891 = vmatprep.subr.mxu0 0.0
    %1892 = vmatpush1.msra.mxu0 0.0
    %1893 = vmatprep.subr.mxu0 0.0
    %1894 = vmatpush1.msra.mxu0 0.0
    %1895 = vmatprep.subr.mxu0 0.0
    %1896 = vmatpush1.msra.mxu0 0.0
    %1897 = vmatprep.subr.mxu0 0.0
    %1898 = vmatpush1.msra.mxu0 0.0
    %1899 = vmatprep.subr.mxu0 0.0
    %1900 = vmatpush1.msra.mxu0 0.0
    %1901 = vmatprep.subr.mxu0 %v1857
    %1902 = vmatpush1.msra.mxu0 %v1854
    %1903 = vmatprep.subr.mxu0 0.0
    %1904 = vmatpush2.msra.mxu0 0.0
    %1905 = vmatprep.subr.mxu0 0.0
    %1906 = vmatpush2.msra.mxu0 0.0
    %1907 = vmatprep.subr.mxu0 0.0
    %1908 = vmatpush2.msra.mxu0 0.0
    %1909 = vmatprep.subr.mxu0 0.0
    %1910 = vmatpush2.msra.mxu0 0.0
    %1911 = vmatprep.subr.mxu0 0.0
    %1912 = vmatpush2.msra.mxu0 0.0
    %1913 = vmatprep.subr.mxu0 0.0
    %1914 = vmatpush2.msra.mxu0 0.0
    %1915 = vmatprep.subr.mxu0 0.0
    %1916 = vmatpush2.msra.mxu0 0.0
    %1917 = vmatprep.subr.mxu0 0.0
    %1918 = vmatpush2.msra.mxu0 0.0
    %1919 = vmatprep.subr.mxu0 0.0
    %1920 = vmatpush2.msra.mxu0 0.0
    %1921 = vmatprep.subr.mxu0 0.0
    %1922 = vmatpush2.msra.mxu0 0.0
    %1923 = vmatprep.subr.mxu0 0.0
    %1924 = vmatpush2.msra.mxu0 0.0
    %1925 = vmatprep.subr.mxu0 0.0
    %1926 = vmatpush2.msra.mxu0 0.0
    %1927 = vmatprep.subr.mxu0 0.0
    %1928 = vmatpush2.msra.mxu0 0.0
    %1929 = vmatprep.subr.mxu0 0.0
    %1930 = vmatpush2.msra.mxu0 0.0
    %1931 = vmatprep.subr.mxu0 0.0
    %1932 = vmatpush2.msra.mxu0 0.0
    %1933 = vmatprep.subr.mxu0 0.0
    %1934 = vmatpush2.msra.mxu0 0.0
    %1935 = vmatprep.mubr.f32.mxu0 0.0
    %1936 = vmatmul.mubr.f32.gmra.mxu0 %v1851
    %v1937 = vpop.f32.mrf.mxu0
    %v1938 = vadd.f32 0.0, %v1937
    %v1939 = vpop.f32.mrf.mxu0
    %v1940 = vadd.f32 0.0, %v1939
    %1941 = vdwg.mxu0
    %1942 = vmatprep.subr.mxu0 0.0
    %1943 = vmatpush1.msra.mxu0 0.0
    %1944 = vmatprep.subr.mxu0 0.0
    %1945 = vmatpush1.msra.mxu0 0.0
    %1946 = vmatprep.subr.mxu0 0.0
    %1947 = vmatpush1.msra.mxu0 0.0
    %1948 = vmatprep.subr.mxu0 0.0
    %1949 = vmatpush1.msra.mxu0 0.0
    %1950 = vmatprep.subr.mxu0 0.0
    %1951 = vmatpush1.msra.mxu0 0.0
    %1952 = vmatprep.subr.mxu0 0.0
    %1953 = vmatpush1.msra.mxu0 0.0
    %1954 = vmatprep.subr.mxu0 0.0
    %1955 = vmatpush1.msra.mxu0 0.0
    %1956 = vmatprep.subr.mxu0 0.0
    %1957 = vmatpush1.msra.mxu0 0.0
    %1958 = vmatprep.subr.mxu0 0.0
    %1959 = vmatpush1.msra.mxu0 0.0
    %1960 = vmatprep.subr.mxu0 0.0
    %1961 = vmatpush1.msra.mxu0 0.0
    %1962 = vmatprep.subr.mxu0 0.0
    %1963 = vmatpush1.msra.mxu0 0.0
    %1964 = vmatprep.subr.mxu0 0.0
    %1965 = vmatpush1.msra.mxu0 0.0
    %1966 = vmatprep.subr.mxu0 0.0
    %1967 = vmatpush1.msra.mxu0 0.0
    %1968 = vmatprep.subr.mxu0 0.0
    %1969 = vmatpush1.msra.mxu0 0.0
    %1970 = vmatprep.subr.mxu0 0.0
    %1971 = vmatpush1.msra.mxu0 0.0
    %1972 = vmatprep.subr.mxu0 %v1863
    %1973 = vmatpush1.msra.mxu0 %v1860
    %1974 = vmatprep.subr.mxu0 0.0
    %1975 = vmatpush2.msra.mxu0 0.0
    %1976 = vmatprep.subr.mxu0 0.0
    %1977 = vmatpush2.msra.mxu0 0.0
    %1978 = vmatprep.subr.mxu0 0.0
    %1979 = vmatpush2.msra.mxu0 0.0
    %1980 = vmatprep.subr.mxu0 0.0
    %1981 = vmatpush2.msra.mxu0 0.0
    %1982 = vmatprep.subr.mxu0 0.0
    %1983 = vmatpush2.msra.mxu0 0.0
    %1984 = vmatprep.subr.mxu0 0.0
    %1985 = vmatpush2.msra.mxu0 0.0
    %1986 = vmatprep.subr.mxu0 0.0
    %1987 = vmatpush2.msra.mxu0 0.0
    %1988 = vmatprep.subr.mxu0 0.0
    %1989 = vmatpush2.msra.mxu0 0.0
    %1990 = vmatprep.subr.mxu0 0.0
    %1991 = vmatpush2.msra.mxu0 0.0
    %1992 = vmatprep.subr.mxu0 0.0
    %1993 = vmatpush2.msra.mxu0 0.0
    %1994 = vmatprep.subr.mxu0 0.0
    %1995 = vmatpush2.msra.mxu0 0.0
    %1996 = vmatprep.subr.mxu0 0.0
    %1997 = vmatpush2.msra.mxu0 0.0
    %1998 = vmatprep.subr.mxu0 0.0
    %1999 = vmatpush2.msra.mxu0 0.0
    %2000 = vmatprep.subr.mxu0 0.0
    %2001 = vmatpush2.msra.mxu0 0.0
    %2002 = vmatprep.subr.mxu0 0.0
    %2003 = vmatpush2.msra.mxu0 0.0
    %2004 = vmatprep.subr.mxu0 0.0
    %2005 = vmatpush2.msra.mxu0 0.0
    %2006 = vmatprep.mubr.f32.mxu0 0.0
    %2007 = vmatmul.mubr.f32.gmra.mxu0 %v1851
    %v2008 = vpop.f32.mrf.mxu0
    %v2009 = vadd.f32 0.0, %v2008
    %v2010 = vpop.f32.mrf.mxu0
    %v2011 = vadd.f32 0.0, %v2010
    %2012 = vdwg.mxu0
    %2013 = vmatprep.subr.mxu0 0.0
    %2014 = vmatpush1.msra.mxu0 0.0
    %2015 = vmatprep.subr.mxu0 0.0
    %2016 = vmatpush1.msra.mxu0 0.0
    %2017 = vmatprep.subr.mxu0 0.0
    %2018 = vmatpush1.msra.mxu0 0.0
    %2019 = vmatprep.subr.mxu0 0.0
    %2020 = vmatpush1.msra.mxu0 0.0
    %2021 = vmatprep.subr.mxu0 0.0
    %2022 = vmatpush1.msra.mxu0 0.0
    %2023 = vmatprep.subr.mxu0 0.0
    %2024 = vmatpush1.msra.mxu0 0.0
    %2025 = vmatprep.subr.mxu0 0.0
    %2026 = vmatpush1.msra.mxu0 0.0
    %2027 = vmatprep.subr.mxu0 0.0
    %2028 = vmatpush1.msra.mxu0 0.0
    %2029 = vmatprep.subr.mxu0 0.0
    %2030 = vmatpush1.msra.mxu0 0.0
    %2031 = vmatprep.subr.mxu0 0.0
    %2032 = vmatpush1.msra.mxu0 0.0
    %2033 = vmatprep.subr.mxu0 0.0
    %2034 = vmatpush1.msra.mxu0 0.0
    %2035 = vmatprep.subr.mxu0 0.0
    %2036 = vmatpush1.msra.mxu0 0.0
    %2037 = vmatprep.subr.mxu0 0.0
    %2038 = vmatpush1.msra.mxu0 0.0
    %2039 = vmatprep.subr.mxu0 0.0
    %2040 = vmatpush1.msra.mxu0 0.0
    %2041 = vmatprep.subr.mxu0 0.0
    %2042 = vmatpush1.msra.mxu0 0.0
    %2043 = vmatprep.subr.mxu0 %v1869
    %2044 = vmatpush1.msra.mxu0 %v1866
    %2045 = vmatprep.subr.mxu0 0.0
    %2046 = vmatpush2.msra.mxu0 0.0
    %2047 = vmatprep.subr.mxu0 0.0
    %2048 = vmatpush2.msra.mxu0 0.0
    %2049 = vmatprep.subr.mxu0 0.0
    %2050 = vmatpush2.msra.mxu0 0.0
    %2051 = vmatprep.subr.mxu0 0.0
    %2052 = vmatpush2.msra.mxu0 0.0
    %2053 = vmatprep.subr.mxu0 0.0
    %2054 = vmatpush2.msra.mxu0 0.0
    %2055 = vmatprep.subr.mxu0 0.0
    %2056 = vmatpush2.msra.mxu0 0.0
    %2057 = vmatprep.subr.mxu0 0.0
    %2058 = vmatpush2.msra.mxu0 0.0
    %2059 = vmatprep.subr.mxu0 0.0
    %2060 = vmatpush2.msra.mxu0 0.0
    %2061 = vmatprep.subr.mxu0 0.0
    %2062 = vmatpush2.msra.mxu0 0.0
    %2063 = vmatprep.subr.mxu0 0.0
    %2064 = vmatpush2.msra.mxu0 0.0
    %2065 = vmatprep.subr.mxu0 0.0
    %2066 = vmatpush2.msra.mxu0 0.0
    %2067 = vmatprep.subr.mxu0 0.0
    %2068 = vmatpush2.msra.mxu0 0.0
    %2069 = vmatprep.subr.mxu0 0.0
    %2070 = vmatpush2.msra.mxu0 0.0
    %2071 = vmatprep.subr.mxu0 0.0
    %2072 = vmatpush2.msra.mxu0 0.0
    %2073 = vmatprep.subr.mxu0 0.0
    %2074 = vmatpush2.msra.mxu0 0.0
    %2075 = vmatprep.subr.mxu0 0.0
    %2076 = vmatpush2.msra.mxu0 0.0
    %2077 = vmatprep.mubr.f32.mxu0 0.0
    %2078 = vmatmul.mubr.f32.gmra.mxu0 %v1851
    %v2079 = vpop.f32.mrf.mxu0
    %v2080 = vadd.f32 0.0, %v2079
    %v2081 = vpop.f32.mrf.mxu0
    %v2082 = vadd.f32 0.0, %v2081
    %2083 = vdwg.mxu0
    %v2084 = vadd.f32 %v1823, %v1938
    %v2085 = vadd.f32 %v1824, %v1940
    %v2086 = vadd.f32 %v1825, %v2009
    %v2087 = vadd.f32 %v1826, %v2011
    %v2088 = vadd.f32 %v1827, %v2080
    %v2089 = vadd.f32 %v1828, %v2082
    %2090 = vrot.lane.b32.xlu0 %v24, 90
    %v2091 = vpop.permute.xlu0 %2090
    %2092 = vrot.lane.b32.xlu0 %v31, 90
    %v2093 = vpop.permute.xlu0 %2092
    %2094 = vrot.lane.b32.xlu0 %v25, 90
    %v2095 = vpop.permute.xlu0 %2094
    %2096 = vrot.lane.b32.xlu0 %v32, 90
    %v2097 = vpop.permute.xlu0 %2096
    %2098 = vrot.lane.b32.xlu0 %v26, 90
    %v2099 = vpop.permute.xlu0 %2098
    %2100 = vrot.lane.b32.xlu0 %v33, 90
    %v2101 = vpop.permute.xlu0 %2100
    %vm2102 = vcmp.lt.s32.totalorder %v50, 90
    %v2103 = vsel %vm2102, %v2099, %v2101
    %v2104 = vsel %vm2102, %v2097, %v2099
    %v2105 = vsel %vm2102, %v2095, %v2097
    %v2106 = vsel %vm2102, %v2093, %v2095
    %v2107 = vsel %vm2102, %v2091, %v2093
    %v2108 = vsel %vm2102, %v2101, %v2091
    %s2109 = scalar_lea.vmem %s2, 64
    %v2110 = vld [vmem:[%s2109] sm:$0xff]
    %v2112 = vsel %vm60, %v2110, 0
    %v2115 = vsel %vm64, %v2107, 0
    %v2118 = vsel %vm64, %v2106, 0
    %v2121 = vsel %vm64, %v2105, 0
    %v2124 = vsel %vm64, %v2104, 0
    %v2127 = vsel %vm64, %v2103, 0
    %v2130 = vsel %vm64, %v2108, 0
    %2132 = vmatprep.subr.mxu0 0.0
    %2133 = vmatpush1.msra.mxu0 0.0
    %2134 = vmatprep.subr.mxu0 0.0
    %2135 = vmatpush1.msra.mxu0 0.0
    %2136 = vmatprep.subr.mxu0 0.0
    %2137 = vmatpush1.msra.mxu0 0.0
    %2138 = vmatprep.subr.mxu0 0.0
    %2139 = vmatpush1.msra.mxu0 0.0
    %2140 = vmatprep.subr.mxu0 0.0
    %2141 = vmatpush1.msra.mxu0 0.0
    %2142 = vmatprep.subr.mxu0 0.0
    %2143 = vmatpush1.msra.mxu0 0.0
    %2144 = vmatprep.subr.mxu0 0.0
    %2145 = vmatpush1.msra.mxu0 0.0
    %2146 = vmatprep.subr.mxu0 0.0
    %2147 = vmatpush1.msra.mxu0 0.0
    %2148 = vmatprep.subr.mxu0 0.0
    %2149 = vmatpush1.msra.mxu0 0.0
    %2150 = vmatprep.subr.mxu0 0.0
    %2151 = vmatpush1.msra.mxu0 0.0
    %2152 = vmatprep.subr.mxu0 0.0
    %2153 = vmatpush1.msra.mxu0 0.0
    %2154 = vmatprep.subr.mxu0 0.0
    %2155 = vmatpush1.msra.mxu0 0.0
    %2156 = vmatprep.subr.mxu0 0.0
    %2157 = vmatpush1.msra.mxu0 0.0
    %2158 = vmatprep.subr.mxu0 0.0
    %2159 = vmatpush1.msra.mxu0 0.0
    %2160 = vmatprep.subr.mxu0 0.0
    %2161 = vmatpush1.msra.mxu0 0.0
    %2162 = vmatprep.subr.mxu0 %v2118
    %2163 = vmatpush1.msra.mxu0 %v2115
    %2164 = vmatprep.subr.mxu0 0.0
    %2165 = vmatpush2.msra.mxu0 0.0
    %2166 = vmatprep.subr.mxu0 0.0
    %2167 = vmatpush2.msra.mxu0 0.0
    %2168 = vmatprep.subr.mxu0 0.0
    %2169 = vmatpush2.msra.mxu0 0.0
    %2170 = vmatprep.subr.mxu0 0.0
    %2171 = vmatpush2.msra.mxu0 0.0
    %2172 = vmatprep.subr.mxu0 0.0
    %2173 = vmatpush2.msra.mxu0 0.0
    %2174 = vmatprep.subr.mxu0 0.0
    %2175 = vmatpush2.msra.mxu0 0.0
    %2176 = vmatprep.subr.mxu0 0.0
    %2177 = vmatpush2.msra.mxu0 0.0
    %2178 = vmatprep.subr.mxu0 0.0
    %2179 = vmatpush2.msra.mxu0 0.0
    %2180 = vmatprep.subr.mxu0 0.0
    %2181 = vmatpush2.msra.mxu0 0.0
    %2182 = vmatprep.subr.mxu0 0.0
    %2183 = vmatpush2.msra.mxu0 0.0
    %2184 = vmatprep.subr.mxu0 0.0
    %2185 = vmatpush2.msra.mxu0 0.0
    %2186 = vmatprep.subr.mxu0 0.0
    %2187 = vmatpush2.msra.mxu0 0.0
    %2188 = vmatprep.subr.mxu0 0.0
    %2189 = vmatpush2.msra.mxu0 0.0
    %2190 = vmatprep.subr.mxu0 0.0
    %2191 = vmatpush2.msra.mxu0 0.0
    %2192 = vmatprep.subr.mxu0 0.0
    %2193 = vmatpush2.msra.mxu0 0.0
    %2194 = vmatprep.subr.mxu0 0.0
    %2195 = vmatpush2.msra.mxu0 0.0
    %2196 = vmatprep.mubr.f32.mxu0 0.0
    %2197 = vmatmul.mubr.f32.gmra.mxu0 %v2112
    %v2198 = vpop.f32.mrf.mxu0
    %v2199 = vadd.f32 0.0, %v2198
    %v2200 = vpop.f32.mrf.mxu0
    %v2201 = vadd.f32 0.0, %v2200
    %2202 = vdwg.mxu0
    %2203 = vmatprep.subr.mxu0 0.0
    %2204 = vmatpush1.msra.mxu0 0.0
    %2205 = vmatprep.subr.mxu0 0.0
    %2206 = vmatpush1.msra.mxu0 0.0
    %2207 = vmatprep.subr.mxu0 0.0
    %2208 = vmatpush1.msra.mxu0 0.0
    %2209 = vmatprep.subr.mxu0 0.0
    %2210 = vmatpush1.msra.mxu0 0.0
    %2211 = vmatprep.subr.mxu0 0.0
    %2212 = vmatpush1.msra.mxu0 0.0
    %2213 = vmatprep.subr.mxu0 0.0
    %2214 = vmatpush1.msra.mxu0 0.0
    %2215 = vmatprep.subr.mxu0 0.0
    %2216 = vmatpush1.msra.mxu0 0.0
    %2217 = vmatprep.subr.mxu0 0.0
    %2218 = vmatpush1.msra.mxu0 0.0
    %2219 = vmatprep.subr.mxu0 0.0
    %2220 = vmatpush1.msra.mxu0 0.0
    %2221 = vmatprep.subr.mxu0 0.0
    %2222 = vmatpush1.msra.mxu0 0.0
    %2223 = vmatprep.subr.mxu0 0.0
    %2224 = vmatpush1.msra.mxu0 0.0
    %2225 = vmatprep.subr.mxu0 0.0
    %2226 = vmatpush1.msra.mxu0 0.0
    %2227 = vmatprep.subr.mxu0 0.0
    %2228 = vmatpush1.msra.mxu0 0.0
    %2229 = vmatprep.subr.mxu0 0.0
    %2230 = vmatpush1.msra.mxu0 0.0
    %2231 = vmatprep.subr.mxu0 0.0
    %2232 = vmatpush1.msra.mxu0 0.0
    %2233 = vmatprep.subr.mxu0 %v2124
    %2234 = vmatpush1.msra.mxu0 %v2121
    %2235 = vmatprep.subr.mxu0 0.0
    %2236 = vmatpush2.msra.mxu0 0.0
    %2237 = vmatprep.subr.mxu0 0.0
    %2238 = vmatpush2.msra.mxu0 0.0
    %2239 = vmatprep.subr.mxu0 0.0
    %2240 = vmatpush2.msra.mxu0 0.0
    %2241 = vmatprep.subr.mxu0 0.0
    %2242 = vmatpush2.msra.mxu0 0.0
    %2243 = vmatprep.subr.mxu0 0.0
    %2244 = vmatpush2.msra.mxu0 0.0
    %2245 = vmatprep.subr.mxu0 0.0
    %2246 = vmatpush2.msra.mxu0 0.0
    %2247 = vmatprep.subr.mxu0 0.0
    %2248 = vmatpush2.msra.mxu0 0.0
    %2249 = vmatprep.subr.mxu0 0.0
    %2250 = vmatpush2.msra.mxu0 0.0
    %2251 = vmatprep.subr.mxu0 0.0
    %2252 = vmatpush2.msra.mxu0 0.0
    %2253 = vmatprep.subr.mxu0 0.0
    %2254 = vmatpush2.msra.mxu0 0.0
    %2255 = vmatprep.subr.mxu0 0.0
    %2256 = vmatpush2.msra.mxu0 0.0
    %2257 = vmatprep.subr.mxu0 0.0
    %2258 = vmatpush2.msra.mxu0 0.0
    %2259 = vmatprep.subr.mxu0 0.0
    %2260 = vmatpush2.msra.mxu0 0.0
    %2261 = vmatprep.subr.mxu0 0.0
    %2262 = vmatpush2.msra.mxu0 0.0
    %2263 = vmatprep.subr.mxu0 0.0
    %2264 = vmatpush2.msra.mxu0 0.0
    %2265 = vmatprep.subr.mxu0 0.0
    %2266 = vmatpush2.msra.mxu0 0.0
    %2267 = vmatprep.mubr.f32.mxu0 0.0
    %2268 = vmatmul.mubr.f32.gmra.mxu0 %v2112
    %v2269 = vpop.f32.mrf.mxu0
    %v2270 = vadd.f32 0.0, %v2269
    %v2271 = vpop.f32.mrf.mxu0
    %v2272 = vadd.f32 0.0, %v2271
    %2273 = vdwg.mxu0
    %2274 = vmatprep.subr.mxu0 0.0
    %2275 = vmatpush1.msra.mxu0 0.0
    %2276 = vmatprep.subr.mxu0 0.0
    %2277 = vmatpush1.msra.mxu0 0.0
    %2278 = vmatprep.subr.mxu0 0.0
    %2279 = vmatpush1.msra.mxu0 0.0
    %2280 = vmatprep.subr.mxu0 0.0
    %2281 = vmatpush1.msra.mxu0 0.0
    %2282 = vmatprep.subr.mxu0 0.0
    %2283 = vmatpush1.msra.mxu0 0.0
    %2284 = vmatprep.subr.mxu0 0.0
    %2285 = vmatpush1.msra.mxu0 0.0
    %2286 = vmatprep.subr.mxu0 0.0
    %2287 = vmatpush1.msra.mxu0 0.0
    %2288 = vmatprep.subr.mxu0 0.0
    %2289 = vmatpush1.msra.mxu0 0.0
    %2290 = vmatprep.subr.mxu0 0.0
    %2291 = vmatpush1.msra.mxu0 0.0
    %2292 = vmatprep.subr.mxu0 0.0
    %2293 = vmatpush1.msra.mxu0 0.0
    %2294 = vmatprep.subr.mxu0 0.0
    %2295 = vmatpush1.msra.mxu0 0.0
    %2296 = vmatprep.subr.mxu0 0.0
    %2297 = vmatpush1.msra.mxu0 0.0
    %2298 = vmatprep.subr.mxu0 0.0
    %2299 = vmatpush1.msra.mxu0 0.0
    %2300 = vmatprep.subr.mxu0 0.0
    %2301 = vmatpush1.msra.mxu0 0.0
    %2302 = vmatprep.subr.mxu0 0.0
    %2303 = vmatpush1.msra.mxu0 0.0
    %2304 = vmatprep.subr.mxu0 %v2130
    %2305 = vmatpush1.msra.mxu0 %v2127
    %2306 = vmatprep.subr.mxu0 0.0
    %2307 = vmatpush2.msra.mxu0 0.0
    %2308 = vmatprep.subr.mxu0 0.0
    %2309 = vmatpush2.msra.mxu0 0.0
    %2310 = vmatprep.subr.mxu0 0.0
    %2311 = vmatpush2.msra.mxu0 0.0
    %2312 = vmatprep.subr.mxu0 0.0
    %2313 = vmatpush2.msra.mxu0 0.0
    %2314 = vmatprep.subr.mxu0 0.0
    %2315 = vmatpush2.msra.mxu0 0.0
    %2316 = vmatprep.subr.mxu0 0.0
    %2317 = vmatpush2.msra.mxu0 0.0
    %2318 = vmatprep.subr.mxu0 0.0
    %2319 = vmatpush2.msra.mxu0 0.0
    %2320 = vmatprep.subr.mxu0 0.0
    %2321 = vmatpush2.msra.mxu0 0.0
    %2322 = vmatprep.subr.mxu0 0.0
    %2323 = vmatpush2.msra.mxu0 0.0
    %2324 = vmatprep.subr.mxu0 0.0
    %2325 = vmatpush2.msra.mxu0 0.0
    %2326 = vmatprep.subr.mxu0 0.0
    %2327 = vmatpush2.msra.mxu0 0.0
    %2328 = vmatprep.subr.mxu0 0.0
    %2329 = vmatpush2.msra.mxu0 0.0
    %2330 = vmatprep.subr.mxu0 0.0
    %2331 = vmatpush2.msra.mxu0 0.0
    %2332 = vmatprep.subr.mxu0 0.0
    %2333 = vmatpush2.msra.mxu0 0.0
    %2334 = vmatprep.subr.mxu0 0.0
    %2335 = vmatpush2.msra.mxu0 0.0
    %2336 = vmatprep.subr.mxu0 0.0
    %2337 = vmatpush2.msra.mxu0 0.0
    %2338 = vmatprep.mubr.f32.mxu0 0.0
    %2339 = vmatmul.mubr.f32.gmra.mxu0 %v2112
    %v2340 = vpop.f32.mrf.mxu0
    %v2341 = vadd.f32 0.0, %v2340
    %v2342 = vpop.f32.mrf.mxu0
    %v2343 = vadd.f32 0.0, %v2342
    %2344 = vdwg.mxu0
    %v2345 = vadd.f32 %v2084, %v2199
    %v2346 = vadd.f32 %v2085, %v2201
    %v2347 = vadd.f32 %v2086, %v2270
    %v2348 = vadd.f32 %v2087, %v2272
    %v2349 = vadd.f32 %v2088, %v2341
    %v2350 = vadd.f32 %v2089, %v2343
    %v2351 = vld [vmem:[%s3] sm:$0xff]
    %2353 = vset.pattern.permute.xlu0 0
    %2354 = vperm.xlu0 %2353, %v2351
    %v2355 = vpop.permute.xlu0 %2354
    %v2357 = vadd.f32 %v2345, %v2355
    %v2358 = vadd.f32 %v2346, %v2355
    %v2359 = vadd.f32 %v2347, %v2355
    %v2360 = vadd.f32 %v2348, %v2355
    %v2361 = vadd.f32 %v2349, %v2355
    %v2362 = vadd.f32 %v2350, %v2355
    %v2363 = vmax.f32 %v2357, 0.0
    %v2364 = vmax.f32 %v2358, 0.0
    %v2365 = vmax.f32 %v2359, 0.0
    %v2366 = vmax.f32 %v2360, 0.0
    %v2367 = vmax.f32 %v2361, 0.0
    %v2368 = vmax.f32 %v2362, 0.0
    %v2369 = vld [vmem:[%s1] sm:$0x3f]
    %v2371 = vlaneseq
    %v2372 = vshrl.u32 %v2371, 7
    %v2373 = vsub.s32 0, %v2372
    %v2374 = vrot.slane %v2369, %v2373
    %v2375 = vlaneseq
    %v2376 = vshrl.u32 %v2375, 7
    %v2377 = vsub.s32 1, %v2376
    %v2378 = vrot.slane %v2369, %v2377
    %v2379 = vlaneseq
    %v2380 = vshrl.u32 %v2379, 7
    %v2381 = vsub.s32 2, %v2380
    %v2382 = vrot.slane %v2369, %v2381
    %v2383 = vlaneseq
    %v2384 = vshrl.u32 %v2383, 7
    %v2385 = vsub.s32 3, %v2384
    %v2386 = vrot.slane %v2369, %v2385
    %v2387 = vlaneseq
    %v2388 = vshrl.u32 %v2387, 7
    %v2389 = vsub.s32 4, %v2388
    %v2390 = vrot.slane %v2369, %v2389
    %v2391 = vlaneseq
    %v2392 = vshrl.u32 %v2391, 7
    %v2393 = vsub.s32 5, %v2392
    %v2394 = vrot.slane %v2369, %v2393
    %v2401 = vmul.f32 %v2363, %v2374
    %v2402 = vmul.f32 %v2364, %v2378
    %v2403 = vmul.f32 %v2365, %v2382
    %v2404 = vmul.f32 %v2366, %v2386
    %v2405 = vmul.f32 %v2367, %v2390
    %v2406 = vmul.f32 %v2368, %v2394
    %2407 = vrot.lane.b32.xlu0 %v2401, 19
    %v2408 = vpop.permute.xlu0 %2407
    %2409 = vrot.lane.b32.xlu0 %v2402, 19
    %v2410 = vpop.permute.xlu0 %2409
    %2411 = vrot.lane.b32.xlu0 %v2403, 19
    %v2412 = vpop.permute.xlu0 %2411
    %2413 = vrot.lane.b32.xlu0 %v2404, 19
    %v2414 = vpop.permute.xlu0 %2413
    %2415 = vrot.lane.b32.xlu0 %v2405, 19
    %v2416 = vpop.permute.xlu0 %2415
    %2417 = vrot.lane.b32.xlu0 %v2406, 19
    %v2418 = vpop.permute.xlu0 %2417
    %vm2419 = vcmp.lt.s32.totalorder %v50, 19
    %v2420 = vsel %vm2419, %v2416, %v2418
    %v2421 = vsel %vm2419, %v2414, %v2416
    %v2422 = vsel %vm2419, %v2412, %v2414
    %v2423 = vsel %vm2419, %v2410, %v2412
    %v2424 = vsel %vm2419, %v2408, %v2410
    %v2425 = vsel %vm2419, %v2418, %v2408
    %v2426 = vld [vmem:[%s4] sm:$0xff]
    %2427 = vrot.lane.b32.xlu0 %v2401, 18
    %v2428 = vpop.permute.xlu0 %2427
    %2429 = vrot.lane.b32.xlu0 %v2402, 18
    %v2430 = vpop.permute.xlu0 %2429
    %2431 = vrot.lane.b32.xlu0 %v2403, 18
    %v2432 = vpop.permute.xlu0 %2431
    %2433 = vrot.lane.b32.xlu0 %v2404, 18
    %v2434 = vpop.permute.xlu0 %2433
    %2435 = vrot.lane.b32.xlu0 %v2405, 18
    %v2436 = vpop.permute.xlu0 %2435
    %2437 = vrot.lane.b32.xlu0 %v2406, 18
    %v2438 = vpop.permute.xlu0 %2437
    %vm2439 = vcmp.lt.s32.totalorder %v50, 18
    %v2440 = vsel %vm2439, %v2436, %v2438
    %v2441 = vsel %vm2439, %v2434, %v2436
    %v2442 = vsel %vm2439, %v2432, %v2434
    %v2443 = vsel %vm2439, %v2430, %v2432
    %v2444 = vsel %vm2439, %v2428, %v2430
    %v2445 = vsel %vm2439, %v2438, %v2428
    %s2446 = scalar_lea.vmem %s4, 8
    %v2447 = vld [vmem:[%s2446] sm:$0xff]
    %vm2448 = vcmask 64512
    %v2450 = vsel %vm2448, %v2447, 0
    %2452 = vmatprep.subr.mxu0 0.0
    %2453 = vmatpush1.msra.mxu0 0.0
    %2454 = vmatprep.subr.mxu0 0.0
    %2455 = vmatpush1.msra.mxu0 0.0
    %2456 = vmatprep.subr.mxu0 0.0
    %2457 = vmatpush1.msra.mxu0 0.0
    %2458 = vmatprep.subr.mxu0 0.0
    %2459 = vmatpush1.msra.mxu0 0.0
    %2460 = vmatprep.subr.mxu0 0.0
    %2461 = vmatpush1.msra.mxu0 0.0
    %2462 = vmatprep.subr.mxu0 0.0
    %2463 = vmatpush1.msra.mxu0 0.0
    %2464 = vmatprep.subr.mxu0 0.0
    %2465 = vmatpush1.msra.mxu0 0.0
    %2466 = vmatprep.subr.mxu0 0.0
    %2467 = vmatpush1.msra.mxu0 0.0
    %2468 = vmatprep.subr.mxu0 0.0
    %2469 = vmatpush1.msra.mxu0 0.0
    %2470 = vmatprep.subr.mxu0 0.0
    %2471 = vmatpush1.msra.mxu0 0.0
    %2472 = vmatprep.subr.mxu0 0.0
    %2473 = vmatpush1.msra.mxu0 0.0
    %2474 = vmatprep.subr.mxu0 0.0
    %2475 = vmatpush1.msra.mxu0 0.0
    %2476 = vmatprep.subr.mxu0 0.0
    %2477 = vmatpush1.msra.mxu0 0.0
    %2478 = vmatprep.subr.mxu0 0.0
    %2479 = vmatpush1.msra.mxu0 0.0
    %2480 = vmatprep.subr.mxu0 0.0
    %2481 = vmatpush1.msra.mxu0 0.0
    %2482 = vmatprep.subr.mxu0 %v2444
    %2483 = vmatpush1.msra.mxu0 %v2445
    %2484 = vmatprep.subr.mxu0 0.0
    %2485 = vmatpush2.msra.mxu0 0.0
    %2486 = vmatprep.subr.mxu0 0.0
    %2487 = vmatpush2.msra.mxu0 0.0
    %2488 = vmatprep.subr.mxu0 0.0
    %2489 = vmatpush2.msra.mxu0 0.0
    %2490 = vmatprep.subr.mxu0 0.0
    %2491 = vmatpush2.msra.mxu0 0.0
    %2492 = vmatprep.subr.mxu0 0.0
    %2493 = vmatpush2.msra.mxu0 0.0
    %2494 = vmatprep.subr.mxu0 0.0
    %2495 = vmatpush2.msra.mxu0 0.0
    %2496 = vmatprep.subr.mxu0 0.0
    %2497 = vmatpush2.msra.mxu0 0.0
    %2498 = vmatprep.subr.mxu0 0.0
    %2499 = vmatpush2.msra.mxu0 0.0
    %2500 = vmatprep.subr.mxu0 0.0
    %2501 = vmatpush2.msra.mxu0 0.0
    %2502 = vmatprep.subr.mxu0 0.0
    %2503 = vmatpush2.msra.mxu0 0.0
    %2504 = vmatprep.subr.mxu0 0.0
    %2505 = vmatpush2.msra.mxu0 0.0
    %2506 = vmatprep.subr.mxu0 0.0
    %2507 = vmatpush2.msra.mxu0 0.0
    %2508 = vmatprep.subr.mxu0 0.0
    %2509 = vmatpush2.msra.mxu0 0.0
    %2510 = vmatprep.subr.mxu0 0.0
    %2511 = vmatpush2.msra.mxu0 0.0
    %2512 = vmatprep.subr.mxu0 0.0
    %2513 = vmatpush2.msra.mxu0 0.0
    %2514 = vmatprep.subr.mxu0 0.0
    %2515 = vmatpush2.msra.mxu0 0.0
    %2516 = vmatprep.mubr.f32.mxu0 0.0
    %2517 = vmatmul.mubr.f32.gmra.mxu0 %v2450
    %v2518 = vpop.f32.mrf.mxu0
    %v2519 = vadd.f32 0.0, %v2518
    %v2520 = vpop.f32.mrf.mxu0
    %v2521 = vadd.f32 0.0, %v2520
    %2522 = vdwg.mxu0
    %2523 = vmatprep.subr.mxu0 0.0
    %2524 = vmatpush1.msra.mxu0 0.0
    %2525 = vmatprep.subr.mxu0 0.0
    %2526 = vmatpush1.msra.mxu0 0.0
    %2527 = vmatprep.subr.mxu0 0.0
    %2528 = vmatpush1.msra.mxu0 0.0
    %2529 = vmatprep.subr.mxu0 0.0
    %2530 = vmatpush1.msra.mxu0 0.0
    %2531 = vmatprep.subr.mxu0 0.0
    %2532 = vmatpush1.msra.mxu0 0.0
    %2533 = vmatprep.subr.mxu0 0.0
    %2534 = vmatpush1.msra.mxu0 0.0
    %2535 = vmatprep.subr.mxu0 0.0
    %2536 = vmatpush1.msra.mxu0 0.0
    %2537 = vmatprep.subr.mxu0 0.0
    %2538 = vmatpush1.msra.mxu0 0.0
    %2539 = vmatprep.subr.mxu0 0.0
    %2540 = vmatpush1.msra.mxu0 0.0
    %2541 = vmatprep.subr.mxu0 0.0
    %2542 = vmatpush1.msra.mxu0 0.0
    %2543 = vmatprep.subr.mxu0 0.0
    %2544 = vmatpush1.msra.mxu0 0.0
    %2545 = vmatprep.subr.mxu0 0.0
    %2546 = vmatpush1.msra.mxu0 0.0
    %2547 = vmatprep.subr.mxu0 0.0
    %2548 = vmatpush1.msra.mxu0 0.0
    %2549 = vmatprep.subr.mxu0 0.0
    %2550 = vmatpush1.msra.mxu0 0.0
    %2551 = vmatprep.subr.mxu0 0.0
    %2552 = vmatpush1.msra.mxu0 0.0
    %2553 = vmatprep.subr.mxu0 %v2442
    %2554 = vmatpush1.msra.mxu0 %v2443
    %2555 = vmatprep.subr.mxu0 0.0
    %2556 = vmatpush2.msra.mxu0 0.0
    %2557 = vmatprep.subr.mxu0 0.0
    %2558 = vmatpush2.msra.mxu0 0.0
    %2559 = vmatprep.subr.mxu0 0.0
    %2560 = vmatpush2.msra.mxu0 0.0
    %2561 = vmatprep.subr.mxu0 0.0
    %2562 = vmatpush2.msra.mxu0 0.0
    %2563 = vmatprep.subr.mxu0 0.0
    %2564 = vmatpush2.msra.mxu0 0.0
    %2565 = vmatprep.subr.mxu0 0.0
    %2566 = vmatpush2.msra.mxu0 0.0
    %2567 = vmatprep.subr.mxu0 0.0
    %2568 = vmatpush2.msra.mxu0 0.0
    %2569 = vmatprep.subr.mxu0 0.0
    %2570 = vmatpush2.msra.mxu0 0.0
    %2571 = vmatprep.subr.mxu0 0.0
    %2572 = vmatpush2.msra.mxu0 0.0
    %2573 = vmatprep.subr.mxu0 0.0
    %2574 = vmatpush2.msra.mxu0 0.0
    %2575 = vmatprep.subr.mxu0 0.0
    %2576 = vmatpush2.msra.mxu0 0.0
    %2577 = vmatprep.subr.mxu0 0.0
    %2578 = vmatpush2.msra.mxu0 0.0
    %2579 = vmatprep.subr.mxu0 0.0
    %2580 = vmatpush2.msra.mxu0 0.0
    %2581 = vmatprep.subr.mxu0 0.0
    %2582 = vmatpush2.msra.mxu0 0.0
    %2583 = vmatprep.subr.mxu0 0.0
    %2584 = vmatpush2.msra.mxu0 0.0
    %2585 = vmatprep.subr.mxu0 0.0
    %2586 = vmatpush2.msra.mxu0 0.0
    %2587 = vmatprep.mubr.f32.mxu0 0.0
    %2588 = vmatmul.mubr.f32.gmra.mxu0 %v2450
    %v2589 = vpop.f32.mrf.mxu0
    %v2590 = vadd.f32 0.0, %v2589
    %v2591 = vpop.f32.mrf.mxu0
    %v2592 = vadd.f32 0.0, %v2591
    %2593 = vdwg.mxu0
    %2594 = vmatprep.subr.mxu0 0.0
    %2595 = vmatpush1.msra.mxu0 0.0
    %2596 = vmatprep.subr.mxu0 0.0
    %2597 = vmatpush1.msra.mxu0 0.0
    %2598 = vmatprep.subr.mxu0 0.0
    %2599 = vmatpush1.msra.mxu0 0.0
    %2600 = vmatprep.subr.mxu0 0.0
    %2601 = vmatpush1.msra.mxu0 0.0
    %2602 = vmatprep.subr.mxu0 0.0
    %2603 = vmatpush1.msra.mxu0 0.0
    %2604 = vmatprep.subr.mxu0 0.0
    %2605 = vmatpush1.msra.mxu0 0.0
    %2606 = vmatprep.subr.mxu0 0.0
    %2607 = vmatpush1.msra.mxu0 0.0
    %2608 = vmatprep.subr.mxu0 0.0
    %2609 = vmatpush1.msra.mxu0 0.0
    %2610 = vmatprep.subr.mxu0 0.0
    %2611 = vmatpush1.msra.mxu0 0.0
    %2612 = vmatprep.subr.mxu0 0.0
    %2613 = vmatpush1.msra.mxu0 0.0
    %2614 = vmatprep.subr.mxu0 0.0
    %2615 = vmatpush1.msra.mxu0 0.0
    %2616 = vmatprep.subr.mxu0 0.0
    %2617 = vmatpush1.msra.mxu0 0.0
    %2618 = vmatprep.subr.mxu0 0.0
    %2619 = vmatpush1.msra.mxu0 0.0
    %2620 = vmatprep.subr.mxu0 0.0
    %2621 = vmatpush1.msra.mxu0 0.0
    %2622 = vmatprep.subr.mxu0 0.0
    %2623 = vmatpush1.msra.mxu0 0.0
    %2624 = vmatprep.subr.mxu0 %v2440
    %2625 = vmatpush1.msra.mxu0 %v2441
    %2626 = vmatprep.subr.mxu0 0.0
    %2627 = vmatpush2.msra.mxu0 0.0
    %2628 = vmatprep.subr.mxu0 0.0
    %2629 = vmatpush2.msra.mxu0 0.0
    %2630 = vmatprep.subr.mxu0 0.0
    %2631 = vmatpush2.msra.mxu0 0.0
    %2632 = vmatprep.subr.mxu0 0.0
    %2633 = vmatpush2.msra.mxu0 0.0
    %2634 = vmatprep.subr.mxu0 0.0
    %2635 = vmatpush2.msra.mxu0 0.0
    %2636 = vmatprep.subr.mxu0 0.0
    %2637 = vmatpush2.msra.mxu0 0.0
    %2638 = vmatprep.subr.mxu0 0.0
    %2639 = vmatpush2.msra.mxu0 0.0
    %2640 = vmatprep.subr.mxu0 0.0
    %2641 = vmatpush2.msra.mxu0 0.0
    %2642 = vmatprep.subr.mxu0 0.0
    %2643 = vmatpush2.msra.mxu0 0.0
    %2644 = vmatprep.subr.mxu0 0.0
    %2645 = vmatpush2.msra.mxu0 0.0
    %2646 = vmatprep.subr.mxu0 0.0
    %2647 = vmatpush2.msra.mxu0 0.0
    %2648 = vmatprep.subr.mxu0 0.0
    %2649 = vmatpush2.msra.mxu0 0.0
    %2650 = vmatprep.subr.mxu0 0.0
    %2651 = vmatpush2.msra.mxu0 0.0
    %2652 = vmatprep.subr.mxu0 0.0
    %2653 = vmatpush2.msra.mxu0 0.0
    %2654 = vmatprep.subr.mxu0 0.0
    %2655 = vmatpush2.msra.mxu0 0.0
    %2656 = vmatprep.subr.mxu0 0.0
    %2657 = vmatpush2.msra.mxu0 0.0
    %2658 = vmatprep.mubr.f32.mxu0 0.0
    %2659 = vmatmul.mubr.f32.gmra.mxu0 %v2450
    %v2660 = vpop.f32.mrf.mxu0
    %v2661 = vadd.f32 0.0, %v2660
    %v2662 = vpop.f32.mrf.mxu0
    %v2663 = vadd.f32 0.0, %v2662
    %2664 = vdwg.mxu0
    %v2666 = vsel %vm2448, %v2426, 0
    %2668 = vmatprep.subr.mxu0 0.0
    %2669 = vmatpush1.msra.mxu0 0.0
    %2670 = vmatprep.subr.mxu0 0.0
    %2671 = vmatpush1.msra.mxu0 0.0
    %2672 = vmatprep.subr.mxu0 0.0
    %2673 = vmatpush1.msra.mxu0 0.0
    %2674 = vmatprep.subr.mxu0 0.0
    %2675 = vmatpush1.msra.mxu0 0.0
    %2676 = vmatprep.subr.mxu0 0.0
    %2677 = vmatpush1.msra.mxu0 0.0
    %2678 = vmatprep.subr.mxu0 0.0
    %2679 = vmatpush1.msra.mxu0 0.0
    %2680 = vmatprep.subr.mxu0 0.0
    %2681 = vmatpush1.msra.mxu0 0.0
    %2682 = vmatprep.subr.mxu0 0.0
    %2683 = vmatpush1.msra.mxu0 0.0
    %2684 = vmatprep.subr.mxu0 0.0
    %2685 = vmatpush1.msra.mxu0 0.0
    %2686 = vmatprep.subr.mxu0 0.0
    %2687 = vmatpush1.msra.mxu0 0.0
    %2688 = vmatprep.subr.mxu0 0.0
    %2689 = vmatpush1.msra.mxu0 0.0
    %2690 = vmatprep.subr.mxu0 0.0
    %2691 = vmatpush1.msra.mxu0 0.0
    %2692 = vmatprep.subr.mxu0 0.0
    %2693 = vmatpush1.msra.mxu0 0.0
    %2694 = vmatprep.subr.mxu0 0.0
    %2695 = vmatpush1.msra.mxu0 0.0
    %2696 = vmatprep.subr.mxu0 0.0
    %2697 = vmatpush1.msra.mxu0 0.0
    %2698 = vmatprep.subr.mxu0 %v2424
    %2699 = vmatpush1.msra.mxu0 %v2425
    %2700 = vmatprep.subr.mxu0 0.0
    %2701 = vmatpush2.msra.mxu0 0.0
    %2702 = vmatprep.subr.mxu0 0.0
    %2703 = vmatpush2.msra.mxu0 0.0
    %2704 = vmatprep.subr.mxu0 0.0
    %2705 = vmatpush2.msra.mxu0 0.0
    %2706 = vmatprep.subr.mxu0 0.0
    %2707 = vmatpush2.msra.mxu0 0.0
    %2708 = vmatprep.subr.mxu0 0.0
    %2709 = vmatpush2.msra.mxu0 0.0
    %2710 = vmatprep.subr.mxu0 0.0
    %2711 = vmatpush2.msra.mxu0 0.0
    %2712 = vmatprep.subr.mxu0 0.0
    %2713 = vmatpush2.msra.mxu0 0.0
    %2714 = vmatprep.subr.mxu0 0.0
    %2715 = vmatpush2.msra.mxu0 0.0
    %2716 = vmatprep.subr.mxu0 0.0
    %2717 = vmatpush2.msra.mxu0 0.0
    %2718 = vmatprep.subr.mxu0 0.0
    %2719 = vmatpush2.msra.mxu0 0.0
    %2720 = vmatprep.subr.mxu0 0.0
    %2721 = vmatpush2.msra.mxu0 0.0
    %2722 = vmatprep.subr.mxu0 0.0
    %2723 = vmatpush2.msra.mxu0 0.0
    %2724 = vmatprep.subr.mxu0 0.0
    %2725 = vmatpush2.msra.mxu0 0.0
    %2726 = vmatprep.subr.mxu0 0.0
    %2727 = vmatpush2.msra.mxu0 0.0
    %2728 = vmatprep.subr.mxu0 0.0
    %2729 = vmatpush2.msra.mxu0 0.0
    %2730 = vmatprep.subr.mxu0 0.0
    %2731 = vmatpush2.msra.mxu0 0.0
    %2732 = vmatprep.mubr.f32.mxu0 0.0
    %2733 = vmatmul.mubr.f32.gmra.mxu0 %v2666
    %v2734 = vpop.f32.mrf.mxu0
    %v2735 = vadd.f32 %v2519, %v2734
    %v2736 = vpop.f32.mrf.mxu0
    %v2737 = vadd.f32 %v2521, %v2736
    %2738 = vdwg.mxu0
    %2739 = vmatprep.subr.mxu0 0.0
    %2740 = vmatpush1.msra.mxu0 0.0
    %2741 = vmatprep.subr.mxu0 0.0
    %2742 = vmatpush1.msra.mxu0 0.0
    %2743 = vmatprep.subr.mxu0 0.0
    %2744 = vmatpush1.msra.mxu0 0.0
    %2745 = vmatprep.subr.mxu0 0.0
    %2746 = vmatpush1.msra.mxu0 0.0
    %2747 = vmatprep.subr.mxu0 0.0
    %2748 = vmatpush1.msra.mxu0 0.0
    %2749 = vmatprep.subr.mxu0 0.0
    %2750 = vmatpush1.msra.mxu0 0.0
    %2751 = vmatprep.subr.mxu0 0.0
    %2752 = vmatpush1.msra.mxu0 0.0
    %2753 = vmatprep.subr.mxu0 0.0
    %2754 = vmatpush1.msra.mxu0 0.0
    %2755 = vmatprep.subr.mxu0 0.0
    %2756 = vmatpush1.msra.mxu0 0.0
    %2757 = vmatprep.subr.mxu0 0.0
    %2758 = vmatpush1.msra.mxu0 0.0
    %2759 = vmatprep.subr.mxu0 0.0
    %2760 = vmatpush1.msra.mxu0 0.0
    %2761 = vmatprep.subr.mxu0 0.0
    %2762 = vmatpush1.msra.mxu0 0.0
    %2763 = vmatprep.subr.mxu0 0.0
    %2764 = vmatpush1.msra.mxu0 0.0
    %2765 = vmatprep.subr.mxu0 0.0
    %2766 = vmatpush1.msra.mxu0 0.0
    %2767 = vmatprep.subr.mxu0 0.0
    %2768 = vmatpush1.msra.mxu0 0.0
    %2769 = vmatprep.subr.mxu0 %v2422
    %2770 = vmatpush1.msra.mxu0 %v2423
    %2771 = vmatprep.subr.mxu0 0.0
    %2772 = vmatpush2.msra.mxu0 0.0
    %2773 = vmatprep.subr.mxu0 0.0
    %2774 = vmatpush2.msra.mxu0 0.0
    %2775 = vmatprep.subr.mxu0 0.0
    %2776 = vmatpush2.msra.mxu0 0.0
    %2777 = vmatprep.subr.mxu0 0.0
    %2778 = vmatpush2.msra.mxu0 0.0
    %2779 = vmatprep.subr.mxu0 0.0
    %2780 = vmatpush2.msra.mxu0 0.0
    %2781 = vmatprep.subr.mxu0 0.0
    %2782 = vmatpush2.msra.mxu0 0.0
    %2783 = vmatprep.subr.mxu0 0.0
    %2784 = vmatpush2.msra.mxu0 0.0
    %2785 = vmatprep.subr.mxu0 0.0
    %2786 = vmatpush2.msra.mxu0 0.0
    %2787 = vmatprep.subr.mxu0 0.0
    %2788 = vmatpush2.msra.mxu0 0.0
    %2789 = vmatprep.subr.mxu0 0.0
    %2790 = vmatpush2.msra.mxu0 0.0
    %2791 = vmatprep.subr.mxu0 0.0
    %2792 = vmatpush2.msra.mxu0 0.0
    %2793 = vmatprep.subr.mxu0 0.0
    %2794 = vmatpush2.msra.mxu0 0.0
    %2795 = vmatprep.subr.mxu0 0.0
    %2796 = vmatpush2.msra.mxu0 0.0
    %2797 = vmatprep.subr.mxu0 0.0
    %2798 = vmatpush2.msra.mxu0 0.0
    %2799 = vmatprep.subr.mxu0 0.0
    %2800 = vmatpush2.msra.mxu0 0.0
    %2801 = vmatprep.subr.mxu0 0.0
    %2802 = vmatpush2.msra.mxu0 0.0
    %2803 = vmatprep.mubr.f32.mxu0 0.0
    %2804 = vmatmul.mubr.f32.gmra.mxu0 %v2666
    %v2805 = vpop.f32.mrf.mxu0
    %v2806 = vadd.f32 %v2590, %v2805
    %v2807 = vpop.f32.mrf.mxu0
    %v2808 = vadd.f32 %v2592, %v2807
    %2809 = vdwg.mxu0
    %2810 = vmatprep.subr.mxu0 0.0
    %2811 = vmatpush1.msra.mxu0 0.0
    %2812 = vmatprep.subr.mxu0 0.0
    %2813 = vmatpush1.msra.mxu0 0.0
    %2814 = vmatprep.subr.mxu0 0.0
    %2815 = vmatpush1.msra.mxu0 0.0
    %2816 = vmatprep.subr.mxu0 0.0
    %2817 = vmatpush1.msra.mxu0 0.0
    %2818 = vmatprep.subr.mxu0 0.0
    %2819 = vmatpush1.msra.mxu0 0.0
    %2820 = vmatprep.subr.mxu0 0.0
    %2821 = vmatpush1.msra.mxu0 0.0
    %2822 = vmatprep.subr.mxu0 0.0
    %2823 = vmatpush1.msra.mxu0 0.0
    %2824 = vmatprep.subr.mxu0 0.0
    %2825 = vmatpush1.msra.mxu0 0.0
    %2826 = vmatprep.subr.mxu0 0.0
    %2827 = vmatpush1.msra.mxu0 0.0
    %2828 = vmatprep.subr.mxu0 0.0
    %2829 = vmatpush1.msra.mxu0 0.0
    %2830 = vmatprep.subr.mxu0 0.0
    %2831 = vmatpush1.msra.mxu0 0.0
    %2832 = vmatprep.subr.mxu0 0.0
    %2833 = vmatpush1.msra.mxu0 0.0
    %2834 = vmatprep.subr.mxu0 0.0
    %2835 = vmatpush1.msra.mxu0 0.0
    %2836 = vmatprep.subr.mxu0 0.0
    %2837 = vmatpush1.msra.mxu0 0.0
    %2838 = vmatprep.subr.mxu0 0.0
    %2839 = vmatpush1.msra.mxu0 0.0
    %2840 = vmatprep.subr.mxu0 %v2420
    %2841 = vmatpush1.msra.mxu0 %v2421
    %2842 = vmatprep.subr.mxu0 0.0
    %2843 = vmatpush2.msra.mxu0 0.0
    %2844 = vmatprep.subr.mxu0 0.0
    %2845 = vmatpush2.msra.mxu0 0.0
    %2846 = vmatprep.subr.mxu0 0.0
    %2847 = vmatpush2.msra.mxu0 0.0
    %2848 = vmatprep.subr.mxu0 0.0
    %2849 = vmatpush2.msra.mxu0 0.0
    %2850 = vmatprep.subr.mxu0 0.0
    %2851 = vmatpush2.msra.mxu0 0.0
    %2852 = vmatprep.subr.mxu0 0.0
    %2853 = vmatpush2.msra.mxu0 0.0
    %2854 = vmatprep.subr.mxu0 0.0
    %2855 = vmatpush2.msra.mxu0 0.0
    %2856 = vmatprep.subr.mxu0 0.0
    %2857 = vmatpush2.msra.mxu0 0.0
    %2858 = vmatprep.subr.mxu0 0.0
    %2859 = vmatpush2.msra.mxu0 0.0
    %2860 = vmatprep.subr.mxu0 0.0
    %2861 = vmatpush2.msra.mxu0 0.0
    %2862 = vmatprep.subr.mxu0 0.0
    %2863 = vmatpush2.msra.mxu0 0.0
    %2864 = vmatprep.subr.mxu0 0.0
    %2865 = vmatpush2.msra.mxu0 0.0
    %2866 = vmatprep.subr.mxu0 0.0
    %2867 = vmatpush2.msra.mxu0 0.0
    %2868 = vmatprep.subr.mxu0 0.0
    %2869 = vmatpush2.msra.mxu0 0.0
    %2870 = vmatprep.subr.mxu0 0.0
    %2871 = vmatpush2.msra.mxu0 0.0
    %2872 = vmatprep.subr.mxu0 0.0
    %2873 = vmatpush2.msra.mxu0 0.0
    %2874 = vmatprep.mubr.f32.mxu0 0.0
    %2875 = vmatmul.mubr.f32.gmra.mxu0 %v2666
    %v2876 = vpop.f32.mrf.mxu0
    %v2877 = vadd.f32 %v2661, %v2876
    %v2878 = vpop.f32.mrf.mxu0
    %v2879 = vadd.f32 %v2663, %v2878
    %2880 = vdwg.mxu0
    %2881 = vrot.lane.b32.xlu0 %v2401, 17
    %v2882 = vpop.permute.xlu0 %2881
    %2883 = vrot.lane.b32.xlu0 %v2402, 17
    %v2884 = vpop.permute.xlu0 %2883
    %2885 = vrot.lane.b32.xlu0 %v2403, 17
    %v2886 = vpop.permute.xlu0 %2885
    %2887 = vrot.lane.b32.xlu0 %v2404, 17
    %v2888 = vpop.permute.xlu0 %2887
    %2889 = vrot.lane.b32.xlu0 %v2405, 17
    %v2890 = vpop.permute.xlu0 %2889
    %2891 = vrot.lane.b32.xlu0 %v2406, 17
    %v2892 = vpop.permute.xlu0 %2891
    %vm2893 = vcmp.lt.s32.totalorder %v50, 17
    %v2894 = vsel %vm2893, %v2890, %v2892
    %v2895 = vsel %vm2893, %v2888, %v2890
    %v2896 = vsel %vm2893, %v2886, %v2888
    %v2897 = vsel %vm2893, %v2884, %v2886
    %v2898 = vsel %vm2893, %v2882, %v2884
    %v2899 = vsel %vm2893, %v2892, %v2882
    %s2900 = scalar_lea.vmem %s4, 16
    %v2901 = vld [vmem:[%s2900] sm:$0xff]
    %v2903 = vsel %vm2448, %v2901, 0
    %2905 = vmatprep.subr.mxu0 0.0
    %2906 = vmatpush1.msra.mxu0 0.0
    %2907 = vmatprep.subr.mxu0 0.0
    %2908 = vmatpush1.msra.mxu0 0.0
    %2909 = vmatprep.subr.mxu0 0.0
    %2910 = vmatpush1.msra.mxu0 0.0
    %2911 = vmatprep.subr.mxu0 0.0
    %2912 = vmatpush1.msra.mxu0 0.0
    %2913 = vmatprep.subr.mxu0 0.0
    %2914 = vmatpush1.msra.mxu0 0.0
    %2915 = vmatprep.subr.mxu0 0.0
    %2916 = vmatpush1.msra.mxu0 0.0
    %2917 = vmatprep.subr.mxu0 0.0
    %2918 = vmatpush1.msra.mxu0 0.0
    %2919 = vmatprep.subr.mxu0 0.0
    %2920 = vmatpush1.msra.mxu0 0.0
    %2921 = vmatprep.subr.mxu0 0.0
    %2922 = vmatpush1.msra.mxu0 0.0
    %2923 = vmatprep.subr.mxu0 0.0
    %2924 = vmatpush1.msra.mxu0 0.0
    %2925 = vmatprep.subr.mxu0 0.0
    %2926 = vmatpush1.msra.mxu0 0.0
    %2927 = vmatprep.subr.mxu0 0.0
    %2928 = vmatpush1.msra.mxu0 0.0
    %2929 = vmatprep.subr.mxu0 0.0
    %2930 = vmatpush1.msra.mxu0 0.0
    %2931 = vmatprep.subr.mxu0 0.0
    %2932 = vmatpush1.msra.mxu0 0.0
    %2933 = vmatprep.subr.mxu0 0.0
    %2934 = vmatpush1.msra.mxu0 0.0
    %2935 = vmatprep.subr.mxu0 %v2898
    %2936 = vmatpush1.msra.mxu0 %v2899
    %2937 = vmatprep.subr.mxu0 0.0
    %2938 = vmatpush2.msra.mxu0 0.0
    %2939 = vmatprep.subr.mxu0 0.0
    %2940 = vmatpush2.msra.mxu0 0.0
    %2941 = vmatprep.subr.mxu0 0.0
    %2942 = vmatpush2.msra.mxu0 0.0
    %2943 = vmatprep.subr.mxu0 0.0
    %2944 = vmatpush2.msra.mxu0 0.0
    %2945 = vmatprep.subr.mxu0 0.0
    %2946 = vmatpush2.msra.mxu0 0.0
    %2947 = vmatprep.subr.mxu0 0.0
    %2948 = vmatpush2.msra.mxu0 0.0
    %2949 = vmatprep.subr.mxu0 0.0
    %2950 = vmatpush2.msra.mxu0 0.0
    %2951 = vmatprep.subr.mxu0 0.0
    %2952 = vmatpush2.msra.mxu0 0.0
    %2953 = vmatprep.subr.mxu0 0.0
    %2954 = vmatpush2.msra.mxu0 0.0
    %2955 = vmatprep.subr.mxu0 0.0
    %2956 = vmatpush2.msra.mxu0 0.0
    %2957 = vmatprep.subr.mxu0 0.0
    %2958 = vmatpush2.msra.mxu0 0.0
    %2959 = vmatprep.subr.mxu0 0.0
    %2960 = vmatpush2.msra.mxu0 0.0
    %2961 = vmatprep.subr.mxu0 0.0
    %2962 = vmatpush2.msra.mxu0 0.0
    %2963 = vmatprep.subr.mxu0 0.0
    %2964 = vmatpush2.msra.mxu0 0.0
    %2965 = vmatprep.subr.mxu0 0.0
    %2966 = vmatpush2.msra.mxu0 0.0
    %2967 = vmatprep.subr.mxu0 0.0
    %2968 = vmatpush2.msra.mxu0 0.0
    %2969 = vmatprep.mubr.f32.mxu0 0.0
    %2970 = vmatmul.mubr.f32.gmra.mxu0 %v2903
    %v2971 = vpop.f32.mrf.mxu0
    %v2972 = vadd.f32 0.0, %v2971
    %v2973 = vpop.f32.mrf.mxu0
    %v2974 = vadd.f32 0.0, %v2973
    %2975 = vdwg.mxu0
    %2976 = vmatprep.subr.mxu0 0.0
    %2977 = vmatpush1.msra.mxu0 0.0
    %2978 = vmatprep.subr.mxu0 0.0
    %2979 = vmatpush1.msra.mxu0 0.0
    %2980 = vmatprep.subr.mxu0 0.0
    %2981 = vmatpush1.msra.mxu0 0.0
    %2982 = vmatprep.subr.mxu0 0.0
    %2983 = vmatpush1.msra.mxu0 0.0
    %2984 = vmatprep.subr.mxu0 0.0
    %2985 = vmatpush1.msra.mxu0 0.0
    %2986 = vmatprep.subr.mxu0 0.0
    %2987 = vmatpush1.msra.mxu0 0.0
    %2988 = vmatprep.subr.mxu0 0.0
    %2989 = vmatpush1.msra.mxu0 0.0
    %2990 = vmatprep.subr.mxu0 0.0
    %2991 = vmatpush1.msra.mxu0 0.0
    %2992 = vmatprep.subr.mxu0 0.0
    %2993 = vmatpush1.msra.mxu0 0.0
    %2994 = vmatprep.subr.mxu0 0.0
    %2995 = vmatpush1.msra.mxu0 0.0
    %2996 = vmatprep.subr.mxu0 0.0
    %2997 = vmatpush1.msra.mxu0 0.0
    %2998 = vmatprep.subr.mxu0 0.0
    %2999 = vmatpush1.msra.mxu0 0.0
    %3000 = vmatprep.subr.mxu0 0.0
    %3001 = vmatpush1.msra.mxu0 0.0
    %3002 = vmatprep.subr.mxu0 0.0
    %3003 = vmatpush1.msra.mxu0 0.0
    %3004 = vmatprep.subr.mxu0 0.0
    %3005 = vmatpush1.msra.mxu0 0.0
    %3006 = vmatprep.subr.mxu0 %v2896
    %3007 = vmatpush1.msra.mxu0 %v2897
    %3008 = vmatprep.subr.mxu0 0.0
    %3009 = vmatpush2.msra.mxu0 0.0
    %3010 = vmatprep.subr.mxu0 0.0
    %3011 = vmatpush2.msra.mxu0 0.0
    %3012 = vmatprep.subr.mxu0 0.0
    %3013 = vmatpush2.msra.mxu0 0.0
    %3014 = vmatprep.subr.mxu0 0.0
    %3015 = vmatpush2.msra.mxu0 0.0
    %3016 = vmatprep.subr.mxu0 0.0
    %3017 = vmatpush2.msra.mxu0 0.0
    %3018 = vmatprep.subr.mxu0 0.0
    %3019 = vmatpush2.msra.mxu0 0.0
    %3020 = vmatprep.subr.mxu0 0.0
    %3021 = vmatpush2.msra.mxu0 0.0
    %3022 = vmatprep.subr.mxu0 0.0
    %3023 = vmatpush2.msra.mxu0 0.0
    %3024 = vmatprep.subr.mxu0 0.0
    %3025 = vmatpush2.msra.mxu0 0.0
    %3026 = vmatprep.subr.mxu0 0.0
    %3027 = vmatpush2.msra.mxu0 0.0
    %3028 = vmatprep.subr.mxu0 0.0
    %3029 = vmatpush2.msra.mxu0 0.0
    %3030 = vmatprep.subr.mxu0 0.0
    %3031 = vmatpush2.msra.mxu0 0.0
    %3032 = vmatprep.subr.mxu0 0.0
    %3033 = vmatpush2.msra.mxu0 0.0
    %3034 = vmatprep.subr.mxu0 0.0
    %3035 = vmatpush2.msra.mxu0 0.0
    %3036 = vmatprep.subr.mxu0 0.0
    %3037 = vmatpush2.msra.mxu0 0.0
    %3038 = vmatprep.subr.mxu0 0.0
    %3039 = vmatpush2.msra.mxu0 0.0
    %3040 = vmatprep.mubr.f32.mxu0 0.0
    %3041 = vmatmul.mubr.f32.gmra.mxu0 %v2903
    %v3042 = vpop.f32.mrf.mxu0
    %v3043 = vadd.f32 0.0, %v3042
    %v3044 = vpop.f32.mrf.mxu0
    %v3045 = vadd.f32 0.0, %v3044
    %3046 = vdwg.mxu0
    %3047 = vmatprep.subr.mxu0 0.0
    %3048 = vmatpush1.msra.mxu0 0.0
    %3049 = vmatprep.subr.mxu0 0.0
    %3050 = vmatpush1.msra.mxu0 0.0
    %3051 = vmatprep.subr.mxu0 0.0
    %3052 = vmatpush1.msra.mxu0 0.0
    %3053 = vmatprep.subr.mxu0 0.0
    %3054 = vmatpush1.msra.mxu0 0.0
    %3055 = vmatprep.subr.mxu0 0.0
    %3056 = vmatpush1.msra.mxu0 0.0
    %3057 = vmatprep.subr.mxu0 0.0
    %3058 = vmatpush1.msra.mxu0 0.0
    %3059 = vmatprep.subr.mxu0 0.0
    %3060 = vmatpush1.msra.mxu0 0.0
    %3061 = vmatprep.subr.mxu0 0.0
    %3062 = vmatpush1.msra.mxu0 0.0
    %3063 = vmatprep.subr.mxu0 0.0
    %3064 = vmatpush1.msra.mxu0 0.0
    %3065 = vmatprep.subr.mxu0 0.0
    %3066 = vmatpush1.msra.mxu0 0.0
    %3067 = vmatprep.subr.mxu0 0.0
    %3068 = vmatpush1.msra.mxu0 0.0
    %3069 = vmatprep.subr.mxu0 0.0
    %3070 = vmatpush1.msra.mxu0 0.0
    %3071 = vmatprep.subr.mxu0 0.0
    %3072 = vmatpush1.msra.mxu0 0.0
    %3073 = vmatprep.subr.mxu0 0.0
    %3074 = vmatpush1.msra.mxu0 0.0
    %3075 = vmatprep.subr.mxu0 0.0
    %3076 = vmatpush1.msra.mxu0 0.0
    %3077 = vmatprep.subr.mxu0 %v2894
    %3078 = vmatpush1.msra.mxu0 %v2895
    %3079 = vmatprep.subr.mxu0 0.0
    %3080 = vmatpush2.msra.mxu0 0.0
    %3081 = vmatprep.subr.mxu0 0.0
    %3082 = vmatpush2.msra.mxu0 0.0
    %3083 = vmatprep.subr.mxu0 0.0
    %3084 = vmatpush2.msra.mxu0 0.0
    %3085 = vmatprep.subr.mxu0 0.0
    %3086 = vmatpush2.msra.mxu0 0.0
    %3087 = vmatprep.subr.mxu0 0.0
    %3088 = vmatpush2.msra.mxu0 0.0
    %3089 = vmatprep.subr.mxu0 0.0
    %3090 = vmatpush2.msra.mxu0 0.0
    %3091 = vmatprep.subr.mxu0 0.0
    %3092 = vmatpush2.msra.mxu0 0.0
    %3093 = vmatprep.subr.mxu0 0.0
    %3094 = vmatpush2.msra.mxu0 0.0
    %3095 = vmatprep.subr.mxu0 0.0
    %3096 = vmatpush2.msra.mxu0 0.0
    %3097 = vmatprep.subr.mxu0 0.0
    %3098 = vmatpush2.msra.mxu0 0.0
    %3099 = vmatprep.subr.mxu0 0.0
    %3100 = vmatpush2.msra.mxu0 0.0
    %3101 = vmatprep.subr.mxu0 0.0
    %3102 = vmatpush2.msra.mxu0 0.0
    %3103 = vmatprep.subr.mxu0 0.0
    %3104 = vmatpush2.msra.mxu0 0.0
    %3105 = vmatprep.subr.mxu0 0.0
    %3106 = vmatpush2.msra.mxu0 0.0
    %3107 = vmatprep.subr.mxu0 0.0
    %3108 = vmatpush2.msra.mxu0 0.0
    %3109 = vmatprep.subr.mxu0 0.0
    %3110 = vmatpush2.msra.mxu0 0.0
    %3111 = vmatprep.mubr.f32.mxu0 0.0
    %3112 = vmatmul.mubr.f32.gmra.mxu0 %v2903
    %v3113 = vpop.f32.mrf.mxu0
    %v3114 = vadd.f32 0.0, %v3113
    %v3115 = vpop.f32.mrf.mxu0
    %v3116 = vadd.f32 0.0, %v3115
    %3117 = vdwg.mxu0
    %v3118 = vadd.f32 %v2735, %v2972
    %v3119 = vadd.f32 %v2737, %v2974
    %v3120 = vadd.f32 %v2806, %v3043
    %v3121 = vadd.f32 %v2808, %v3045
    %v3122 = vadd.f32 %v2877, %v3114
    %v3123 = vadd.f32 %v2879, %v3116
    %3124 = vrot.lane.b32.xlu0 %v2401, 1
    %v3125 = vpop.permute.xlu0 %3124
    %3126 = vrot.lane.b32.xlu0 %v2402, 1
    %v3127 = vpop.permute.xlu0 %3126
    %3128 = vrot.lane.b32.xlu0 %v2403, 1
    %v3129 = vpop.permute.xlu0 %3128
    %3130 = vrot.lane.b32.xlu0 %v2404, 1
    %v3131 = vpop.permute.xlu0 %3130
    %3132 = vrot.lane.b32.xlu0 %v2405, 1
    %v3133 = vpop.permute.xlu0 %3132
    %3134 = vrot.lane.b32.xlu0 %v2406, 1
    %v3135 = vpop.permute.xlu0 %3134
    %vm3136 = vcmp.lt.s32.totalorder %v50, 1
    %v3137 = vsel %vm3136, %v3133, %v3135
    %v3138 = vsel %vm3136, %v3131, %v3133
    %v3139 = vsel %vm3136, %v3129, %v3131
    %v3140 = vsel %vm3136, %v3127, %v3129
    %v3141 = vsel %vm3136, %v3125, %v3127
    %v3142 = vsel %vm3136, %v3135, %v3125
    %s3143 = scalar_lea.vmem %s4, 24
    %v3144 = vld [vmem:[%s3143] sm:$0xff]
    %v3146 = vsel %vm2448, %v3144, 0
    %3148 = vmatprep.subr.mxu0 0.0
    %3149 = vmatpush1.msra.mxu0 0.0
    %3150 = vmatprep.subr.mxu0 0.0
    %3151 = vmatpush1.msra.mxu0 0.0
    %3152 = vmatprep.subr.mxu0 0.0
    %3153 = vmatpush1.msra.mxu0 0.0
    %3154 = vmatprep.subr.mxu0 0.0
    %3155 = vmatpush1.msra.mxu0 0.0
    %3156 = vmatprep.subr.mxu0 0.0
    %3157 = vmatpush1.msra.mxu0 0.0
    %3158 = vmatprep.subr.mxu0 0.0
    %3159 = vmatpush1.msra.mxu0 0.0
    %3160 = vmatprep.subr.mxu0 0.0
    %3161 = vmatpush1.msra.mxu0 0.0
    %3162 = vmatprep.subr.mxu0 0.0
    %3163 = vmatpush1.msra.mxu0 0.0
    %3164 = vmatprep.subr.mxu0 0.0
    %3165 = vmatpush1.msra.mxu0 0.0
    %3166 = vmatprep.subr.mxu0 0.0
    %3167 = vmatpush1.msra.mxu0 0.0
    %3168 = vmatprep.subr.mxu0 0.0
    %3169 = vmatpush1.msra.mxu0 0.0
    %3170 = vmatprep.subr.mxu0 0.0
    %3171 = vmatpush1.msra.mxu0 0.0
    %3172 = vmatprep.subr.mxu0 0.0
    %3173 = vmatpush1.msra.mxu0 0.0
    %3174 = vmatprep.subr.mxu0 0.0
    %3175 = vmatpush1.msra.mxu0 0.0
    %3176 = vmatprep.subr.mxu0 0.0
    %3177 = vmatpush1.msra.mxu0 0.0
    %3178 = vmatprep.subr.mxu0 %v3141
    %3179 = vmatpush1.msra.mxu0 %v3142
    %3180 = vmatprep.subr.mxu0 0.0
    %3181 = vmatpush2.msra.mxu0 0.0
    %3182 = vmatprep.subr.mxu0 0.0
    %3183 = vmatpush2.msra.mxu0 0.0
    %3184 = vmatprep.subr.mxu0 0.0
    %3185 = vmatpush2.msra.mxu0 0.0
    %3186 = vmatprep.subr.mxu0 0.0
    %3187 = vmatpush2.msra.mxu0 0.0
    %3188 = vmatprep.subr.mxu0 0.0
    %3189 = vmatpush2.msra.mxu0 0.0
    %3190 = vmatprep.subr.mxu0 0.0
    %3191 = vmatpush2.msra.mxu0 0.0
    %3192 = vmatprep.subr.mxu0 0.0
    %3193 = vmatpush2.msra.mxu0 0.0
    %3194 = vmatprep.subr.mxu0 0.0
    %3195 = vmatpush2.msra.mxu0 0.0
    %3196 = vmatprep.subr.mxu0 0.0
    %3197 = vmatpush2.msra.mxu0 0.0
    %3198 = vmatprep.subr.mxu0 0.0
    %3199 = vmatpush2.msra.mxu0 0.0
    %3200 = vmatprep.subr.mxu0 0.0
    %3201 = vmatpush2.msra.mxu0 0.0
    %3202 = vmatprep.subr.mxu0 0.0
    %3203 = vmatpush2.msra.mxu0 0.0
    %3204 = vmatprep.subr.mxu0 0.0
    %3205 = vmatpush2.msra.mxu0 0.0
    %3206 = vmatprep.subr.mxu0 0.0
    %3207 = vmatpush2.msra.mxu0 0.0
    %3208 = vmatprep.subr.mxu0 0.0
    %3209 = vmatpush2.msra.mxu0 0.0
    %3210 = vmatprep.subr.mxu0 0.0
    %3211 = vmatpush2.msra.mxu0 0.0
    %3212 = vmatprep.mubr.f32.mxu0 0.0
    %3213 = vmatmul.mubr.f32.gmra.mxu0 %v3146
    %v3214 = vpop.f32.mrf.mxu0
    %v3215 = vadd.f32 0.0, %v3214
    %v3216 = vpop.f32.mrf.mxu0
    %v3217 = vadd.f32 0.0, %v3216
    %3218 = vdwg.mxu0
    %3219 = vmatprep.subr.mxu0 0.0
    %3220 = vmatpush1.msra.mxu0 0.0
    %3221 = vmatprep.subr.mxu0 0.0
    %3222 = vmatpush1.msra.mxu0 0.0
    %3223 = vmatprep.subr.mxu0 0.0
    %3224 = vmatpush1.msra.mxu0 0.0
    %3225 = vmatprep.subr.mxu0 0.0
    %3226 = vmatpush1.msra.mxu0 0.0
    %3227 = vmatprep.subr.mxu0 0.0
    %3228 = vmatpush1.msra.mxu0 0.0
    %3229 = vmatprep.subr.mxu0 0.0
    %3230 = vmatpush1.msra.mxu0 0.0
    %3231 = vmatprep.subr.mxu0 0.0
    %3232 = vmatpush1.msra.mxu0 0.0
    %3233 = vmatprep.subr.mxu0 0.0
    %3234 = vmatpush1.msra.mxu0 0.0
    %3235 = vmatprep.subr.mxu0 0.0
    %3236 = vmatpush1.msra.mxu0 0.0
    %3237 = vmatprep.subr.mxu0 0.0
    %3238 = vmatpush1.msra.mxu0 0.0
    %3239 = vmatprep.subr.mxu0 0.0
    %3240 = vmatpush1.msra.mxu0 0.0
    %3241 = vmatprep.subr.mxu0 0.0
    %3242 = vmatpush1.msra.mxu0 0.0
    %3243 = vmatprep.subr.mxu0 0.0
    %3244 = vmatpush1.msra.mxu0 0.0
    %3245 = vmatprep.subr.mxu0 0.0
    %3246 = vmatpush1.msra.mxu0 0.0
    %3247 = vmatprep.subr.mxu0 0.0
    %3248 = vmatpush1.msra.mxu0 0.0
    %3249 = vmatprep.subr.mxu0 %v3139
    %3250 = vmatpush1.msra.mxu0 %v3140
    %3251 = vmatprep.subr.mxu0 0.0
    %3252 = vmatpush2.msra.mxu0 0.0
    %3253 = vmatprep.subr.mxu0 0.0
    %3254 = vmatpush2.msra.mxu0 0.0
    %3255 = vmatprep.subr.mxu0 0.0
    %3256 = vmatpush2.msra.mxu0 0.0
    %3257 = vmatprep.subr.mxu0 0.0
    %3258 = vmatpush2.msra.mxu0 0.0
    %3259 = vmatprep.subr.mxu0 0.0
    %3260 = vmatpush2.msra.mxu0 0.0
    %3261 = vmatprep.subr.mxu0 0.0
    %3262 = vmatpush2.msra.mxu0 0.0
    %3263 = vmatprep.subr.mxu0 0.0
    %3264 = vmatpush2.msra.mxu0 0.0
    %3265 = vmatprep.subr.mxu0 0.0
    %3266 = vmatpush2.msra.mxu0 0.0
    %3267 = vmatprep.subr.mxu0 0.0
    %3268 = vmatpush2.msra.mxu0 0.0
    %3269 = vmatprep.subr.mxu0 0.0
    %3270 = vmatpush2.msra.mxu0 0.0
    %3271 = vmatprep.subr.mxu0 0.0
    %3272 = vmatpush2.msra.mxu0 0.0
    %3273 = vmatprep.subr.mxu0 0.0
    %3274 = vmatpush2.msra.mxu0 0.0
    %3275 = vmatprep.subr.mxu0 0.0
    %3276 = vmatpush2.msra.mxu0 0.0
    %3277 = vmatprep.subr.mxu0 0.0
    %3278 = vmatpush2.msra.mxu0 0.0
    %3279 = vmatprep.subr.mxu0 0.0
    %3280 = vmatpush2.msra.mxu0 0.0
    %3281 = vmatprep.subr.mxu0 0.0
    %3282 = vmatpush2.msra.mxu0 0.0
    %3283 = vmatprep.mubr.f32.mxu0 0.0
    %3284 = vmatmul.mubr.f32.gmra.mxu0 %v3146
    %v3285 = vpop.f32.mrf.mxu0
    %v3286 = vadd.f32 0.0, %v3285
    %v3287 = vpop.f32.mrf.mxu0
    %v3288 = vadd.f32 0.0, %v3287
    %3289 = vdwg.mxu0
    %3290 = vmatprep.subr.mxu0 0.0
    %3291 = vmatpush1.msra.mxu0 0.0
    %3292 = vmatprep.subr.mxu0 0.0
    %3293 = vmatpush1.msra.mxu0 0.0
    %3294 = vmatprep.subr.mxu0 0.0
    %3295 = vmatpush1.msra.mxu0 0.0
    %3296 = vmatprep.subr.mxu0 0.0
    %3297 = vmatpush1.msra.mxu0 0.0
    %3298 = vmatprep.subr.mxu0 0.0
    %3299 = vmatpush1.msra.mxu0 0.0
    %3300 = vmatprep.subr.mxu0 0.0
    %3301 = vmatpush1.msra.mxu0 0.0
    %3302 = vmatprep.subr.mxu0 0.0
    %3303 = vmatpush1.msra.mxu0 0.0
    %3304 = vmatprep.subr.mxu0 0.0
    %3305 = vmatpush1.msra.mxu0 0.0
    %3306 = vmatprep.subr.mxu0 0.0
    %3307 = vmatpush1.msra.mxu0 0.0
    %3308 = vmatprep.subr.mxu0 0.0
    %3309 = vmatpush1.msra.mxu0 0.0
    %3310 = vmatprep.subr.mxu0 0.0
    %3311 = vmatpush1.msra.mxu0 0.0
    %3312 = vmatprep.subr.mxu0 0.0
    %3313 = vmatpush1.msra.mxu0 0.0
    %3314 = vmatprep.subr.mxu0 0.0
    %3315 = vmatpush1.msra.mxu0 0.0
    %3316 = vmatprep.subr.mxu0 0.0
    %3317 = vmatpush1.msra.mxu0 0.0
    %3318 = vmatprep.subr.mxu0 0.0
    %3319 = vmatpush1.msra.mxu0 0.0
    %3320 = vmatprep.subr.mxu0 %v3137
    %3321 = vmatpush1.msra.mxu0 %v3138
    %3322 = vmatprep.subr.mxu0 0.0
    %3323 = vmatpush2.msra.mxu0 0.0
    %3324 = vmatprep.subr.mxu0 0.0
    %3325 = vmatpush2.msra.mxu0 0.0
    %3326 = vmatprep.subr.mxu0 0.0
    %3327 = vmatpush2.msra.mxu0 0.0
    %3328 = vmatprep.subr.mxu0 0.0
    %3329 = vmatpush2.msra.mxu0 0.0
    %3330 = vmatprep.subr.mxu0 0.0
    %3331 = vmatpush2.msra.mxu0 0.0
    %3332 = vmatprep.subr.mxu0 0.0
    %3333 = vmatpush2.msra.mxu0 0.0
    %3334 = vmatprep.subr.mxu0 0.0
    %3335 = vmatpush2.msra.mxu0 0.0
    %3336 = vmatprep.subr.mxu0 0.0
    %3337 = vmatpush2.msra.mxu0 0.0
    %3338 = vmatprep.subr.mxu0 0.0
    %3339 = vmatpush2.msra.mxu0 0.0
    %3340 = vmatprep.subr.mxu0 0.0
    %3341 = vmatpush2.msra.mxu0 0.0
    %3342 = vmatprep.subr.mxu0 0.0
    %3343 = vmatpush2.msra.mxu0 0.0
    %3344 = vmatprep.subr.mxu0 0.0
    %3345 = vmatpush2.msra.mxu0 0.0
    %3346 = vmatprep.subr.mxu0 0.0
    %3347 = vmatpush2.msra.mxu0 0.0
    %3348 = vmatprep.subr.mxu0 0.0
    %3349 = vmatpush2.msra.mxu0 0.0
    %3350 = vmatprep.subr.mxu0 0.0
    %3351 = vmatpush2.msra.mxu0 0.0
    %3352 = vmatprep.subr.mxu0 0.0
    %3353 = vmatpush2.msra.mxu0 0.0
    %3354 = vmatprep.mubr.f32.mxu0 0.0
    %3355 = vmatmul.mubr.f32.gmra.mxu0 %v3146
    %v3356 = vpop.f32.mrf.mxu0
    %v3357 = vadd.f32 0.0, %v3356
    %v3358 = vpop.f32.mrf.mxu0
    %v3359 = vadd.f32 0.0, %v3358
    %3360 = vdwg.mxu0
    %v3361 = vadd.f32 %v3118, %v3215
    %v3362 = vadd.f32 %v3119, %v3217
    %v3363 = vadd.f32 %v3120, %v3286
    %v3364 = vadd.f32 %v3121, %v3288
    %v3365 = vadd.f32 %v3122, %v3357
    %v3366 = vadd.f32 %v3123, %v3359
    %s3367 = scalar_lea.vmem %s4, 32
    %v3368 = vld [vmem:[%s3367] sm:$0xff]
    %v3370 = vsel %vm2448, %v3368, 0
    %3372 = vmatprep.subr.mxu0 0.0
    %3373 = vmatpush1.msra.mxu0 0.0
    %3374 = vmatprep.subr.mxu0 0.0
    %3375 = vmatpush1.msra.mxu0 0.0
    %3376 = vmatprep.subr.mxu0 0.0
    %3377 = vmatpush1.msra.mxu0 0.0
    %3378 = vmatprep.subr.mxu0 0.0
    %3379 = vmatpush1.msra.mxu0 0.0
    %3380 = vmatprep.subr.mxu0 0.0
    %3381 = vmatpush1.msra.mxu0 0.0
    %3382 = vmatprep.subr.mxu0 0.0
    %3383 = vmatpush1.msra.mxu0 0.0
    %3384 = vmatprep.subr.mxu0 0.0
    %3385 = vmatpush1.msra.mxu0 0.0
    %3386 = vmatprep.subr.mxu0 0.0
    %3387 = vmatpush1.msra.mxu0 0.0
    %3388 = vmatprep.subr.mxu0 0.0
    %3389 = vmatpush1.msra.mxu0 0.0
    %3390 = vmatprep.subr.mxu0 0.0
    %3391 = vmatpush1.msra.mxu0 0.0
    %3392 = vmatprep.subr.mxu0 0.0
    %3393 = vmatpush1.msra.mxu0 0.0
    %3394 = vmatprep.subr.mxu0 0.0
    %3395 = vmatpush1.msra.mxu0 0.0
    %3396 = vmatprep.subr.mxu0 0.0
    %3397 = vmatpush1.msra.mxu0 0.0
    %3398 = vmatprep.subr.mxu0 0.0
    %3399 = vmatpush1.msra.mxu0 0.0
    %3400 = vmatprep.subr.mxu0 0.0
    %3401 = vmatpush1.msra.mxu0 0.0
    %3402 = vmatprep.subr.mxu0 %v2402
    %3403 = vmatpush1.msra.mxu0 %v2401
    %3404 = vmatprep.subr.mxu0 0.0
    %3405 = vmatpush2.msra.mxu0 0.0
    %3406 = vmatprep.subr.mxu0 0.0
    %3407 = vmatpush2.msra.mxu0 0.0
    %3408 = vmatprep.subr.mxu0 0.0
    %3409 = vmatpush2.msra.mxu0 0.0
    %3410 = vmatprep.subr.mxu0 0.0
    %3411 = vmatpush2.msra.mxu0 0.0
    %3412 = vmatprep.subr.mxu0 0.0
    %3413 = vmatpush2.msra.mxu0 0.0
    %3414 = vmatprep.subr.mxu0 0.0
    %3415 = vmatpush2.msra.mxu0 0.0
    %3416 = vmatprep.subr.mxu0 0.0
    %3417 = vmatpush2.msra.mxu0 0.0
    %3418 = vmatprep.subr.mxu0 0.0
    %3419 = vmatpush2.msra.mxu0 0.0
    %3420 = vmatprep.subr.mxu0 0.0
    %3421 = vmatpush2.msra.mxu0 0.0
    %3422 = vmatprep.subr.mxu0 0.0
    %3423 = vmatpush2.msra.mxu0 0.0
    %3424 = vmatprep.subr.mxu0 0.0
    %3425 = vmatpush2.msra.mxu0 0.0
    %3426 = vmatprep.subr.mxu0 0.0
    %3427 = vmatpush2.msra.mxu0 0.0
    %3428 = vmatprep.subr.mxu0 0.0
    %3429 = vmatpush2.msra.mxu0 0.0
    %3430 = vmatprep.subr.mxu0 0.0
    %3431 = vmatpush2.msra.mxu0 0.0
    %3432 = vmatprep.subr.mxu0 0.0
    %3433 = vmatpush2.msra.mxu0 0.0
    %3434 = vmatprep.subr.mxu0 0.0
    %3435 = vmatpush2.msra.mxu0 0.0
    %3436 = vmatprep.mubr.f32.mxu0 0.0
    %3437 = vmatmul.mubr.f32.gmra.mxu0 %v3370
    %v3438 = vpop.f32.mrf.mxu0
    %v3439 = vadd.f32 0.0, %v3438
    %v3440 = vpop.f32.mrf.mxu0
    %v3441 = vadd.f32 0.0, %v3440
    %3442 = vdwg.mxu0
    %3443 = vmatprep.subr.mxu0 0.0
    %3444 = vmatpush1.msra.mxu0 0.0
    %3445 = vmatprep.subr.mxu0 0.0
    %3446 = vmatpush1.msra.mxu0 0.0
    %3447 = vmatprep.subr.mxu0 0.0
    %3448 = vmatpush1.msra.mxu0 0.0
    %3449 = vmatprep.subr.mxu0 0.0
    %3450 = vmatpush1.msra.mxu0 0.0
    %3451 = vmatprep.subr.mxu0 0.0
    %3452 = vmatpush1.msra.mxu0 0.0
    %3453 = vmatprep.subr.mxu0 0.0
    %3454 = vmatpush1.msra.mxu0 0.0
    %3455 = vmatprep.subr.mxu0 0.0
    %3456 = vmatpush1.msra.mxu0 0.0
    %3457 = vmatprep.subr.mxu0 0.0
    %3458 = vmatpush1.msra.mxu0 0.0
    %3459 = vmatprep.subr.mxu0 0.0
    %3460 = vmatpush1.msra.mxu0 0.0
    %3461 = vmatprep.subr.mxu0 0.0
    %3462 = vmatpush1.msra.mxu0 0.0
    %3463 = vmatprep.subr.mxu0 0.0
    %3464 = vmatpush1.msra.mxu0 0.0
    %3465 = vmatprep.subr.mxu0 0.0
    %3466 = vmatpush1.msra.mxu0 0.0
    %3467 = vmatprep.subr.mxu0 0.0
    %3468 = vmatpush1.msra.mxu0 0.0
    %3469 = vmatprep.subr.mxu0 0.0
    %3470 = vmatpush1.msra.mxu0 0.0
    %3471 = vmatprep.subr.mxu0 0.0
    %3472 = vmatpush1.msra.mxu0 0.0
    %3473 = vmatprep.subr.mxu0 %v2404
    %3474 = vmatpush1.msra.mxu0 %v2403
    %3475 = vmatprep.subr.mxu0 0.0
    %3476 = vmatpush2.msra.mxu0 0.0
    %3477 = vmatprep.subr.mxu0 0.0
    %3478 = vmatpush2.msra.mxu0 0.0
    %3479 = vmatprep.subr.mxu0 0.0
    %3480 = vmatpush2.msra.mxu0 0.0
    %3481 = vmatprep.subr.mxu0 0.0
    %3482 = vmatpush2.msra.mxu0 0.0
    %3483 = vmatprep.subr.mxu0 0.0
    %3484 = vmatpush2.msra.mxu0 0.0
    %3485 = vmatprep.subr.mxu0 0.0
    %3486 = vmatpush2.msra.mxu0 0.0
    %3487 = vmatprep.subr.mxu0 0.0
    %3488 = vmatpush2.msra.mxu0 0.0
    %3489 = vmatprep.subr.mxu0 0.0
    %3490 = vmatpush2.msra.mxu0 0.0
    %3491 = vmatprep.subr.mxu0 0.0
    %3492 = vmatpush2.msra.mxu0 0.0
    %3493 = vmatprep.subr.mxu0 0.0
    %3494 = vmatpush2.msra.mxu0 0.0
    %3495 = vmatprep.subr.mxu0 0.0
    %3496 = vmatpush2.msra.mxu0 0.0
    %3497 = vmatprep.subr.mxu0 0.0
    %3498 = vmatpush2.msra.mxu0 0.0
    %3499 = vmatprep.subr.mxu0 0.0
    %3500 = vmatpush2.msra.mxu0 0.0
    %3501 = vmatprep.subr.mxu0 0.0
    %3502 = vmatpush2.msra.mxu0 0.0
    %3503 = vmatprep.subr.mxu0 0.0
    %3504 = vmatpush2.msra.mxu0 0.0
    %3505 = vmatprep.subr.mxu0 0.0
    %3506 = vmatpush2.msra.mxu0 0.0
    %3507 = vmatprep.mubr.f32.mxu0 0.0
    %3508 = vmatmul.mubr.f32.gmra.mxu0 %v3370
    %v3509 = vpop.f32.mrf.mxu0
    %v3510 = vadd.f32 0.0, %v3509
    %v3511 = vpop.f32.mrf.mxu0
    %v3512 = vadd.f32 0.0, %v3511
    %3513 = vdwg.mxu0
    %3514 = vmatprep.subr.mxu0 0.0
    %3515 = vmatpush1.msra.mxu0 0.0
    %3516 = vmatprep.subr.mxu0 0.0
    %3517 = vmatpush1.msra.mxu0 0.0
    %3518 = vmatprep.subr.mxu0 0.0
    %3519 = vmatpush1.msra.mxu0 0.0
    %3520 = vmatprep.subr.mxu0 0.0
    %3521 = vmatpush1.msra.mxu0 0.0
    %3522 = vmatprep.subr.mxu0 0.0
    %3523 = vmatpush1.msra.mxu0 0.0
    %3524 = vmatprep.subr.mxu0 0.0
    %3525 = vmatpush1.msra.mxu0 0.0
    %3526 = vmatprep.subr.mxu0 0.0
    %3527 = vmatpush1.msra.mxu0 0.0
    %3528 = vmatprep.subr.mxu0 0.0
    %3529 = vmatpush1.msra.mxu0 0.0
    %3530 = vmatprep.subr.mxu0 0.0
    %3531 = vmatpush1.msra.mxu0 0.0
    %3532 = vmatprep.subr.mxu0 0.0
    %3533 = vmatpush1.msra.mxu0 0.0
    %3534 = vmatprep.subr.mxu0 0.0
    %3535 = vmatpush1.msra.mxu0 0.0
    %3536 = vmatprep.subr.mxu0 0.0
    %3537 = vmatpush1.msra.mxu0 0.0
    %3538 = vmatprep.subr.mxu0 0.0
    %3539 = vmatpush1.msra.mxu0 0.0
    %3540 = vmatprep.subr.mxu0 0.0
    %3541 = vmatpush1.msra.mxu0 0.0
    %3542 = vmatprep.subr.mxu0 0.0
    %3543 = vmatpush1.msra.mxu0 0.0
    %3544 = vmatprep.subr.mxu0 %v2406
    %3545 = vmatpush1.msra.mxu0 %v2405
    %3546 = vmatprep.subr.mxu0 0.0
    %3547 = vmatpush2.msra.mxu0 0.0
    %3548 = vmatprep.subr.mxu0 0.0
    %3549 = vmatpush2.msra.mxu0 0.0
    %3550 = vmatprep.subr.mxu0 0.0
    %3551 = vmatpush2.msra.mxu0 0.0
    %3552 = vmatprep.subr.mxu0 0.0
    %3553 = vmatpush2.msra.mxu0 0.0
    %3554 = vmatprep.subr.mxu0 0.0
    %3555 = vmatpush2.msra.mxu0 0.0
    %3556 = vmatprep.subr.mxu0 0.0
    %3557 = vmatpush2.msra.mxu0 0.0
    %3558 = vmatprep.subr.mxu0 0.0
    %3559 = vmatpush2.msra.mxu0 0.0
    %3560 = vmatprep.subr.mxu0 0.0
    %3561 = vmatpush2.msra.mxu0 0.0
    %3562 = vmatprep.subr.mxu0 0.0
    %3563 = vmatpush2.msra.mxu0 0.0
    %3564 = vmatprep.subr.mxu0 0.0
    %3565 = vmatpush2.msra.mxu0 0.0
    %3566 = vmatprep.subr.mxu0 0.0
    %3567 = vmatpush2.msra.mxu0 0.0
    %3568 = vmatprep.subr.mxu0 0.0
    %3569 = vmatpush2.msra.mxu0 0.0
    %3570 = vmatprep.subr.mxu0 0.0
    %3571 = vmatpush2.msra.mxu0 0.0
    %3572 = vmatprep.subr.mxu0 0.0
    %3573 = vmatpush2.msra.mxu0 0.0
    %3574 = vmatprep.subr.mxu0 0.0
    %3575 = vmatpush2.msra.mxu0 0.0
    %3576 = vmatprep.subr.mxu0 0.0
    %3577 = vmatpush2.msra.mxu0 0.0
    %3578 = vmatprep.mubr.f32.mxu0 0.0
    %3579 = vmatmul.mubr.f32.gmra.mxu0 %v3370
    %v3580 = vpop.f32.mrf.mxu0
    %v3581 = vadd.f32 0.0, %v3580
    %v3582 = vpop.f32.mrf.mxu0
    %v3583 = vadd.f32 0.0, %v3582
    %3584 = vdwg.mxu0
    %v3585 = vadd.f32 %v3361, %v3439
    %v3586 = vadd.f32 %v3362, %v3441
    %v3587 = vadd.f32 %v3363, %v3510
    %v3588 = vadd.f32 %v3364, %v3512
    %v3589 = vadd.f32 %v3365, %v3581
    %v3590 = vadd.f32 %v3366, %v3583
    %3591 = vrot.lane.b32.xlu0 %v2401, 127
    %v3592 = vpop.permute.xlu0 %3591
    %3593 = vrot.lane.b32.xlu0 %v2402, 127
    %v3594 = vpop.permute.xlu0 %3593
    %3595 = vrot.lane.b32.xlu0 %v2403, 127
    %v3596 = vpop.permute.xlu0 %3595
    %3597 = vrot.lane.b32.xlu0 %v2404, 127
    %v3598 = vpop.permute.xlu0 %3597
    %3599 = vrot.lane.b32.xlu0 %v2405, 127
    %v3600 = vpop.permute.xlu0 %3599
    %3601 = vrot.lane.b32.xlu0 %v2406, 127
    %v3602 = vpop.permute.xlu0 %3601
    %v3603 = vsel %vm51, %v3600, %v3602
    %v3604 = vsel %vm51, %v3598, %v3600
    %v3605 = vsel %vm51, %v3596, %v3598
    %v3606 = vsel %vm51, %v3594, %v3596
    %v3607 = vsel %vm51, %v3592, %v3594
    %v3608 = vsel %vm51, %v3602, %v3592
    %s3609 = scalar_lea.vmem %s4, 40
    %v3610 = vld [vmem:[%s3609] sm:$0xff]
    %v3612 = vsel %vm2448, %v3610, 0
    %3614 = vmatprep.subr.mxu0 0.0
    %3615 = vmatpush1.msra.mxu0 0.0
    %3616 = vmatprep.subr.mxu0 0.0
    %3617 = vmatpush1.msra.mxu0 0.0
    %3618 = vmatprep.subr.mxu0 0.0
    %3619 = vmatpush1.msra.mxu0 0.0
    %3620 = vmatprep.subr.mxu0 0.0
    %3621 = vmatpush1.msra.mxu0 0.0
    %3622 = vmatprep.subr.mxu0 0.0
    %3623 = vmatpush1.msra.mxu0 0.0
    %3624 = vmatprep.subr.mxu0 0.0
    %3625 = vmatpush1.msra.mxu0 0.0
    %3626 = vmatprep.subr.mxu0 0.0
    %3627 = vmatpush1.msra.mxu0 0.0
    %3628 = vmatprep.subr.mxu0 0.0
    %3629 = vmatpush1.msra.mxu0 0.0
    %3630 = vmatprep.subr.mxu0 0.0
    %3631 = vmatpush1.msra.mxu0 0.0
    %3632 = vmatprep.subr.mxu0 0.0
    %3633 = vmatpush1.msra.mxu0 0.0
    %3634 = vmatprep.subr.mxu0 0.0
    %3635 = vmatpush1.msra.mxu0 0.0
    %3636 = vmatprep.subr.mxu0 0.0
    %3637 = vmatpush1.msra.mxu0 0.0
    %3638 = vmatprep.subr.mxu0 0.0
    %3639 = vmatpush1.msra.mxu0 0.0
    %3640 = vmatprep.subr.mxu0 0.0
    %3641 = vmatpush1.msra.mxu0 0.0
    %3642 = vmatprep.subr.mxu0 0.0
    %3643 = vmatpush1.msra.mxu0 0.0
    %3644 = vmatprep.subr.mxu0 %v3606
    %3645 = vmatpush1.msra.mxu0 %v3607
    %3646 = vmatprep.subr.mxu0 0.0
    %3647 = vmatpush2.msra.mxu0 0.0
    %3648 = vmatprep.subr.mxu0 0.0
    %3649 = vmatpush2.msra.mxu0 0.0
    %3650 = vmatprep.subr.mxu0 0.0
    %3651 = vmatpush2.msra.mxu0 0.0
    %3652 = vmatprep.subr.mxu0 0.0
    %3653 = vmatpush2.msra.mxu0 0.0
    %3654 = vmatprep.subr.mxu0 0.0
    %3655 = vmatpush2.msra.mxu0 0.0
    %3656 = vmatprep.subr.mxu0 0.0
    %3657 = vmatpush2.msra.mxu0 0.0
    %3658 = vmatprep.subr.mxu0 0.0
    %3659 = vmatpush2.msra.mxu0 0.0
    %3660 = vmatprep.subr.mxu0 0.0
    %3661 = vmatpush2.msra.mxu0 0.0
    %3662 = vmatprep.subr.mxu0 0.0
    %3663 = vmatpush2.msra.mxu0 0.0
    %3664 = vmatprep.subr.mxu0 0.0
    %3665 = vmatpush2.msra.mxu0 0.0
    %3666 = vmatprep.subr.mxu0 0.0
    %3667 = vmatpush2.msra.mxu0 0.0
    %3668 = vmatprep.subr.mxu0 0.0
    %3669 = vmatpush2.msra.mxu0 0.0
    %3670 = vmatprep.subr.mxu0 0.0
    %3671 = vmatpush2.msra.mxu0 0.0
    %3672 = vmatprep.subr.mxu0 0.0
    %3673 = vmatpush2.msra.mxu0 0.0
    %3674 = vmatprep.subr.mxu0 0.0
    %3675 = vmatpush2.msra.mxu0 0.0
    %3676 = vmatprep.subr.mxu0 0.0
    %3677 = vmatpush2.msra.mxu0 0.0
    %3678 = vmatprep.mubr.f32.mxu0 0.0
    %3679 = vmatmul.mubr.f32.gmra.mxu0 %v3612
    %v3680 = vpop.f32.mrf.mxu0
    %v3681 = vadd.f32 0.0, %v3680
    %v3682 = vpop.f32.mrf.mxu0
    %v3683 = vadd.f32 0.0, %v3682
    %3684 = vdwg.mxu0
    %3685 = vmatprep.subr.mxu0 0.0
    %3686 = vmatpush1.msra.mxu0 0.0
    %3687 = vmatprep.subr.mxu0 0.0
    %3688 = vmatpush1.msra.mxu0 0.0
    %3689 = vmatprep.subr.mxu0 0.0
    %3690 = vmatpush1.msra.mxu0 0.0
    %3691 = vmatprep.subr.mxu0 0.0
    %3692 = vmatpush1.msra.mxu0 0.0
    %3693 = vmatprep.subr.mxu0 0.0
    %3694 = vmatpush1.msra.mxu0 0.0
    %3695 = vmatprep.subr.mxu0 0.0
    %3696 = vmatpush1.msra.mxu0 0.0
    %3697 = vmatprep.subr.mxu0 0.0
    %3698 = vmatpush1.msra.mxu0 0.0
    %3699 = vmatprep.subr.mxu0 0.0
    %3700 = vmatpush1.msra.mxu0 0.0
    %3701 = vmatprep.subr.mxu0 0.0
    %3702 = vmatpush1.msra.mxu0 0.0
    %3703 = vmatprep.subr.mxu0 0.0
    %3704 = vmatpush1.msra.mxu0 0.0
    %3705 = vmatprep.subr.mxu0 0.0
    %3706 = vmatpush1.msra.mxu0 0.0
    %3707 = vmatprep.subr.mxu0 0.0
    %3708 = vmatpush1.msra.mxu0 0.0
    %3709 = vmatprep.subr.mxu0 0.0
    %3710 = vmatpush1.msra.mxu0 0.0
    %3711 = vmatprep.subr.mxu0 0.0
    %3712 = vmatpush1.msra.mxu0 0.0
    %3713 = vmatprep.subr.mxu0 0.0
    %3714 = vmatpush1.msra.mxu0 0.0
    %3715 = vmatprep.subr.mxu0 %v3604
    %3716 = vmatpush1.msra.mxu0 %v3605
    %3717 = vmatprep.subr.mxu0 0.0
    %3718 = vmatpush2.msra.mxu0 0.0
    %3719 = vmatprep.subr.mxu0 0.0
    %3720 = vmatpush2.msra.mxu0 0.0
    %3721 = vmatprep.subr.mxu0 0.0
    %3722 = vmatpush2.msra.mxu0 0.0
    %3723 = vmatprep.subr.mxu0 0.0
    %3724 = vmatpush2.msra.mxu0 0.0
    %3725 = vmatprep.subr.mxu0 0.0
    %3726 = vmatpush2.msra.mxu0 0.0
    %3727 = vmatprep.subr.mxu0 0.0
    %3728 = vmatpush2.msra.mxu0 0.0
    %3729 = vmatprep.subr.mxu0 0.0
    %3730 = vmatpush2.msra.mxu0 0.0
    %3731 = vmatprep.subr.mxu0 0.0
    %3732 = vmatpush2.msra.mxu0 0.0
    %3733 = vmatprep.subr.mxu0 0.0
    %3734 = vmatpush2.msra.mxu0 0.0
    %3735 = vmatprep.subr.mxu0 0.0
    %3736 = vmatpush2.msra.mxu0 0.0
    %3737 = vmatprep.subr.mxu0 0.0
    %3738 = vmatpush2.msra.mxu0 0.0
    %3739 = vmatprep.subr.mxu0 0.0
    %3740 = vmatpush2.msra.mxu0 0.0
    %3741 = vmatprep.subr.mxu0 0.0
    %3742 = vmatpush2.msra.mxu0 0.0
    %3743 = vmatprep.subr.mxu0 0.0
    %3744 = vmatpush2.msra.mxu0 0.0
    %3745 = vmatprep.subr.mxu0 0.0
    %3746 = vmatpush2.msra.mxu0 0.0
    %3747 = vmatprep.subr.mxu0 0.0
    %3748 = vmatpush2.msra.mxu0 0.0
    %3749 = vmatprep.mubr.f32.mxu0 0.0
    %3750 = vmatmul.mubr.f32.gmra.mxu0 %v3612
    %v3751 = vpop.f32.mrf.mxu0
    %v3752 = vadd.f32 0.0, %v3751
    %v3753 = vpop.f32.mrf.mxu0
    %v3754 = vadd.f32 0.0, %v3753
    %3755 = vdwg.mxu0
    %3756 = vmatprep.subr.mxu0 0.0
    %3757 = vmatpush1.msra.mxu0 0.0
    %3758 = vmatprep.subr.mxu0 0.0
    %3759 = vmatpush1.msra.mxu0 0.0
    %3760 = vmatprep.subr.mxu0 0.0
    %3761 = vmatpush1.msra.mxu0 0.0
    %3762 = vmatprep.subr.mxu0 0.0
    %3763 = vmatpush1.msra.mxu0 0.0
    %3764 = vmatprep.subr.mxu0 0.0
    %3765 = vmatpush1.msra.mxu0 0.0
    %3766 = vmatprep.subr.mxu0 0.0
    %3767 = vmatpush1.msra.mxu0 0.0
    %3768 = vmatprep.subr.mxu0 0.0
    %3769 = vmatpush1.msra.mxu0 0.0
    %3770 = vmatprep.subr.mxu0 0.0
    %3771 = vmatpush1.msra.mxu0 0.0
    %3772 = vmatprep.subr.mxu0 0.0
    %3773 = vmatpush1.msra.mxu0 0.0
    %3774 = vmatprep.subr.mxu0 0.0
    %3775 = vmatpush1.msra.mxu0 0.0
    %3776 = vmatprep.subr.mxu0 0.0
    %3777 = vmatpush1.msra.mxu0 0.0
    %3778 = vmatprep.subr.mxu0 0.0
    %3779 = vmatpush1.msra.mxu0 0.0
    %3780 = vmatprep.subr.mxu0 0.0
    %3781 = vmatpush1.msra.mxu0 0.0
    %3782 = vmatprep.subr.mxu0 0.0
    %3783 = vmatpush1.msra.mxu0 0.0
    %3784 = vmatprep.subr.mxu0 0.0
    %3785 = vmatpush1.msra.mxu0 0.0
    %3786 = vmatprep.subr.mxu0 %v3608
    %3787 = vmatpush1.msra.mxu0 %v3603
    %3788 = vmatprep.subr.mxu0 0.0
    %3789 = vmatpush2.msra.mxu0 0.0
    %3790 = vmatprep.subr.mxu0 0.0
    %3791 = vmatpush2.msra.mxu0 0.0
    %3792 = vmatprep.subr.mxu0 0.0
    %3793 = vmatpush2.msra.mxu0 0.0
    %3794 = vmatprep.subr.mxu0 0.0
    %3795 = vmatpush2.msra.mxu0 0.0
    %3796 = vmatprep.subr.mxu0 0.0
    %3797 = vmatpush2.msra.mxu0 0.0
    %3798 = vmatprep.subr.mxu0 0.0
    %3799 = vmatpush2.msra.mxu0 0.0
    %3800 = vmatprep.subr.mxu0 0.0
    %3801 = vmatpush2.msra.mxu0 0.0
    %3802 = vmatprep.subr.mxu0 0.0
    %3803 = vmatpush2.msra.mxu0 0.0
    %3804 = vmatprep.subr.mxu0 0.0
    %3805 = vmatpush2.msra.mxu0 0.0
    %3806 = vmatprep.subr.mxu0 0.0
    %3807 = vmatpush2.msra.mxu0 0.0
    %3808 = vmatprep.subr.mxu0 0.0
    %3809 = vmatpush2.msra.mxu0 0.0
    %3810 = vmatprep.subr.mxu0 0.0
    %3811 = vmatpush2.msra.mxu0 0.0
    %3812 = vmatprep.subr.mxu0 0.0
    %3813 = vmatpush2.msra.mxu0 0.0
    %3814 = vmatprep.subr.mxu0 0.0
    %3815 = vmatpush2.msra.mxu0 0.0
    %3816 = vmatprep.subr.mxu0 0.0
    %3817 = vmatpush2.msra.mxu0 0.0
    %3818 = vmatprep.subr.mxu0 0.0
    %3819 = vmatpush2.msra.mxu0 0.0
    %3820 = vmatprep.mubr.f32.mxu0 0.0
    %3821 = vmatmul.mubr.f32.gmra.mxu0 %v3612
    %v3822 = vpop.f32.mrf.mxu0
    %v3823 = vadd.f32 0.0, %v3822
    %v3824 = vpop.f32.mrf.mxu0
    %v3825 = vadd.f32 0.0, %v3824
    %3826 = vdwg.mxu0
    %v3827 = vadd.f32 %v3585, %v3681
    %v3828 = vadd.f32 %v3586, %v3683
    %v3829 = vadd.f32 %v3587, %v3752
    %v3830 = vadd.f32 %v3588, %v3754
    %v3831 = vadd.f32 %v3589, %v3823
    %v3832 = vadd.f32 %v3590, %v3825
    %3833 = vrot.lane.b32.xlu0 %v2401, 111
    %v3834 = vpop.permute.xlu0 %3833
    %3835 = vrot.lane.b32.xlu0 %v2402, 111
    %v3836 = vpop.permute.xlu0 %3835
    %3837 = vrot.lane.b32.xlu0 %v2403, 111
    %v3838 = vpop.permute.xlu0 %3837
    %3839 = vrot.lane.b32.xlu0 %v2404, 111
    %v3840 = vpop.permute.xlu0 %3839
    %3841 = vrot.lane.b32.xlu0 %v2405, 111
    %v3842 = vpop.permute.xlu0 %3841
    %3843 = vrot.lane.b32.xlu0 %v2406, 111
    %v3844 = vpop.permute.xlu0 %3843
    %vm3845 = vcmp.lt.s32.totalorder %v50, 111
    %v3846 = vsel %vm3845, %v3842, %v3844
    %v3847 = vsel %vm3845, %v3840, %v3842
    %v3848 = vsel %vm3845, %v3838, %v3840
    %v3849 = vsel %vm3845, %v3836, %v3838
    %v3850 = vsel %vm3845, %v3834, %v3836
    %v3851 = vsel %vm3845, %v3844, %v3834
    %s3852 = scalar_lea.vmem %s4, 48
    %v3853 = vld [vmem:[%s3852] sm:$0xff]
    %v3855 = vsel %vm2448, %v3853, 0
    %3857 = vmatprep.subr.mxu0 0.0
    %3858 = vmatpush1.msra.mxu0 0.0
    %3859 = vmatprep.subr.mxu0 0.0
    %3860 = vmatpush1.msra.mxu0 0.0
    %3861 = vmatprep.subr.mxu0 0.0
    %3862 = vmatpush1.msra.mxu0 0.0
    %3863 = vmatprep.subr.mxu0 0.0
    %3864 = vmatpush1.msra.mxu0 0.0
    %3865 = vmatprep.subr.mxu0 0.0
    %3866 = vmatpush1.msra.mxu0 0.0
    %3867 = vmatprep.subr.mxu0 0.0
    %3868 = vmatpush1.msra.mxu0 0.0
    %3869 = vmatprep.subr.mxu0 0.0
    %3870 = vmatpush1.msra.mxu0 0.0
    %3871 = vmatprep.subr.mxu0 0.0
    %3872 = vmatpush1.msra.mxu0 0.0
    %3873 = vmatprep.subr.mxu0 0.0
    %3874 = vmatpush1.msra.mxu0 0.0
    %3875 = vmatprep.subr.mxu0 0.0
    %3876 = vmatpush1.msra.mxu0 0.0
    %3877 = vmatprep.subr.mxu0 0.0
    %3878 = vmatpush1.msra.mxu0 0.0
    %3879 = vmatprep.subr.mxu0 0.0
    %3880 = vmatpush1.msra.mxu0 0.0
    %3881 = vmatprep.subr.mxu0 0.0
    %3882 = vmatpush1.msra.mxu0 0.0
    %3883 = vmatprep.subr.mxu0 0.0
    %3884 = vmatpush1.msra.mxu0 0.0
    %3885 = vmatprep.subr.mxu0 0.0
    %3886 = vmatpush1.msra.mxu0 0.0
    %3887 = vmatprep.subr.mxu0 %v3849
    %3888 = vmatpush1.msra.mxu0 %v3850
    %3889 = vmatprep.subr.mxu0 0.0
    %3890 = vmatpush2.msra.mxu0 0.0
    %3891 = vmatprep.subr.mxu0 0.0
    %3892 = vmatpush2.msra.mxu0 0.0
    %3893 = vmatprep.subr.mxu0 0.0
    %3894 = vmatpush2.msra.mxu0 0.0
    %3895 = vmatprep.subr.mxu0 0.0
    %3896 = vmatpush2.msra.mxu0 0.0
    %3897 = vmatprep.subr.mxu0 0.0
    %3898 = vmatpush2.msra.mxu0 0.0
    %3899 = vmatprep.subr.mxu0 0.0
    %3900 = vmatpush2.msra.mxu0 0.0
    %3901 = vmatprep.subr.mxu0 0.0
    %3902 = vmatpush2.msra.mxu0 0.0
    %3903 = vmatprep.subr.mxu0 0.0
    %3904 = vmatpush2.msra.mxu0 0.0
    %3905 = vmatprep.subr.mxu0 0.0
    %3906 = vmatpush2.msra.mxu0 0.0
    %3907 = vmatprep.subr.mxu0 0.0
    %3908 = vmatpush2.msra.mxu0 0.0
    %3909 = vmatprep.subr.mxu0 0.0
    %3910 = vmatpush2.msra.mxu0 0.0
    %3911 = vmatprep.subr.mxu0 0.0
    %3912 = vmatpush2.msra.mxu0 0.0
    %3913 = vmatprep.subr.mxu0 0.0
    %3914 = vmatpush2.msra.mxu0 0.0
    %3915 = vmatprep.subr.mxu0 0.0
    %3916 = vmatpush2.msra.mxu0 0.0
    %3917 = vmatprep.subr.mxu0 0.0
    %3918 = vmatpush2.msra.mxu0 0.0
    %3919 = vmatprep.subr.mxu0 0.0
    %3920 = vmatpush2.msra.mxu0 0.0
    %3921 = vmatprep.mubr.f32.mxu0 0.0
    %3922 = vmatmul.mubr.f32.gmra.mxu0 %v3855
    %v3923 = vpop.f32.mrf.mxu0
    %v3924 = vadd.f32 0.0, %v3923
    %v3925 = vpop.f32.mrf.mxu0
    %v3926 = vadd.f32 0.0, %v3925
    %3927 = vdwg.mxu0
    %3928 = vmatprep.subr.mxu0 0.0
    %3929 = vmatpush1.msra.mxu0 0.0
    %3930 = vmatprep.subr.mxu0 0.0
    %3931 = vmatpush1.msra.mxu0 0.0
    %3932 = vmatprep.subr.mxu0 0.0
    %3933 = vmatpush1.msra.mxu0 0.0
    %3934 = vmatprep.subr.mxu0 0.0
    %3935 = vmatpush1.msra.mxu0 0.0
    %3936 = vmatprep.subr.mxu0 0.0
    %3937 = vmatpush1.msra.mxu0 0.0
    %3938 = vmatprep.subr.mxu0 0.0
    %3939 = vmatpush1.msra.mxu0 0.0
    %3940 = vmatprep.subr.mxu0 0.0
    %3941 = vmatpush1.msra.mxu0 0.0
    %3942 = vmatprep.subr.mxu0 0.0
    %3943 = vmatpush1.msra.mxu0 0.0
    %3944 = vmatprep.subr.mxu0 0.0
    %3945 = vmatpush1.msra.mxu0 0.0
    %3946 = vmatprep.subr.mxu0 0.0
    %3947 = vmatpush1.msra.mxu0 0.0
    %3948 = vmatprep.subr.mxu0 0.0
    %3949 = vmatpush1.msra.mxu0 0.0
    %3950 = vmatprep.subr.mxu0 0.0
    %3951 = vmatpush1.msra.mxu0 0.0
    %3952 = vmatprep.subr.mxu0 0.0
    %3953 = vmatpush1.msra.mxu0 0.0
    %3954 = vmatprep.subr.mxu0 0.0
    %3955 = vmatpush1.msra.mxu0 0.0
    %3956 = vmatprep.subr.mxu0 0.0
    %3957 = vmatpush1.msra.mxu0 0.0
    %3958 = vmatprep.subr.mxu0 %v3847
    %3959 = vmatpush1.msra.mxu0 %v3848
    %3960 = vmatprep.subr.mxu0 0.0
    %3961 = vmatpush2.msra.mxu0 0.0
    %3962 = vmatprep.subr.mxu0 0.0
    %3963 = vmatpush2.msra.mxu0 0.0
    %3964 = vmatprep.subr.mxu0 0.0
    %3965 = vmatpush2.msra.mxu0 0.0
    %3966 = vmatprep.subr.mxu0 0.0
    %3967 = vmatpush2.msra.mxu0 0.0
    %3968 = vmatprep.subr.mxu0 0.0
    %3969 = vmatpush2.msra.mxu0 0.0
    %3970 = vmatprep.subr.mxu0 0.0
    %3971 = vmatpush2.msra.mxu0 0.0
    %3972 = vmatprep.subr.mxu0 0.0
    %3973 = vmatpush2.msra.mxu0 0.0
    %3974 = vmatprep.subr.mxu0 0.0
    %3975 = vmatpush2.msra.mxu0 0.0
    %3976 = vmatprep.subr.mxu0 0.0
    %3977 = vmatpush2.msra.mxu0 0.0
    %3978 = vmatprep.subr.mxu0 0.0
    %3979 = vmatpush2.msra.mxu0 0.0
    %3980 = vmatprep.subr.mxu0 0.0
    %3981 = vmatpush2.msra.mxu0 0.0
    %3982 = vmatprep.subr.mxu0 0.0
    %3983 = vmatpush2.msra.mxu0 0.0
    %3984 = vmatprep.subr.mxu0 0.0
    %3985 = vmatpush2.msra.mxu0 0.0
    %3986 = vmatprep.subr.mxu0 0.0
    %3987 = vmatpush2.msra.mxu0 0.0
    %3988 = vmatprep.subr.mxu0 0.0
    %3989 = vmatpush2.msra.mxu0 0.0
    %3990 = vmatprep.subr.mxu0 0.0
    %3991 = vmatpush2.msra.mxu0 0.0
    %3992 = vmatprep.mubr.f32.mxu0 0.0
    %3993 = vmatmul.mubr.f32.gmra.mxu0 %v3855
    %v3994 = vpop.f32.mrf.mxu0
    %v3995 = vadd.f32 0.0, %v3994
    %v3996 = vpop.f32.mrf.mxu0
    %v3997 = vadd.f32 0.0, %v3996
    %3998 = vdwg.mxu0
    %3999 = vmatprep.subr.mxu0 0.0
    %4000 = vmatpush1.msra.mxu0 0.0
    %4001 = vmatprep.subr.mxu0 0.0
    %4002 = vmatpush1.msra.mxu0 0.0
    %4003 = vmatprep.subr.mxu0 0.0
    %4004 = vmatpush1.msra.mxu0 0.0
    %4005 = vmatprep.subr.mxu0 0.0
    %4006 = vmatpush1.msra.mxu0 0.0
    %4007 = vmatprep.subr.mxu0 0.0
    %4008 = vmatpush1.msra.mxu0 0.0
    %4009 = vmatprep.subr.mxu0 0.0
    %4010 = vmatpush1.msra.mxu0 0.0
    %4011 = vmatprep.subr.mxu0 0.0
    %4012 = vmatpush1.msra.mxu0 0.0
    %4013 = vmatprep.subr.mxu0 0.0
    %4014 = vmatpush1.msra.mxu0 0.0
    %4015 = vmatprep.subr.mxu0 0.0
    %4016 = vmatpush1.msra.mxu0 0.0
    %4017 = vmatprep.subr.mxu0 0.0
    %4018 = vmatpush1.msra.mxu0 0.0
    %4019 = vmatprep.subr.mxu0 0.0
    %4020 = vmatpush1.msra.mxu0 0.0
    %4021 = vmatprep.subr.mxu0 0.0
    %4022 = vmatpush1.msra.mxu0 0.0
    %4023 = vmatprep.subr.mxu0 0.0
    %4024 = vmatpush1.msra.mxu0 0.0
    %4025 = vmatprep.subr.mxu0 0.0
    %4026 = vmatpush1.msra.mxu0 0.0
    %4027 = vmatprep.subr.mxu0 0.0
    %4028 = vmatpush1.msra.mxu0 0.0
    %4029 = vmatprep.subr.mxu0 %v3851
    %4030 = vmatpush1.msra.mxu0 %v3846
    %4031 = vmatprep.subr.mxu0 0.0
    %4032 = vmatpush2.msra.mxu0 0.0
    %4033 = vmatprep.subr.mxu0 0.0
    %4034 = vmatpush2.msra.mxu0 0.0
    %4035 = vmatprep.subr.mxu0 0.0
    %4036 = vmatpush2.msra.mxu0 0.0
    %4037 = vmatprep.subr.mxu0 0.0
    %4038 = vmatpush2.msra.mxu0 0.0
    %4039 = vmatprep.subr.mxu0 0.0
    %4040 = vmatpush2.msra.mxu0 0.0
    %4041 = vmatprep.subr.mxu0 0.0
    %4042 = vmatpush2.msra.mxu0 0.0
    %4043 = vmatprep.subr.mxu0 0.0
    %4044 = vmatpush2.msra.mxu0 0.0
    %4045 = vmatprep.subr.mxu0 0.0
    %4046 = vmatpush2.msra.mxu0 0.0
    %4047 = vmatprep.subr.mxu0 0.0
    %4048 = vmatpush2.msra.mxu0 0.0
    %4049 = vmatprep.subr.mxu0 0.0
    %4050 = vmatpush2.msra.mxu0 0.0
    %4051 = vmatprep.subr.mxu0 0.0
    %4052 = vmatpush2.msra.mxu0 0.0
    %4053 = vmatprep.subr.mxu0 0.0
    %4054 = vmatpush2.msra.mxu0 0.0
    %4055 = vmatprep.subr.mxu0 0.0
    %4056 = vmatpush2.msra.mxu0 0.0
    %4057 = vmatprep.subr.mxu0 0.0
    %4058 = vmatpush2.msra.mxu0 0.0
    %4059 = vmatprep.subr.mxu0 0.0
    %4060 = vmatpush2.msra.mxu0 0.0
    %4061 = vmatprep.subr.mxu0 0.0
    %4062 = vmatpush2.msra.mxu0 0.0
    %4063 = vmatprep.mubr.f32.mxu0 0.0
    %4064 = vmatmul.mubr.f32.gmra.mxu0 %v3855
    %v4065 = vpop.f32.mrf.mxu0
    %v4066 = vadd.f32 0.0, %v4065
    %v4067 = vpop.f32.mrf.mxu0
    %v4068 = vadd.f32 0.0, %v4067
    %4069 = vdwg.mxu0
    %v4070 = vadd.f32 %v3827, %v3924
    %v4071 = vadd.f32 %v3828, %v3926
    %v4072 = vadd.f32 %v3829, %v3995
    %v4073 = vadd.f32 %v3830, %v3997
    %v4074 = vadd.f32 %v3831, %v4066
    %v4075 = vadd.f32 %v3832, %v4068
    %4076 = vrot.lane.b32.xlu0 %v2401, 110
    %v4077 = vpop.permute.xlu0 %4076
    %4078 = vrot.lane.b32.xlu0 %v2402, 110
    %v4079 = vpop.permute.xlu0 %4078
    %4080 = vrot.lane.b32.xlu0 %v2403, 110
    %v4081 = vpop.permute.xlu0 %4080
    %4082 = vrot.lane.b32.xlu0 %v2404, 110
    %v4083 = vpop.permute.xlu0 %4082
    %4084 = vrot.lane.b32.xlu0 %v2405, 110
    %v4085 = vpop.permute.xlu0 %4084
    %4086 = vrot.lane.b32.xlu0 %v2406, 110
    %v4087 = vpop.permute.xlu0 %4086
    %v4088 = vsel %vm797, %v4085, %v4087
    %v4089 = vsel %vm797, %v4083, %v4085
    %v4090 = vsel %vm797, %v4081, %v4083
    %v4091 = vsel %vm797, %v4079, %v4081
    %v4092 = vsel %vm797, %v4077, %v4079
    %v4093 = vsel %vm797, %v4087, %v4077
    %s4094 = scalar_lea.vmem %s4, 56
    %v4095 = vld [vmem:[%s4094] sm:$0xff]
    %v4097 = vsel %vm2448, %v4095, 0
    %4099 = vmatprep.subr.mxu0 0.0
    %4100 = vmatpush1.msra.mxu0 0.0
    %4101 = vmatprep.subr.mxu0 0.0
    %4102 = vmatpush1.msra.mxu0 0.0
    %4103 = vmatprep.subr.mxu0 0.0
    %4104 = vmatpush1.msra.mxu0 0.0
    %4105 = vmatprep.subr.mxu0 0.0
    %4106 = vmatpush1.msra.mxu0 0.0
    %4107 = vmatprep.subr.mxu0 0.0
    %4108 = vmatpush1.msra.mxu0 0.0
    %4109 = vmatprep.subr.mxu0 0.0
    %4110 = vmatpush1.msra.mxu0 0.0
    %4111 = vmatprep.subr.mxu0 0.0
    %4112 = vmatpush1.msra.mxu0 0.0
    %4113 = vmatprep.subr.mxu0 0.0
    %4114 = vmatpush1.msra.mxu0 0.0
    %4115 = vmatprep.subr.mxu0 0.0
    %4116 = vmatpush1.msra.mxu0 0.0
    %4117 = vmatprep.subr.mxu0 0.0
    %4118 = vmatpush1.msra.mxu0 0.0
    %4119 = vmatprep.subr.mxu0 0.0
    %4120 = vmatpush1.msra.mxu0 0.0
    %4121 = vmatprep.subr.mxu0 0.0
    %4122 = vmatpush1.msra.mxu0 0.0
    %4123 = vmatprep.subr.mxu0 0.0
    %4124 = vmatpush1.msra.mxu0 0.0
    %4125 = vmatprep.subr.mxu0 0.0
    %4126 = vmatpush1.msra.mxu0 0.0
    %4127 = vmatprep.subr.mxu0 0.0
    %4128 = vmatpush1.msra.mxu0 0.0
    %4129 = vmatprep.subr.mxu0 %v4091
    %4130 = vmatpush1.msra.mxu0 %v4092
    %4131 = vmatprep.subr.mxu0 0.0
    %4132 = vmatpush2.msra.mxu0 0.0
    %4133 = vmatprep.subr.mxu0 0.0
    %4134 = vmatpush2.msra.mxu0 0.0
    %4135 = vmatprep.subr.mxu0 0.0
    %4136 = vmatpush2.msra.mxu0 0.0
    %4137 = vmatprep.subr.mxu0 0.0
    %4138 = vmatpush2.msra.mxu0 0.0
    %4139 = vmatprep.subr.mxu0 0.0
    %4140 = vmatpush2.msra.mxu0 0.0
    %4141 = vmatprep.subr.mxu0 0.0
    %4142 = vmatpush2.msra.mxu0 0.0
    %4143 = vmatprep.subr.mxu0 0.0
    %4144 = vmatpush2.msra.mxu0 0.0
    %4145 = vmatprep.subr.mxu0 0.0
    %4146 = vmatpush2.msra.mxu0 0.0
    %4147 = vmatprep.subr.mxu0 0.0
    %4148 = vmatpush2.msra.mxu0 0.0
    %4149 = vmatprep.subr.mxu0 0.0
    %4150 = vmatpush2.msra.mxu0 0.0
    %4151 = vmatprep.subr.mxu0 0.0
    %4152 = vmatpush2.msra.mxu0 0.0
    %4153 = vmatprep.subr.mxu0 0.0
    %4154 = vmatpush2.msra.mxu0 0.0
    %4155 = vmatprep.subr.mxu0 0.0
    %4156 = vmatpush2.msra.mxu0 0.0
    %4157 = vmatprep.subr.mxu0 0.0
    %4158 = vmatpush2.msra.mxu0 0.0
    %4159 = vmatprep.subr.mxu0 0.0
    %4160 = vmatpush2.msra.mxu0 0.0
    %4161 = vmatprep.subr.mxu0 0.0
    %4162 = vmatpush2.msra.mxu0 0.0
    %4163 = vmatprep.mubr.f32.mxu0 0.0
    %4164 = vmatmul.mubr.f32.gmra.mxu0 %v4097
    %v4165 = vpop.f32.mrf.mxu0
    %v4166 = vadd.f32 0.0, %v4165
    %v4167 = vpop.f32.mrf.mxu0
    %v4168 = vadd.f32 0.0, %v4167
    %4169 = vdwg.mxu0
    %4170 = vmatprep.subr.mxu0 0.0
    %4171 = vmatpush1.msra.mxu0 0.0
    %4172 = vmatprep.subr.mxu0 0.0
    %4173 = vmatpush1.msra.mxu0 0.0
    %4174 = vmatprep.subr.mxu0 0.0
    %4175 = vmatpush1.msra.mxu0 0.0
    %4176 = vmatprep.subr.mxu0 0.0
    %4177 = vmatpush1.msra.mxu0 0.0
    %4178 = vmatprep.subr.mxu0 0.0
    %4179 = vmatpush1.msra.mxu0 0.0
    %4180 = vmatprep.subr.mxu0 0.0
    %4181 = vmatpush1.msra.mxu0 0.0
    %4182 = vmatprep.subr.mxu0 0.0
    %4183 = vmatpush1.msra.mxu0 0.0
    %4184 = vmatprep.subr.mxu0 0.0
    %4185 = vmatpush1.msra.mxu0 0.0
    %4186 = vmatprep.subr.mxu0 0.0
    %4187 = vmatpush1.msra.mxu0 0.0
    %4188 = vmatprep.subr.mxu0 0.0
    %4189 = vmatpush1.msra.mxu0 0.0
    %4190 = vmatprep.subr.mxu0 0.0
    %4191 = vmatpush1.msra.mxu0 0.0
    %4192 = vmatprep.subr.mxu0 0.0
    %4193 = vmatpush1.msra.mxu0 0.0
    %4194 = vmatprep.subr.mxu0 0.0
    %4195 = vmatpush1.msra.mxu0 0.0
    %4196 = vmatprep.subr.mxu0 0.0
    %4197 = vmatpush1.msra.mxu0 0.0
    %4198 = vmatprep.subr.mxu0 0.0
    %4199 = vmatpush1.msra.mxu0 0.0
    %4200 = vmatprep.subr.mxu0 %v4089
    %4201 = vmatpush1.msra.mxu0 %v4090
    %4202 = vmatprep.subr.mxu0 0.0
    %4203 = vmatpush2.msra.mxu0 0.0
    %4204 = vmatprep.subr.mxu0 0.0
    %4205 = vmatpush2.msra.mxu0 0.0
    %4206 = vmatprep.subr.mxu0 0.0
    %4207 = vmatpush2.msra.mxu0 0.0
    %4208 = vmatprep.subr.mxu0 0.0
    %4209 = vmatpush2.msra.mxu0 0.0
    %4210 = vmatprep.subr.mxu0 0.0
    %4211 = vmatpush2.msra.mxu0 0.0
    %4212 = vmatprep.subr.mxu0 0.0
    %4213 = vmatpush2.msra.mxu0 0.0
    %4214 = vmatprep.subr.mxu0 0.0
    %4215 = vmatpush2.msra.mxu0 0.0
    %4216 = vmatprep.subr.mxu0 0.0
    %4217 = vmatpush2.msra.mxu0 0.0
    %4218 = vmatprep.subr.mxu0 0.0
    %4219 = vmatpush2.msra.mxu0 0.0
    %4220 = vmatprep.subr.mxu0 0.0
    %4221 = vmatpush2.msra.mxu0 0.0
    %4222 = vmatprep.subr.mxu0 0.0
    %4223 = vmatpush2.msra.mxu0 0.0
    %4224 = vmatprep.subr.mxu0 0.0
    %4225 = vmatpush2.msra.mxu0 0.0
    %4226 = vmatprep.subr.mxu0 0.0
    %4227 = vmatpush2.msra.mxu0 0.0
    %4228 = vmatprep.subr.mxu0 0.0
    %4229 = vmatpush2.msra.mxu0 0.0
    %4230 = vmatprep.subr.mxu0 0.0
    %4231 = vmatpush2.msra.mxu0 0.0
    %4232 = vmatprep.subr.mxu0 0.0
    %4233 = vmatpush2.msra.mxu0 0.0
    %4234 = vmatprep.mubr.f32.mxu0 0.0
    %4235 = vmatmul.mubr.f32.gmra.mxu0 %v4097
    %v4236 = vpop.f32.mrf.mxu0
    %v4237 = vadd.f32 0.0, %v4236
    %v4238 = vpop.f32.mrf.mxu0
    %v4239 = vadd.f32 0.0, %v4238
    %4240 = vdwg.mxu0
    %4241 = vmatprep.subr.mxu0 0.0
    %4242 = vmatpush1.msra.mxu0 0.0
    %4243 = vmatprep.subr.mxu0 0.0
    %4244 = vmatpush1.msra.mxu0 0.0
    %4245 = vmatprep.subr.mxu0 0.0
    %4246 = vmatpush1.msra.mxu0 0.0
    %4247 = vmatprep.subr.mxu0 0.0
    %4248 = vmatpush1.msra.mxu0 0.0
    %4249 = vmatprep.subr.mxu0 0.0
    %4250 = vmatpush1.msra.mxu0 0.0
    %4251 = vmatprep.subr.mxu0 0.0
    %4252 = vmatpush1.msra.mxu0 0.0
    %4253 = vmatprep.subr.mxu0 0.0
    %4254 = vmatpush1.msra.mxu0 0.0
    %4255 = vmatprep.subr.mxu0 0.0
    %4256 = vmatpush1.msra.mxu0 0.0
    %4257 = vmatprep.subr.mxu0 0.0
    %4258 = vmatpush1.msra.mxu0 0.0
    %4259 = vmatprep.subr.mxu0 0.0
    %4260 = vmatpush1.msra.mxu0 0.0
    %4261 = vmatprep.subr.mxu0 0.0
    %4262 = vmatpush1.msra.mxu0 0.0
    %4263 = vmatprep.subr.mxu0 0.0
    %4264 = vmatpush1.msra.mxu0 0.0
    %4265 = vmatprep.subr.mxu0 0.0
    %4266 = vmatpush1.msra.mxu0 0.0
    %4267 = vmatprep.subr.mxu0 0.0
    %4268 = vmatpush1.msra.mxu0 0.0
    %4269 = vmatprep.subr.mxu0 0.0
    %4270 = vmatpush1.msra.mxu0 0.0
    %4271 = vmatprep.subr.mxu0 %v4093
    %4272 = vmatpush1.msra.mxu0 %v4088
    %4273 = vmatprep.subr.mxu0 0.0
    %4274 = vmatpush2.msra.mxu0 0.0
    %4275 = vmatprep.subr.mxu0 0.0
    %4276 = vmatpush2.msra.mxu0 0.0
    %4277 = vmatprep.subr.mxu0 0.0
    %4278 = vmatpush2.msra.mxu0 0.0
    %4279 = vmatprep.subr.mxu0 0.0
    %4280 = vmatpush2.msra.mxu0 0.0
    %4281 = vmatprep.subr.mxu0 0.0
    %4282 = vmatpush2.msra.mxu0 0.0
    %4283 = vmatprep.subr.mxu0 0.0
    %4284 = vmatpush2.msra.mxu0 0.0
    %4285 = vmatprep.subr.mxu0 0.0
    %4286 = vmatpush2.msra.mxu0 0.0
    %4287 = vmatprep.subr.mxu0 0.0
    %4288 = vmatpush2.msra.mxu0 0.0
    %4289 = vmatprep.subr.mxu0 0.0
    %4290 = vmatpush2.msra.mxu0 0.0
    %4291 = vmatprep.subr.mxu0 0.0
    %4292 = vmatpush2.msra.mxu0 0.0
    %4293 = vmatprep.subr.mxu0 0.0
    %4294 = vmatpush2.msra.mxu0 0.0
    %4295 = vmatprep.subr.mxu0 0.0
    %4296 = vmatpush2.msra.mxu0 0.0
    %4297 = vmatprep.subr.mxu0 0.0
    %4298 = vmatpush2.msra.mxu0 0.0
    %4299 = vmatprep.subr.mxu0 0.0
    %4300 = vmatpush2.msra.mxu0 0.0
    %4301 = vmatprep.subr.mxu0 0.0
    %4302 = vmatpush2.msra.mxu0 0.0
    %4303 = vmatprep.subr.mxu0 0.0
    %4304 = vmatpush2.msra.mxu0 0.0
    %4305 = vmatprep.mubr.f32.mxu0 0.0
    %4306 = vmatmul.mubr.f32.gmra.mxu0 %v4097
    %v4307 = vpop.f32.mrf.mxu0
    %v4308 = vadd.f32 0.0, %v4307
    %v4309 = vpop.f32.mrf.mxu0
    %v4310 = vadd.f32 0.0, %v4309
    %4311 = vdwg.mxu0
    %v4312 = vadd.f32 %v4070, %v4166
    %v4313 = vadd.f32 %v4071, %v4168
    %v4314 = vadd.f32 %v4072, %v4237
    %v4315 = vadd.f32 %v4073, %v4239
    %v4316 = vadd.f32 %v4074, %v4308
    %v4317 = vadd.f32 %v4075, %v4310
    %4318 = vrot.lane.b32.xlu0 %v2401, 109
    %v4319 = vpop.permute.xlu0 %4318
    %4320 = vrot.lane.b32.xlu0 %v2402, 109
    %v4321 = vpop.permute.xlu0 %4320
    %4322 = vrot.lane.b32.xlu0 %v2403, 109
    %v4323 = vpop.permute.xlu0 %4322
    %4324 = vrot.lane.b32.xlu0 %v2404, 109
    %v4325 = vpop.permute.xlu0 %4324
    %4326 = vrot.lane.b32.xlu0 %v2405, 109
    %v4327 = vpop.permute.xlu0 %4326
    %4328 = vrot.lane.b32.xlu0 %v2406, 109
    %v4329 = vpop.permute.xlu0 %4328
    %v4330 = vsel %vm1058, %v4327, %v4329
    %v4331 = vsel %vm1058, %v4325, %v4327
    %v4332 = vsel %vm1058, %v4323, %v4325
    %v4333 = vsel %vm1058, %v4321, %v4323
    %v4334 = vsel %vm1058, %v4319, %v4321
    %v4335 = vsel %vm1058, %v4329, %v4319
    %s4336 = scalar_lea.vmem %s4, 64
    %v4337 = vld [vmem:[%s4336] sm:$0xff]
    %v4339 = vsel %vm2448, %v4337, 0
    %4341 = vmatprep.subr.mxu0 0.0
    %4342 = vmatpush1.msra.mxu0 0.0
    %4343 = vmatprep.subr.mxu0 0.0
    %4344 = vmatpush1.msra.mxu0 0.0
    %4345 = vmatprep.subr.mxu0 0.0
    %4346 = vmatpush1.msra.mxu0 0.0
    %4347 = vmatprep.subr.mxu0 0.0
    %4348 = vmatpush1.msra.mxu0 0.0
    %4349 = vmatprep.subr.mxu0 0.0
    %4350 = vmatpush1.msra.mxu0 0.0
    %4351 = vmatprep.subr.mxu0 0.0
    %4352 = vmatpush1.msra.mxu0 0.0
    %4353 = vmatprep.subr.mxu0 0.0
    %4354 = vmatpush1.msra.mxu0 0.0
    %4355 = vmatprep.subr.mxu0 0.0
    %4356 = vmatpush1.msra.mxu0 0.0
    %4357 = vmatprep.subr.mxu0 0.0
    %4358 = vmatpush1.msra.mxu0 0.0
    %4359 = vmatprep.subr.mxu0 0.0
    %4360 = vmatpush1.msra.mxu0 0.0
    %4361 = vmatprep.subr.mxu0 0.0
    %4362 = vmatpush1.msra.mxu0 0.0
    %4363 = vmatprep.subr.mxu0 0.0
    %4364 = vmatpush1.msra.mxu0 0.0
    %4365 = vmatprep.subr.mxu0 0.0
    %4366 = vmatpush1.msra.mxu0 0.0
    %4367 = vmatprep.subr.mxu0 0.0
    %4368 = vmatpush1.msra.mxu0 0.0
    %4369 = vmatprep.subr.mxu0 0.0
    %4370 = vmatpush1.msra.mxu0 0.0
    %4371 = vmatprep.subr.mxu0 %v4333
    %4372 = vmatpush1.msra.mxu0 %v4334
    %4373 = vmatprep.subr.mxu0 0.0
    %4374 = vmatpush2.msra.mxu0 0.0
    %4375 = vmatprep.subr.mxu0 0.0
    %4376 = vmatpush2.msra.mxu0 0.0
    %4377 = vmatprep.subr.mxu0 0.0
    %4378 = vmatpush2.msra.mxu0 0.0
    %4379 = vmatprep.subr.mxu0 0.0
    %4380 = vmatpush2.msra.mxu0 0.0
    %4381 = vmatprep.subr.mxu0 0.0
    %4382 = vmatpush2.msra.mxu0 0.0
    %4383 = vmatprep.subr.mxu0 0.0
    %4384 = vmatpush2.msra.mxu0 0.0
    %4385 = vmatprep.subr.mxu0 0.0
    %4386 = vmatpush2.msra.mxu0 0.0
    %4387 = vmatprep.subr.mxu0 0.0
    %4388 = vmatpush2.msra.mxu0 0.0
    %4389 = vmatprep.subr.mxu0 0.0
    %4390 = vmatpush2.msra.mxu0 0.0
    %4391 = vmatprep.subr.mxu0 0.0
    %4392 = vmatpush2.msra.mxu0 0.0
    %4393 = vmatprep.subr.mxu0 0.0
    %4394 = vmatpush2.msra.mxu0 0.0
    %4395 = vmatprep.subr.mxu0 0.0
    %4396 = vmatpush2.msra.mxu0 0.0
    %4397 = vmatprep.subr.mxu0 0.0
    %4398 = vmatpush2.msra.mxu0 0.0
    %4399 = vmatprep.subr.mxu0 0.0
    %4400 = vmatpush2.msra.mxu0 0.0
    %4401 = vmatprep.subr.mxu0 0.0
    %4402 = vmatpush2.msra.mxu0 0.0
    %4403 = vmatprep.subr.mxu0 0.0
    %4404 = vmatpush2.msra.mxu0 0.0
    %4405 = vmatprep.mubr.f32.mxu0 0.0
    %4406 = vmatmul.mubr.f32.gmra.mxu0 %v4339
    %v4407 = vpop.f32.mrf.mxu0
    %v4408 = vadd.f32 0.0, %v4407
    %v4409 = vpop.f32.mrf.mxu0
    %v4410 = vadd.f32 0.0, %v4409
    %4411 = vdwg.mxu0
    %4412 = vmatprep.subr.mxu0 0.0
    %4413 = vmatpush1.msra.mxu0 0.0
    %4414 = vmatprep.subr.mxu0 0.0
    %4415 = vmatpush1.msra.mxu0 0.0
    %4416 = vmatprep.subr.mxu0 0.0
    %4417 = vmatpush1.msra.mxu0 0.0
    %4418 = vmatprep.subr.mxu0 0.0
    %4419 = vmatpush1.msra.mxu0 0.0
    %4420 = vmatprep.subr.mxu0 0.0
    %4421 = vmatpush1.msra.mxu0 0.0
    %4422 = vmatprep.subr.mxu0 0.0
    %4423 = vmatpush1.msra.mxu0 0.0
    %4424 = vmatprep.subr.mxu0 0.0
    %4425 = vmatpush1.msra.mxu0 0.0
    %4426 = vmatprep.subr.mxu0 0.0
    %4427 = vmatpush1.msra.mxu0 0.0
    %4428 = vmatprep.subr.mxu0 0.0
    %4429 = vmatpush1.msra.mxu0 0.0
    %4430 = vmatprep.subr.mxu0 0.0
    %4431 = vmatpush1.msra.mxu0 0.0
    %4432 = vmatprep.subr.mxu0 0.0
    %4433 = vmatpush1.msra.mxu0 0.0
    %4434 = vmatprep.subr.mxu0 0.0
    %4435 = vmatpush1.msra.mxu0 0.0
    %4436 = vmatprep.subr.mxu0 0.0
    %4437 = vmatpush1.msra.mxu0 0.0
    %4438 = vmatprep.subr.mxu0 0.0
    %4439 = vmatpush1.msra.mxu0 0.0
    %4440 = vmatprep.subr.mxu0 0.0
    %4441 = vmatpush1.msra.mxu0 0.0
    %4442 = vmatprep.subr.mxu0 %v4331
    %4443 = vmatpush1.msra.mxu0 %v4332
    %4444 = vmatprep.subr.mxu0 0.0
    %4445 = vmatpush2.msra.mxu0 0.0
    %4446 = vmatprep.subr.mxu0 0.0
    %4447 = vmatpush2.msra.mxu0 0.0
    %4448 = vmatprep.subr.mxu0 0.0
    %4449 = vmatpush2.msra.mxu0 0.0
    %4450 = vmatprep.subr.mxu0 0.0
    %4451 = vmatpush2.msra.mxu0 0.0
    %4452 = vmatprep.subr.mxu0 0.0
    %4453 = vmatpush2.msra.mxu0 0.0
    %4454 = vmatprep.subr.mxu0 0.0
    %4455 = vmatpush2.msra.mxu0 0.0
    %4456 = vmatprep.subr.mxu0 0.0
    %4457 = vmatpush2.msra.mxu0 0.0
    %4458 = vmatprep.subr.mxu0 0.0
    %4459 = vmatpush2.msra.mxu0 0.0
    %4460 = vmatprep.subr.mxu0 0.0
    %4461 = vmatpush2.msra.mxu0 0.0
    %4462 = vmatprep.subr.mxu0 0.0
    %4463 = vmatpush2.msra.mxu0 0.0
    %4464 = vmatprep.subr.mxu0 0.0
    %4465 = vmatpush2.msra.mxu0 0.0
    %4466 = vmatprep.subr.mxu0 0.0
    %4467 = vmatpush2.msra.mxu0 0.0
    %4468 = vmatprep.subr.mxu0 0.0
    %4469 = vmatpush2.msra.mxu0 0.0
    %4470 = vmatprep.subr.mxu0 0.0
    %4471 = vmatpush2.msra.mxu0 0.0
    %4472 = vmatprep.subr.mxu0 0.0
    %4473 = vmatpush2.msra.mxu0 0.0
    %4474 = vmatprep.subr.mxu0 0.0
    %4475 = vmatpush2.msra.mxu0 0.0
    %4476 = vmatprep.mubr.f32.mxu0 0.0
    %4477 = vmatmul.mubr.f32.gmra.mxu0 %v4339
    %v4478 = vpop.f32.mrf.mxu0
    %v4479 = vadd.f32 0.0, %v4478
    %v4480 = vpop.f32.mrf.mxu0
    %v4481 = vadd.f32 0.0, %v4480
    %4482 = vdwg.mxu0
    %4483 = vmatprep.subr.mxu0 0.0
    %4484 = vmatpush1.msra.mxu0 0.0
    %4485 = vmatprep.subr.mxu0 0.0
    %4486 = vmatpush1.msra.mxu0 0.0
    %4487 = vmatprep.subr.mxu0 0.0
    %4488 = vmatpush1.msra.mxu0 0.0
    %4489 = vmatprep.subr.mxu0 0.0
    %4490 = vmatpush1.msra.mxu0 0.0
    %4491 = vmatprep.subr.mxu0 0.0
    %4492 = vmatpush1.msra.mxu0 0.0
    %4493 = vmatprep.subr.mxu0 0.0
    %4494 = vmatpush1.msra.mxu0 0.0
    %4495 = vmatprep.subr.mxu0 0.0
    %4496 = vmatpush1.msra.mxu0 0.0
    %4497 = vmatprep.subr.mxu0 0.0
    %4498 = vmatpush1.msra.mxu0 0.0
    %4499 = vmatprep.subr.mxu0 0.0
    %4500 = vmatpush1.msra.mxu0 0.0
    %4501 = vmatprep.subr.mxu0 0.0
    %4502 = vmatpush1.msra.mxu0 0.0
    %4503 = vmatprep.subr.mxu0 0.0
    %4504 = vmatpush1.msra.mxu0 0.0
    %4505 = vmatprep.subr.mxu0 0.0
    %4506 = vmatpush1.msra.mxu0 0.0
    %4507 = vmatprep.subr.mxu0 0.0
    %4508 = vmatpush1.msra.mxu0 0.0
    %4509 = vmatprep.subr.mxu0 0.0
    %4510 = vmatpush1.msra.mxu0 0.0
    %4511 = vmatprep.subr.mxu0 0.0
    %4512 = vmatpush1.msra.mxu0 0.0
    %4513 = vmatprep.subr.mxu0 %v4335
    %4514 = vmatpush1.msra.mxu0 %v4330
    %4515 = vmatprep.subr.mxu0 0.0
    %4516 = vmatpush2.msra.mxu0 0.0
    %4517 = vmatprep.subr.mxu0 0.0
    %4518 = vmatpush2.msra.mxu0 0.0
    %4519 = vmatprep.subr.mxu0 0.0
    %4520 = vmatpush2.msra.mxu0 0.0
    %4521 = vmatprep.subr.mxu0 0.0
    %4522 = vmatpush2.msra.mxu0 0.0
    %4523 = vmatprep.subr.mxu0 0.0
    %4524 = vmatpush2.msra.mxu0 0.0
    %4525 = vmatprep.subr.mxu0 0.0
    %4526 = vmatpush2.msra.mxu0 0.0
    %4527 = vmatprep.subr.mxu0 0.0
    %4528 = vmatpush2.msra.mxu0 0.0
    %4529 = vmatprep.subr.mxu0 0.0
    %4530 = vmatpush2.msra.mxu0 0.0
    %4531 = vmatprep.subr.mxu0 0.0
    %4532 = vmatpush2.msra.mxu0 0.0
    %4533 = vmatprep.subr.mxu0 0.0
    %4534 = vmatpush2.msra.mxu0 0.0
    %4535 = vmatprep.subr.mxu0 0.0
    %4536 = vmatpush2.msra.mxu0 0.0
    %4537 = vmatprep.subr.mxu0 0.0
    %4538 = vmatpush2.msra.mxu0 0.0
    %4539 = vmatprep.subr.mxu0 0.0
    %4540 = vmatpush2.msra.mxu0 0.0
    %4541 = vmatprep.subr.mxu0 0.0
    %4542 = vmatpush2.msra.mxu0 0.0
    %4543 = vmatprep.subr.mxu0 0.0
    %4544 = vmatpush2.msra.mxu0 0.0
    %4545 = vmatprep.subr.mxu0 0.0
    %4546 = vmatpush2.msra.mxu0 0.0
    %4547 = vmatprep.mubr.f32.mxu0 0.0
    %4548 = vmatmul.mubr.f32.gmra.mxu0 %v4339
    %v4549 = vpop.f32.mrf.mxu0
    %v4550 = vadd.f32 0.0, %v4549
    %v4551 = vpop.f32.mrf.mxu0
    %v4552 = vadd.f32 0.0, %v4551
    %4553 = vdwg.mxu0
    %v4554 = vadd.f32 %v4312, %v4408
    %v4555 = vadd.f32 %v4313, %v4410
    %v4556 = vadd.f32 %v4314, %v4479
    %v4557 = vadd.f32 %v4315, %v4481
    %v4558 = vadd.f32 %v4316, %v4550
    %v4559 = vadd.f32 %v4317, %v4552
    %v4560 = vld [vmem:[%s5] sm:$0xff]
    %4562 = vset.pattern.permute.xlu0 0
    %4563 = vperm.xlu0 %4562, %v4560
    %v4564 = vpop.permute.xlu0 %4563
    %v4566 = vadd.f32 %v4554, %v4564
    %v4567 = vadd.f32 %v4555, %v4564
    %v4568 = vadd.f32 %v4556, %v4564
    %v4569 = vadd.f32 %v4557, %v4564
    %v4570 = vadd.f32 %v4558, %v4564
    %v4571 = vadd.f32 %v4559, %v4564
    %v4572 = vxor.u32 %v4566, 2147483648
    %v4573 = vxor.u32 %v4567, 2147483648
    %v4574 = vxor.u32 %v4568, 2147483648
    %v4575 = vxor.u32 %v4569, 2147483648
    %v4576 = vxor.u32 %v4570, 2147483648
    %v4577 = vxor.u32 %v4571, 2147483648
    %v4578 = vmul.f32 %v4572, 1.442695
    %v4579 = vpow.pop %v4578
    %v4580 = vmul.f32 %v4573, 1.442695
    %v4581 = vpow.pop %v4580
    %v4582 = vmul.f32 %v4574, 1.442695
    %v4583 = vpow.pop %v4582
    %v4584 = vmul.f32 %v4575, 1.442695
    %v4585 = vpow.pop %v4584
    %v4586 = vmul.f32 %v4576, 1.442695
    %v4587 = vpow.pop %v4586
    %v4588 = vmul.f32 %v4577, 1.442695
    %v4589 = vpow.pop %v4588
    %v4590 = vadd.f32 %v4579, 1.0
    %v4591 = vadd.f32 %v4581, 1.0
    %v4592 = vadd.f32 %v4583, 1.0
    %v4593 = vadd.f32 %v4585, 1.0
    %v4594 = vadd.f32 %v4587, 1.0
    %v4595 = vadd.f32 %v4589, 1.0
    %v4596 = vrcp.pop %v4590
    %v4597 = vmul.f32 1.0, %v4596
    %v4598 = vrcp.pop %v4591
    %v4599 = vmul.f32 1.0, %v4598
    %v4600 = vrcp.pop %v4592
    %v4601 = vmul.f32 1.0, %v4600
    %v4602 = vrcp.pop %v4593
    %v4603 = vmul.f32 1.0, %v4602
    %v4604 = vrcp.pop %v4594
    %v4605 = vmul.f32 1.0, %v4604
    %v4606 = vrcp.pop %v4595
    %v4607 = vmul.f32 1.0, %v4606
    %4608 = vst [vmem:[#allocation2] sm:$0xff] %v4597
    %4609 = vst [vmem:[#allocation2 + $0x8] sm:$0xff] %v4599
    %4610 = vst [vmem:[#allocation2 + $0x10] sm:$0xff] %v4601
    %4611 = vst [vmem:[#allocation2 + $0x18] sm:$0xff] %v4603
    %4612 = vst [vmem:[#allocation2 + $0x20] sm:$0xff] %v4605
    %4613 = vst [vmem:[#allocation2 + $0x28] sm:$0xff] %v4607
    // Predicated region
    $region26: #{tpu_custom_call.1} parent=1 // pred_check
      _
    $region27: #{tpu_custom_call.1} parent=1 // pred_check_branch
      %4615 = sbr.rel (0) target = $region29
    $region28: #{tpu_custom_call.1} parent=1 // pred_region
      %s4617 = ssub.s32 768, 768
      %4618 = vsyncadd [#allocation3], %s4617
      %s4620 = sshll.u32 [#allocation2], 4
      %s4621 = int_to_ptr.vmem [resolvable:$true] %s4620
      %4623 = dma.vmem_to_hbm [thread:$0]  %s4621, 768, %s6, [#allocation3]
    $region29: #{tpu_custom_call.1} parent=1 // pred_fallthru
      _
    // Predicated region
    $region30: #{tpu_custom_call.1} parent=1 // pred_check
      _
    $region31: #{tpu_custom_call.1} parent=1 // pred_check_branch
      %4625 = sbr.rel (0) target = $region33
    $region32: #{tpu_custom_call.1} parent=1 // pred_region
      %4626 = dma.done [#allocation3], 768
    $region33: #{tpu_custom_call.1} parent=1 // pred_fallthru
      _
    %4627 = vsyncpa [#allocation3], 1

</llo_original>
